<compile_context>
chip_gen: v7x
topology: tpu7x:2x2x1
jax: 0.10.0
libtpu: 0.0.40
codegen_flags: <defaults>
</compile_context>

<pallas_src>
import functools

import jax
import jax.numpy as jnp
from jax import lax
from jax.experimental import pallas as pl
from jax.experimental.pallas import tpu as pltpu


# ----------------------------- fused Pallas kernel ---------------------------

def _fused_mha_kernel(xq_ref, xkv_ref, wq_ref, bq_ref, wkv_ref, bkv_ref,
                      wo_ref, bo_ref, o_ref, *, num_heads):
    # Block shapes (one batch element per grid step):
    #   xq_ref:  (1, L, E)    xkv_ref: (1, S, E)
    #   wq_ref:  (E, E)       bq_ref:  (1, E)     (scale already folded in)
    #   wkv_ref: (2E, E)      bkv_ref: (1, 2E)
    #   wo_ref:  (E, E)       bo_ref:  (1, E)
    #   o_ref:   (1, L, E)
    L = xq_ref.shape[1]
    S = xkv_ref.shape[1]
    E = xq_ref.shape[2]
    H = num_heads
    Dh = E // H

    xq = xq_ref[0]              # (L, E)
    xkv = xkv_ref[0]            # (S, E)

    # ---- input projections (MXU) ----
    # q = xq @ wq^T + bq   (wq/bq pre-scaled by 1/sqrt(Dh) in the wrapper)
    q = lax.dot_general(xq, wq_ref[...], (((1,), (1,)), ((), ())),
                        preferred_element_type=jnp.float32) + bq_ref[...]
    # kv = xkv @ [wk; wv]^T + [bk; bv]  -> (S, 2E), one matmul for k and v
    kv = lax.dot_general(xkv, wkv_ref[...], (((1,), (1,)), ((), ())),
                         preferred_element_type=jnp.float32) + bkv_ref[...]
    k = kv[:, :E]               # (S, E)
    v = kv[:, E:]               # (S, E)

    # ---- split heads: (seq, E) -> (H, seq, Dh); all heads batched ----
    qh = jnp.transpose(q.reshape(L, H, Dh), (1, 0, 2))   # (H, L, Dh)
    kh = jnp.transpose(k.reshape(S, H, Dh), (1, 0, 2))   # (H, S, Dh)
    vh = jnp.transpose(v.reshape(S, H, Dh), (1, 0, 2))   # (H, S, Dh)

    # ---- scaled-dot-product attention, all heads in one batched einsum ----
    s = jnp.einsum("hld,hsd->hls", qh, kh,
                   preferred_element_type=jnp.float32)    # (H, L, S)
    m = jnp.max(s, axis=-1, keepdims=True)
    p = jnp.exp(s - m)
    denom = jnp.sum(p, axis=-1, keepdims=True)
    p = p * pl.reciprocal(denom, approx=True)             # EUP vrcp: ~free
    oh = jnp.einsum("hls,hsd->hld", p, vh,
                    preferred_element_type=jnp.float32)    # (H, L, Dh)

    # ---- merge heads back to lane-dense (L, E) ----
    attn = jnp.transpose(oh, (1, 0, 2)).reshape(L, E)

    # ---- output projection ----
    out = lax.dot_general(attn, wo_ref[...], (((1,), (1,)), ((), ())),
                          preferred_element_type=jnp.float32) + bo_ref[...]
    o_ref[0] = out.astype(o_ref.dtype)


# --------------------------------- wrapper -----------------------------------

@functools.partial(jax.jit, static_argnames=("num_heads",))
def pallas_multihead_cross_attention(lstm_hidden, bert_hidden, params,
                                     num_heads=8):
    """Exact semantics of:
         attn_out, _ = nn.MultiheadAttention(E, num_heads)(lstm, bert, bert)
       with batch_first=False inputs (L, N, E) / (S, N, E)."""
    L, N, E = lstm_hidden.shape
    S = bert_hidden.shape[0]
    H = num_heads
    Dh = E // H

    wq, wk, wv = jnp.split(params["in_proj_weight"], 3, axis=0)   # (E, E) each
    bq, bk, bv = jnp.split(params["in_proj_bias"], 3, axis=0)     # (E,)  each

    # fold the 1/sqrt(Dh) scale into the q projection (free)
    scale = 1.0 / jnp.sqrt(jnp.asarray(Dh, dtype=wq.dtype))
    wq_s = wq * scale
    bq_s = (bq * scale).reshape(1, E)

    # merge k and v projection weights into one matmul
    wkv = jnp.concatenate([wk, wv], axis=0)                        # (2E, E)
    bkv = jnp.concatenate([bk, bv], axis=0).reshape(1, 2 * E)

    wo = params["out_proj_weight"]                                  # (E, E)
    bo = params["out_proj_bias"].reshape(1, E)

    # batch-major layout so each grid step handles one full (seq, E) slab
    xq = jnp.transpose(lstm_hidden, (1, 0, 2))   # (N, L, E)
    xkv = jnp.transpose(bert_hidden, (1, 0, 2))  # (N, S, E)

    kernel = functools.partial(_fused_mha_kernel, num_heads=H)
    out = pl.pallas_call(
        kernel,
        out_shape=jax.ShapeDtypeStruct((N, L, E), lstm_hidden.dtype),
        grid=(N,),
        in_specs=[
            pl.BlockSpec((1, L, E), lambda n: (n, 0, 0)),      # query batch n
            pl.BlockSpec((1, S, E), lambda n: (n, 0, 0)),      # key/value batch n
            pl.BlockSpec((E, E), lambda n: (0, 0)),            # wq (scaled)
            pl.BlockSpec((1, E), lambda n: (0, 0)),            # bq (scaled)
            pl.BlockSpec((2 * E, E), lambda n: (0, 0)),        # wkv
            pl.BlockSpec((1, 2 * E), lambda n: (0, 0)),        # bkv
            pl.BlockSpec((E, E), lambda n: (0, 0)),            # wo
            pl.BlockSpec((1, E), lambda n: (0, 0)),            # bo
        ],
        out_specs=pl.BlockSpec((1, L, E), lambda n: (n, 0, 0)),
        compiler_params=pltpu.CompilerParams(
            dimension_semantics=("parallel",)),
    )(xq, xkv, wq_s, bq_s, wkv, bkv, wo, bo)

    # (N, L, E) -> (L, N, E)  (PyTorch batch_first=False output layout)
    return jnp.transpose(out, (1, 0, 2))


# --------------------------- pure-JAX reference ------------------------------

def reference_mha(lstm_hidden, bert_hidden, params, num_heads=8):
    L, N, E = lstm_hidden.shape
    S = bert_hidden.shape[0]
    H, Dh = num_heads, E // num_heads
    wq, wk, wv = jnp.split(params["in_proj_weight"], 3, axis=0)
    bq, bk, bv = jnp.split(params["in_proj_bias"], 3, axis=0)
    q = lstm_hidden @ wq.T + bq
    k = bert_hidden @ wk.T + bk
    v = bert_hidden @ wv.T + bv
    q = jnp.transpose(q.reshape(L, N, H, Dh), (1, 2, 0, 3)) / jnp.sqrt(Dh)
    k = jnp.transpose(k.reshape(S, N, H, Dh), (1, 2, 0, 3))
    v = jnp.transpose(v.reshape(S, N, H, Dh), (1, 2, 0, 3))
    s = jnp.einsum("nhld,nhsd->nhls", q, k)
    p = jax.nn.softmax(s, axis=-1)
    o = jnp.einsum("nhls,nhsd->nhld", p, v)
    o = jnp.transpose(o, (2, 0, 1, 3)).reshape(L, N, E)
    return o @ params["out_proj_weight"].T + params["out_proj_bias"]


# --------------------------------- main --------------------------------------

if __name__ == "__main__":
    hidden_size = 64     # must be divisible by num_heads=8
    num_heads = 8
    L, S, N = 8, 12, 2   # query seq, key/value seq, batch

    key = jax.random.PRNGKey(0)
    k1, k2, k3, k4, k5, k6 = jax.random.split(key, 6)

    # deterministic synthetic parameters (shapes match nn.MultiheadAttention)
    params = {
        "in_proj_weight": 0.1 * jax.random.normal(k1, (3 * hidden_size, hidden_size), jnp.float32),
        "in_proj_bias":   0.1 * jax.random.normal(k2, (3 * hidden_size,), jnp.float32),
        "out_proj_weight": 0.1 * jax.random.normal(k3, (hidden_size, hidden_size), jnp.float32),
        "out_proj_bias":   0.1 * jax.random.normal(k4, (hidden_size,), jnp.float32),
    }

    lstm_hidden = jax.random.normal(k5, (L, N, hidden_size), jnp.float32)
    bert_hidden = jax.random.normal(k6, (S, N, hidden_size), jnp.float32)

    out = pallas_multihead_cross_attention(lstm_hidden, bert_hidden, params, num_heads)
    out = jax.block_until_ready(out)

    ref = reference_mha(lstm_hidden, bert_hidden, params, num_heads)
    assert out.shape == (L, N, hidden_size)
    # approx=True reciprocal in the softmax denominator adds ~1e-3-level
    # relative error, so the tolerance is loosened accordingly (still catches
    # any real math/layout bug, which would be O(0.1)+).
    assert jnp.allclose(out, ref, atol=2e-3, rtol=2e-3), "Pallas output mismatch vs reference"

    print("KERNEL_OK")
</pallas_src>

<mosaic_0001>
module attributes {stable_mosaic.version = 11 : i64} {
  func.func @_fused_mha_kernel(%arg0: i32, %arg1: memref<1x8x64xf32, #tpu.memory_space<vmem>>, %arg2: memref<1x12x64xf32, #tpu.memory_space<vmem>>, %arg3: memref<64x64xf32, #tpu.memory_space<vmem>>, %arg4: memref<1x64xf32, #tpu.memory_space<vmem>>, %arg5: memref<128x64xf32, #tpu.memory_space<vmem>>, %arg6: memref<1x128xf32, #tpu.memory_space<vmem>>, %arg7: memref<64x64xf32, #tpu.memory_space<vmem>>, %arg8: memref<1x64xf32, #tpu.memory_space<vmem>>, %arg9: memref<1x8x64xf32, #tpu.memory_space<vmem>>) attributes {dimension_semantics = [#tpu.dimension_semantics<parallel>], iteration_bounds = array<i64: 2>, scalar_prefetch = 0 : i64, scratch_operands = 0 : i64, tpu.core_type = #tpu.core_type<tc>, window_params = [{transform_indices = @transform_0, window_bounds = array<i64: 1, 8, 64>}, {transform_indices = @transform_1, window_bounds = array<i64: 1, 12, 64>}, {pipeline_mode = #tpu.pipeline_mode<synchronous>, transform_indices = @transform_2, window_bounds = array<i64: 64, 64>}, {pipeline_mode = #tpu.pipeline_mode<synchronous>, transform_indices = @transform_3, window_bounds = array<i64: 1, 64>}, {pipeline_mode = #tpu.pipeline_mode<synchronous>, transform_indices = @transform_4, window_bounds = array<i64: 128, 64>}, {pipeline_mode = #tpu.pipeline_mode<synchronous>, transform_indices = @transform_5, window_bounds = array<i64: 1, 128>}, {pipeline_mode = #tpu.pipeline_mode<synchronous>, transform_indices = @transform_6, window_bounds = array<i64: 64, 64>}, {pipeline_mode = #tpu.pipeline_mode<synchronous>, transform_indices = @transform_7, window_bounds = array<i64: 1, 64>}, {transform_indices = @transform_8, window_bounds = array<i64: 1, 8, 64>}]} {
    %c0 = arith.constant 0 : index
    %c0_0 = arith.constant 0 : index
    %c0_1 = arith.constant 0 : index
    %0 = vector.load %arg1[%c0, %c0_0, %c0_1] : memref<1x8x64xf32, #tpu.memory_space<vmem>>, vector<1x8x64xf32>
    %1 = vector.shape_cast %0 : vector<1x8x64xf32> to vector<8x64xf32>
    %c0_2 = arith.constant 0 : index
    %c0_3 = arith.constant 0 : index
    %c0_4 = arith.constant 0 : index
    %2 = vector.load %arg2[%c0_2, %c0_3, %c0_4] : memref<1x12x64xf32, #tpu.memory_space<vmem>>, vector<1x12x64xf32>
    %3 = vector.shape_cast %2 : vector<1x12x64xf32> to vector<12x64xf32>
    %c0_5 = arith.constant 0 : index
    %c0_6 = arith.constant 0 : index
    %4 = vector.load %arg3[%c0_5, %c0_6] : memref<64x64xf32, #tpu.memory_space<vmem>>, vector<64x64xf32>
    %cst = arith.constant dense<0.000000e+00> : vector<8x64xf32>
    %5 = tpu.matmul %1, %4, %cst {dimension_numbers = #tpu.dot_dimension_numbers<[1], [1], [0], [0], [0, 0, 1, 0], [], []>} : vector<8x64xf32>, vector<64x64xf32>, vector<8x64xf32> -> vector<8x64xf32>
    %c0_7 = arith.constant 0 : index
    %c0_8 = arith.constant 0 : index
    %6 = vector.load %arg4[%c0_7, %c0_8] : memref<1x64xf32, #tpu.memory_space<vmem>>, vector<1x64xf32>
    %7 = vector.broadcast %6 : vector<1x64xf32> to vector<8x64xf32>
    %8 = arith.addf %5, %7 : vector<8x64xf32>
    %c0_9 = arith.constant 0 : index
    %c0_10 = arith.constant 0 : index
    %9 = vector.load %arg5[%c0_9, %c0_10] : memref<128x64xf32, #tpu.memory_space<vmem>>, vector<128x64xf32>
    %cst_11 = arith.constant dense<0.000000e+00> : vector<12x128xf32>
    %10 = tpu.matmul %3, %9, %cst_11 {dimension_numbers = #tpu.dot_dimension_numbers<[1], [1], [0], [0], [0, 0, 1, 0], [], []>} : vector<12x64xf32>, vector<128x64xf32>, vector<12x128xf32> -> vector<12x128xf32>
    %c0_12 = arith.constant 0 : index
    %c0_13 = arith.constant 0 : index
    %11 = vector.load %arg6[%c0_12, %c0_13] : memref<1x128xf32, #tpu.memory_space<vmem>>, vector<1x128xf32>
    %12 = vector.broadcast %11 : vector<1x128xf32> to vector<12x128xf32>
    %13 = arith.addf %10, %12 : vector<12x128xf32>
    %14 = vector.extract_strided_slice %13 {offsets = [0, 0], sizes = [12, 64], strides = [1, 1]} : vector<12x128xf32> to vector<12x64xf32>
    %15 = vector.extract_strided_slice %13 {offsets = [0, 64], sizes = [12, 64], strides = [1, 1]} : vector<12x128xf32> to vector<12x64xf32>
    %16 = vector.shape_cast %8 : vector<8x64xf32> to vector<8x8x8xf32>
    %17 = tpu.transpose %16, [1, 0, 2] : vector<8x8x8xf32> -> vector<8x8x8xf32>
    %18 = vector.shape_cast %14 : vector<12x64xf32> to vector<12x8x8xf32>
    %19 = tpu.transpose %18, [1, 0, 2] : vector<12x8x8xf32> -> vector<8x12x8xf32>
    %20 = vector.shape_cast %15 : vector<12x64xf32> to vector<12x8x8xf32>
    %21 = tpu.transpose %20, [1, 0, 2] : vector<12x8x8xf32> -> vector<8x12x8xf32>
    "tpu.trace_start"() <{level = 10 : i32, message = "hld,hsd->hls"}> : () -> ()
    %cst_14 = arith.constant dense<0.000000e+00> : vector<8x8x12xf32>
    %22 = tpu.matmul %17, %19, %cst_14 {dimension_numbers = #tpu.dot_dimension_numbers<[2], [2], [1], [1], [0, 0, 0, 1, 1, 1], [0], [0]>} : vector<8x8x8xf32>, vector<8x12x8xf32>, vector<8x8x12xf32> -> vector<8x8x12xf32>
    "tpu.trace_stop"() : () -> ()
    %cst_15 = arith.constant dense<0xFF800000> : vector<8x8xf32>
    %23 = vector.multi_reduction <maximumf>, %22, %cst_15 [2] : vector<8x8x12xf32> to vector<8x8xf32>
    %24 = vector.shape_cast %23 : vector<8x8xf32> to vector<8x8x1xf32>
    %25 = vector.broadcast %24 : vector<8x8x1xf32> to vector<8x8x12xf32>
    %26 = arith.subf %22, %25 : vector<8x8x12xf32>
    %27 = math.exp %26 : vector<8x8x12xf32>
    %cst_16 = arith.constant dense<0.000000e+00> : vector<8x8xf32>
    %28 = vector.multi_reduction <add>, %27, %cst_16 [2] : vector<8x8x12xf32> to vector<8x8xf32>
    %29 = vector.shape_cast %28 : vector<8x8xf32> to vector<8x8x1xf32>
    %30 = tpu.reciprocal %29 {approx = true} : vector<8x8x1xf32> -> vector<8x8x1xf32>
    %31 = vector.broadcast %30 : vector<8x8x1xf32> to vector<8x8x12xf32>
    %32 = arith.mulf %27, %31 : vector<8x8x12xf32>
    "tpu.trace_start"() <{level = 10 : i32, message = "hls,hsd->hld"}> : () -> ()
    %cst_17 = arith.constant dense<0.000000e+00> : vector<8x8x8xf32>
    %33 = tpu.matmul %32, %21, %cst_17 {dimension_numbers = #tpu.dot_dimension_numbers<[2], [1], [1], [2], [0, 0, 0, 1, 1, 2], [0], [0]>} : vector<8x8x12xf32>, vector<8x12x8xf32>, vector<8x8x8xf32> -> vector<8x8x8xf32>
    "tpu.trace_stop"() : () -> ()
    %34 = tpu.transpose %33, [1, 0, 2] : vector<8x8x8xf32> -> vector<8x8x8xf32>
    %35 = vector.shape_cast %34 : vector<8x8x8xf32> to vector<8x64xf32>
    %c0_18 = arith.constant 0 : index
    %c0_19 = arith.constant 0 : index
    %36 = vector.load %arg7[%c0_18, %c0_19] : memref<64x64xf32, #tpu.memory_space<vmem>>, vector<64x64xf32>
    %cst_20 = arith.constant dense<0.000000e+00> : vector<8x64xf32>
    %37 = tpu.matmul %35, %36, %cst_20 {dimension_numbers = #tpu.dot_dimension_numbers<[1], [1], [0], [0], [0, 0, 1, 0], [], []>} : vector<8x64xf32>, vector<64x64xf32>, vector<8x64xf32> -> vector<8x64xf32>
    %c0_21 = arith.constant 0 : index
    %c0_22 = arith.constant 0 : index
    %38 = vector.load %arg8[%c0_21, %c0_22] : memref<1x64xf32, #tpu.memory_space<vmem>>, vector<1x64xf32>
    %39 = vector.broadcast %38 : vector<1x64xf32> to vector<8x64xf32>
    %40 = arith.addf %37, %39 : vector<8x64xf32>
    %c0_23 = arith.constant 0 : index
    %c0_24 = arith.constant 0 : index
    %c0_25 = arith.constant 0 : index
    %41 = vector.load %arg9[%c0_23, %c0_24, %c0_25] : memref<1x8x64xf32, #tpu.memory_space<vmem>>, vector<1x8x64xf32>
    %42 = vector.shape_cast %41 : vector<1x8x64xf32> to vector<8x64xf32>
    %43 = vector.shape_cast %40 : vector<8x64xf32> to vector<1x8x64xf32>
    tpu.vector_store %arg9[%c0_23, %c0_24, %c0_25], %43 {strides = array<i32>} : memref<1x8x64xf32, #tpu.memory_space<vmem>>, vector<1x8x64xf32>,
    return
  }
  func.func @transform_0(%arg0: i32) -> (i32, i32, i32) {
    %c0_i32 = arith.constant 0 : i32
    %c0_i32_0 = arith.constant 0 : i32
    %c0_i32_1 = arith.constant 0 : i32
    return %arg0, %c0_i32, %c0_i32_0 : i32, i32, i32
  }
  func.func @transform_1(%arg0: i32) -> (i32, i32, i32) {
    %c0_i32 = arith.constant 0 : i32
    %c0_i32_0 = arith.constant 0 : i32
    %c0_i32_1 = arith.constant 0 : i32
    return %arg0, %c0_i32, %c0_i32_0 : i32, i32, i32
  }
  func.func @transform_2(%arg0: i32) -> (i32, i32) {
    %c0_i32 = arith.constant 0 : i32
    %c0_i32_0 = arith.constant 0 : i32
    %c0_i32_1 = arith.constant 0 : i32
    return %c0_i32, %c0_i32_0 : i32, i32
  }
  func.func @transform_3(%arg0: i32) -> (i32, i32) {
    %c0_i32 = arith.constant 0 : i32
    %c0_i32_0 = arith.constant 0 : i32
    %c0_i32_1 = arith.constant 0 : i32
    return %c0_i32, %c0_i32_0 : i32, i32
  }
  func.func @transform_4(%arg0: i32) -> (i32, i32) {
    %c0_i32 = arith.constant 0 : i32
    %c0_i32_0 = arith.constant 0 : i32
    %c0_i32_1 = arith.constant 0 : i32
    return %c0_i32, %c0_i32_0 : i32, i32
  }
  func.func @transform_5(%arg0: i32) -> (i32, i32) {
    %c0_i32 = arith.constant 0 : i32
    %c0_i32_0 = arith.constant 0 : i32
    %c0_i32_1 = arith.constant 0 : i32
    return %c0_i32, %c0_i32_0 : i32, i32
  }
  func.func @transform_6(%arg0: i32) -> (i32, i32) {
    %c0_i32 = arith.constant 0 : i32
    %c0_i32_0 = arith.constant 0 : i32
    %c0_i32_1 = arith.constant 0 : i32
    return %c0_i32, %c0_i32_0 : i32, i32
  }
  func.func @transform_7(%arg0: i32) -> (i32, i32) {
    %c0_i32 = arith.constant 0 : i32
    %c0_i32_0 = arith.constant 0 : i32
    %c0_i32_1 = arith.constant 0 : i32
    return %c0_i32, %c0_i32_0 : i32, i32
  }
  func.func @transform_8(%arg0: i32) -> (i32, i32, i32) {
    %c0_i32 = arith.constant 0 : i32
    %c0_i32_0 = arith.constant 0 : i32
    %c0_i32_1 = arith.constant 0 : i32
    return %arg0, %c0_i32, %c0_i32_0 : i32, i32, i32
  }
}

</mosaic_0001>

<llo_original>
// kernel: pallas_multihead_cross_attention.1
$region0: #{pallas_multihead_cross_attention.1}
  #allocation0 [shape = 'u32[]', space=smem, size = 0x4, offset = 0x4, fixed_abs, tag = 'smem constant byte address 0x4 - core index']
  #allocation1 [shape = 'u32[144,128]{1,0:T(1,128)}', space=vmem, size = 0x12000, scoped, tag = 'internal scratch']
  %s0 = inlined_call_operand.vmem [shape: f32[2,8,64], index: 0, kind: input, shape index: {}]
  %s1 = inlined_call_operand.vmem [shape: f32[2,12,64], index: 1, kind: input, shape index: {}]
  %s2 = inlined_call_operand.vmem [shape: f32[64,64], index: 2, kind: input, shape index: {}]
  %s3 = inlined_call_operand.vmem [shape: f32[1,64], index: 3, kind: input, shape index: {}]
  %s4 = inlined_call_operand.vmem [shape: f32[128,64], index: 4, kind: input, shape index: {}]
  %s5 = inlined_call_operand.vmem [shape: f32[1,128], index: 5, kind: input, shape index: {}]
  %s6 = inlined_call_operand.vmem [shape: f32[64,64], index: 6, kind: input, shape index: {}]
  %s7 = inlined_call_operand.vmem [shape: f32[1,64], index: 7, kind: input, shape index: {}]
  %s8 = inlined_call_operand.vmem [shape: f32[2,8,64], index: 8, kind: output, shape index: {}]
  %s9 = sld [smem:[#allocation0]]
  $region65: #{pallas_multihead_cross_attention.1} parent=0
    _
  %s11 = ssub.s32 1, %s9
  %s12 = scalar_select 0, %s11, %s9
  loop: start=0, step=1, limit=4
  $region2: #{pallas_multihead_cross_attention.1} parent=0 // loop_pre_header
    _
  $region3: #{pallas_multihead_cross_attention.1} parent=0 // loop_header
    %s14 = sphi 0, %s18
    %p15 = scmp.ge.s32.totalorder %s14, 4
    %s24 = sphi 0, %s26
    %s27 = sphi 0, %s24
    %s28 = sphi 0, %s27
    %s44 = sphi 0, %s28
    %s50 = sphi 0, %s52
    %s53 = sphi 0, %s50
    %s54 = sphi 0, %s53
    %s70 = sphi 0, %s54
    %s74 = sphi 0, %s74
    %s76 = sphi 0, %s74
    %s77 = sphi 0, %s76
    %s91 = sphi 0, %s77
    %s95 = sphi 0, %s95
    %s97 = sphi 0, %s95
    %s98 = sphi 0, %s97
    %s112 = sphi 0, %s98
    %s116 = sphi 0, %s116
    %s118 = sphi 0, %s116
    %s119 = sphi 0, %s118
    %s133 = sphi 0, %s119
    %s137 = sphi 0, %s137
    %s139 = sphi 0, %s137
    %s140 = sphi 0, %s139
    %s154 = sphi 0, %s140
    %s158 = sphi 0, %s158
    %s160 = sphi 0, %s158
    %s161 = sphi 0, %s160
    %s175 = sphi 0, %s161
    %s179 = sphi 0, %s179
    %s181 = sphi 0, %s179
    %s182 = sphi 0, %s181
    %s196 = sphi 0, %s182
    %s202 = sphi 0, %s204
    %s205 = sphi 0, %s202
    %s206 = sphi 0, %s205
    %s222 = sphi 0, %s206
  $region4: #{pallas_multihead_cross_attention.1} parent=0 // loop_header_branch
    %17 = sbr.rel (%p15) target = $region8
  $region5: #{pallas_multihead_cross_attention.1} parent=0 // loop_body
    %s19 = ssub.s32 %s14, 1
    %s20 = ssub.s32 %s14, 2
    %s21 = sadd.s32 %s14, 1
    %s22 = ssub.s32 %s14, %s21
    %p23 = scmp.eq.s32.totalorder %s22, 0
    %s25 = sadd.s32 %s24, 1
    %s26 = scalar_select %p23, %s24, %s25
    %p29 = pneg %p23
    %p30 = scmp.eq.s32.totalorder %s14, 1
    %p31 = por %p29, %p30
    %p32 = scmp.ne.s32.totalorder %s24, %s27
    %p33 = scmp.eq.s32.totalorder %s14, 0
    %p34 = por %p32, %p33
    %p35 = scmp.ne.s32.totalorder %s24, %s27
    %p36 = scmp.eq.s32.totalorder %s19, 1
    %p37 = por %p35, %p36
    %p38 = scmp.ne.s32.totalorder %s27, %s28
    %p39 = scmp.eq.s32.totalorder %s19, 0
    %p40 = por %p38, %p39
    %p41 = scmp.ne.s32.totalorder %s27, %s28
    %p42 = scmp.eq.s32.totalorder %s20, 1
    %p43 = por %p41, %p42
    %p45 = scmp.ne.s32.totalorder %s28, %s44
    %p46 = scmp.eq.s32.totalorder %s20, 0
    %p47 = por %p45, %p46
    %s48 = ssub.s32 %s14, %s21
    %p49 = scmp.eq.s32.totalorder %s48, 0
    %s51 = sadd.s32 %s50, 1
    %s52 = scalar_select %p49, %s50, %s51
    %p55 = pneg %p49
    %p56 = scmp.eq.s32.totalorder %s14, 1
    %p57 = por %p55, %p56
    %p58 = scmp.ne.s32.totalorder %s50, %s53
    %p59 = scmp.eq.s32.totalorder %s14, 0
    %p60 = por %p58, %p59
    %p61 = scmp.ne.s32.totalorder %s50, %s53
    %p62 = scmp.eq.s32.totalorder %s19, 1
    %p63 = por %p61, %p62
    %p64 = scmp.ne.s32.totalorder %s53, %s54
    %p65 = scmp.eq.s32.totalorder %s19, 0
    %p66 = por %p64, %p65
    %p67 = scmp.ne.s32.totalorder %s53, %s54
    %p68 = scmp.eq.s32.totalorder %s20, 1
    %p69 = por %p67, %p68
    %p71 = scmp.ne.s32.totalorder %s54, %s70
    %p72 = scmp.eq.s32.totalorder %s20, 0
    %p73 = por %p71, %p72
    %s75 = sadd.s32 %s74, 1
    %p78 = scmp.eq.s32.totalorder %s14, 1
    %p79 = scmp.ne.s32.totalorder %s74, %s76
    %p80 = scmp.eq.s32.totalorder %s14, 0
    %p81 = por %p79, %p80
    %p82 = scmp.ne.s32.totalorder %s74, %s76
    %p83 = scmp.eq.s32.totalorder %s19, 1
    %p84 = por %p82, %p83
    %p85 = scmp.ne.s32.totalorder %s76, %s77
    %p86 = scmp.eq.s32.totalorder %s19, 0
    %p87 = por %p85, %p86
    %p88 = scmp.ne.s32.totalorder %s76, %s77
    %p89 = scmp.eq.s32.totalorder %s20, 1
    %p90 = por %p88, %p89
    %p92 = scmp.ne.s32.totalorder %s77, %s91
    %p93 = scmp.eq.s32.totalorder %s20, 0
    %p94 = por %p92, %p93
    %s96 = sadd.s32 %s95, 1
    %p99 = scmp.eq.s32.totalorder %s14, 1
    %p100 = scmp.ne.s32.totalorder %s95, %s97
    %p101 = scmp.eq.s32.totalorder %s14, 0
    %p102 = por %p100, %p101
    %p103 = scmp.ne.s32.totalorder %s95, %s97
    %p104 = scmp.eq.s32.totalorder %s19, 1
    %p105 = por %p103, %p104
    %p106 = scmp.ne.s32.totalorder %s97, %s98
    %p107 = scmp.eq.s32.totalorder %s19, 0
    %p108 = por %p106, %p107
    %p109 = scmp.ne.s32.totalorder %s97, %s98
    %p110 = scmp.eq.s32.totalorder %s20, 1
    %p111 = por %p109, %p110
    %p113 = scmp.ne.s32.totalorder %s98, %s112
    %p114 = scmp.eq.s32.totalorder %s20, 0
    %p115 = por %p113, %p114
    %s117 = sadd.s32 %s116, 1
    %p120 = scmp.eq.s32.totalorder %s14, 1
    %p121 = scmp.ne.s32.totalorder %s116, %s118
    %p122 = scmp.eq.s32.totalorder %s14, 0
    %p123 = por %p121, %p122
    %p124 = scmp.ne.s32.totalorder %s116, %s118
    %p125 = scmp.eq.s32.totalorder %s19, 1
    %p126 = por %p124, %p125
    %p127 = scmp.ne.s32.totalorder %s118, %s119
    %p128 = scmp.eq.s32.totalorder %s19, 0
    %p129 = por %p127, %p128
    %p130 = scmp.ne.s32.totalorder %s118, %s119
    %p131 = scmp.eq.s32.totalorder %s20, 1
    %p132 = por %p130, %p131
    %p134 = scmp.ne.s32.totalorder %s119, %s133
    %p135 = scmp.eq.s32.totalorder %s20, 0
    %p136 = por %p134, %p135
    %s138 = sadd.s32 %s137, 1
    %p141 = scmp.eq.s32.totalorder %s14, 1
    %p142 = scmp.ne.s32.totalorder %s137, %s139
    %p143 = scmp.eq.s32.totalorder %s14, 0
    %p144 = por %p142, %p143
    %p145 = scmp.ne.s32.totalorder %s137, %s139
    %p146 = scmp.eq.s32.totalorder %s19, 1
    %p147 = por %p145, %p146
    %p148 = scmp.ne.s32.totalorder %s139, %s140
    %p149 = scmp.eq.s32.totalorder %s19, 0
    %p150 = por %p148, %p149
    %p151 = scmp.ne.s32.totalorder %s139, %s140
    %p152 = scmp.eq.s32.totalorder %s20, 1
    %p153 = por %p151, %p152
    %p155 = scmp.ne.s32.totalorder %s140, %s154
    %p156 = scmp.eq.s32.totalorder %s20, 0
    %p157 = por %p155, %p156
    %s159 = sadd.s32 %s158, 1
    %p162 = scmp.eq.s32.totalorder %s14, 1
    %p163 = scmp.ne.s32.totalorder %s158, %s160
    %p164 = scmp.eq.s32.totalorder %s14, 0
    %p165 = por %p163, %p164
    %p166 = scmp.ne.s32.totalorder %s158, %s160
    %p167 = scmp.eq.s32.totalorder %s19, 1
    %p168 = por %p166, %p167
    %p169 = scmp.ne.s32.totalorder %s160, %s161
    %p170 = scmp.eq.s32.totalorder %s19, 0
    %p171 = por %p169, %p170
    %p172 = scmp.ne.s32.totalorder %s160, %s161
    %p173 = scmp.eq.s32.totalorder %s20, 1
    %p174 = por %p172, %p173
    %p176 = scmp.ne.s32.totalorder %s161, %s175
    %p177 = scmp.eq.s32.totalorder %s20, 0
    %p178 = por %p176, %p177
    %s180 = sadd.s32 %s179, 1
    %p183 = scmp.eq.s32.totalorder %s14, 1
    %p184 = scmp.ne.s32.totalorder %s179, %s181
    %p185 = scmp.eq.s32.totalorder %s14, 0
    %p186 = por %p184, %p185
    %p187 = scmp.ne.s32.totalorder %s179, %s181
    %p188 = scmp.eq.s32.totalorder %s19, 1
    %p189 = por %p187, %p188
    %p190 = scmp.ne.s32.totalorder %s181, %s182
    %p191 = scmp.eq.s32.totalorder %s19, 0
    %p192 = por %p190, %p191
    %p193 = scmp.ne.s32.totalorder %s181, %s182
    %p194 = scmp.eq.s32.totalorder %s20, 1
    %p195 = por %p193, %p194
    %p197 = scmp.ne.s32.totalorder %s182, %s196
    %p198 = scmp.eq.s32.totalorder %s20, 0
    %p199 = por %p197, %p198
    %s200 = ssub.s32 %s14, %s21
    %p201 = scmp.eq.s32.totalorder %s200, 0
    %s203 = sadd.s32 %s202, 1
    %s204 = scalar_select %p201, %s202, %s203
    %p207 = pneg %p201
    %p208 = scmp.eq.s32.totalorder %s14, 1
    %p209 = por %p207, %p208
    %p210 = scmp.ne.s32.totalorder %s202, %s205
    %p211 = scmp.eq.s32.totalorder %s14, 0
    %p212 = por %p210, %p211
    %p213 = scmp.ne.s32.totalorder %s202, %s205
    %p214 = scmp.eq.s32.totalorder %s19, 1
    %p215 = por %p213, %p214
    %p216 = scmp.ne.s32.totalorder %s205, %s206
    %p217 = scmp.eq.s32.totalorder %s19, 0
    %p218 = por %p216, %p217
    %p219 = scmp.ne.s32.totalorder %s205, %s206
    %p220 = scmp.eq.s32.totalorder %s20, 1
    %p221 = por %p219, %p220
    %p223 = scmp.ne.s32.totalorder %s206, %s222
    %p224 = scmp.eq.s32.totalorder %s20, 0
    %p225 = por %p223, %p224
    %p226 = scmp.le.s32.totalorder 1, %s14
    %p227 = scmp.lt.s32.totalorder %s14, 3
    %p228 = pnand %p226, %p227
    %p229 = pneg %p228
    // Predicated region
    $region9: #{pallas_multihead_cross_attention.1} parent=5 // pred_check
      _
    $region10: #{pallas_multihead_cross_attention.1} parent=5 // pred_check_branch
      %231 = sbr.rel (%p228) target = $region12
    $region11: #{pallas_multihead_cross_attention.1} parent=5 // pred_region
      %s232 = ssub.s32 %s14, 1
      // Predicated region
      $region13: #{pallas_multihead_cross_attention.1} parent=11 // pred_check
        %p233 = pneg %p87
      $region14: #{pallas_multihead_cross_attention.1} parent=11 // pred_check_branch
        %235 = sbr.rel (%p233) target = $region16
      $region15: #{pallas_multihead_cross_attention.1} parent=11 // pred_region
        _
      $region16: #{pallas_multihead_cross_attention.1} parent=11 // pred_fallthru
        _
      // Predicated region
      $region17: #{pallas_multihead_cross_attention.1} parent=11 // pred_check
        %p236 = pneg %p108
      $region18: #{pallas_multihead_cross_attention.1} parent=11 // pred_check_branch
        %238 = sbr.rel (%p236) target = $region20
      $region19: #{pallas_multihead_cross_attention.1} parent=11 // pred_region
        _
      $region20: #{pallas_multihead_cross_attention.1} parent=11 // pred_fallthru
        _
      // Predicated region
      $region21: #{pallas_multihead_cross_attention.1} parent=11 // pred_check
        %p239 = pneg %p129
      $region22: #{pallas_multihead_cross_attention.1} parent=11 // pred_check_branch
        %241 = sbr.rel (%p239) target = $region24
      $region23: #{pallas_multihead_cross_attention.1} parent=11 // pred_region
        _
      $region24: #{pallas_multihead_cross_attention.1} parent=11 // pred_fallthru
        _
      // Predicated region
      $region25: #{pallas_multihead_cross_attention.1} parent=11 // pred_check
        %p242 = pneg %p150
      $region26: #{pallas_multihead_cross_attention.1} parent=11 // pred_check_branch
        %244 = sbr.rel (%p242) target = $region28
      $region27: #{pallas_multihead_cross_attention.1} parent=11 // pred_region
        _
      $region28: #{pallas_multihead_cross_attention.1} parent=11 // pred_fallthru
        _
      // Predicated region
      $region29: #{pallas_multihead_cross_attention.1} parent=11 // pred_check
        %p245 = pneg %p171
      $region30: #{pallas_multihead_cross_attention.1} parent=11 // pred_check_branch
        %247 = sbr.rel (%p245) target = $region32
      $region31: #{pallas_multihead_cross_attention.1} parent=11 // pred_region
        _
      $region32: #{pallas_multihead_cross_attention.1} parent=11 // pred_fallthru
        _
      // Predicated region
      $region33: #{pallas_multihead_cross_attention.1} parent=11 // pred_check
        %p248 = pneg %p192
      $region34: #{pallas_multihead_cross_attention.1} parent=11 // pred_check_branch
        %250 = sbr.rel (%p248) target = $region36
      $region35: #{pallas_multihead_cross_attention.1} parent=11 // pred_region
        _
      $region36: #{pallas_multihead_cross_attention.1} parent=11 // pred_fallthru
        _
    $region12: #{pallas_multihead_cross_attention.1} parent=5 // pred_fallthru
      _
    %p251 = scmp.lt.s32.totalorder %s14, 2
    // Predicated region
    $region37: #{pallas_multihead_cross_attention.1} parent=5 // pred_check
      %p252 = pneg %p251
    $region38: #{pallas_multihead_cross_attention.1} parent=5 // pred_check_branch
      %254 = sbr.rel (%p252) target = $region40
    $region39: #{pallas_multihead_cross_attention.1} parent=5 // pred_region
      // Predicated region
      $region41: #{pallas_multihead_cross_attention.1} parent=39 // pred_check
        %p255 = pneg %p34
      $region42: #{pallas_multihead_cross_attention.1} parent=39 // pred_check_branch
        %257 = sbr.rel (%p255) target = $region44
      $region43: #{pallas_multihead_cross_attention.1} parent=39 // pred_region
        %p258 = scmp.lt.s32.totalorder %s14, 1
        %s259 = scalar_select %p258, %s14, 1
        %s260 = smul.addr %s259, 8
        %s261 = scalar_lea.vmem %s0, %s260
      $region44: #{pallas_multihead_cross_attention.1} parent=39 // pred_fallthru
        _
      // Predicated region
      $region45: #{pallas_multihead_cross_attention.1} parent=39 // pred_check
        %p262 = pneg %p60
      $region46: #{pallas_multihead_cross_attention.1} parent=39 // pred_check_branch
        %264 = sbr.rel (%p262) target = $region48
      $region47: #{pallas_multihead_cross_attention.1} parent=39 // pred_region
        %p265 = scmp.lt.s32.totalorder %s14, 1
        %s266 = scalar_select %p265, %s14, 1
        %s267 = smul.addr %s266, 2
        %s268 = smul.addr %s267, 8
        %s269 = scalar_lea.vmem %s1, %s268
      $region48: #{pallas_multihead_cross_attention.1} parent=39 // pred_fallthru
        _
    $region40: #{pallas_multihead_cross_attention.1} parent=5 // pred_fallthru
      _
    %p270 = scmp.le.s32.totalorder 1, %s14
    %p271 = scmp.lt.s32.totalorder %s14, 3
    %p272 = pnand %p270, %p271
    %p273 = pneg %p272
    // Predicated region
    $region49: #{pallas_multihead_cross_attention.1} parent=5 // pred_check
      _
    $region50: #{pallas_multihead_cross_attention.1} parent=5 // pred_check_branch
      %275 = sbr.rel (%p272) target = $region52
    $region51: #{pallas_multihead_cross_attention.1} parent=5 // pred_region
      %s276 = ssub.s32 %s14, 1
      %p277 = scmp.lt.s32.totalorder %s19, 1
      %s278 = scalar_select %p277, %s19, 1
      %s279 = smul.addr %s278, 8
      %s280 = scalar_lea.vmem %s0, %s279
      %p281 = pneg %p40
      %p282 = pneg %p37
      %p283 = scmp.lt.s32.totalorder %s19, 1
      %s284 = scalar_select %p283, %s19, 1
      %s285 = smul.addr %s284, 2
      %s286 = smul.addr %s285, 8
      %s287 = scalar_lea.vmem %s1, %s286
      %p288 = pneg %p66
      %p289 = pneg %p63
      %p290 = pneg %p87
      %p291 = pneg %p84
      %p292 = pneg %p108
      %p293 = pneg %p105
      %p294 = pneg %p129
      %p295 = pneg %p126
      %p296 = pneg %p150
      %p297 = pneg %p147
      %p298 = pneg %p171
      %p299 = pneg %p168
      %p300 = pneg %p192
      %p301 = pneg %p189
      %p302 = pneg %p218
      %p303 = pneg %p215
      %p304 = scmp.lt.s32.totalorder %s19, 1
      %s305 = scalar_select %p304, %s19, 1
      %s306 = smul.addr %s305, 8
      %s307 = scalar_lea.vmem %s8, %s306
      %p308 = scmp.lt.s32.totalorder %s19, 1
      %s309 = scalar_select %p308, %s19, 1
      %s310 = smul.addr %s309, 8
      %s311 = scalar_lea.vmem %s0, %s310
      %p312 = scmp.lt.s32.totalorder %s19, 1
      %s313 = scalar_select %p312, %s19, 1
      %s314 = smul.addr %s313, 2
      %s315 = smul.addr %s314, 8
      %s316 = scalar_lea.vmem %s1, %s315
      %p317 = scmp.lt.s32.totalorder %s19, 1
      %s318 = scalar_select %p317, %s19, 1
      %s319 = smul.addr %s318, 8
      %s320 = scalar_lea.vmem %s8, %s319
      %v321 = vld [vmem:[%s311] sm:$0xff]
      %v322 = vld [vmem:[%s316] sm:$0xff]
      %v323 = vld [vmem:[%s316 + $0x8] sm:$0xf]
      %v324 = vld [vmem:[%s2] sm:$0xff]
      %v325 = vld [vmem:[%s2 + $0x8] sm:$0xff]
      %v326 = vld [vmem:[%s2 + $0x10] sm:$0xff]
      %v327 = vld [vmem:[%s2 + $0x18] sm:$0xff]
      %v328 = vld [vmem:[%s2 + $0x20] sm:$0xff]
      %v329 = vld [vmem:[%s2 + $0x28] sm:$0xff]
      %v330 = vld [vmem:[%s2 + $0x30] sm:$0xff]
      %v331 = vld [vmem:[%s2 + $0x38] sm:$0xff]
      %v332 = vld [vmem:[%s3] sm:$0x1]
      %v334 = vlaneseq
      %v335 = vshrl.u32 %v334, 7
      %v336 = vsub.s32 0, %v335
      %v337 = vrot.slane %v332, %v336
      %vm339 = vcmask 523264
      %v341 = vsel %vm339, %v321, 0
      %v344 = vsel %vm339, %v324, 0
      %v347 = vsel %vm339, %v325, 0
      %v350 = vsel %vm339, %v326, 0
      %v353 = vsel %vm339, %v327, 0
      %v356 = vsel %vm339, %v328, 0
      %v359 = vsel %vm339, %v329, 0
      %v362 = vsel %vm339, %v330, 0
      %v365 = vsel %vm339, %v331, 0
      %367 = vmatprep.subr.mxu0 0.0
      %368 = vmatpush1.xpose.msra.mxu0 %v344
      %369 = vmatprep.subr.mxu0 0.0
      %370 = vmatpush1.xpose.msra.mxu0 %v347
      %371 = vmatprep.subr.mxu0 0.0
      %372 = vmatpush1.xpose.msra.mxu0 %v350
      %373 = vmatprep.subr.mxu0 0.0
      %374 = vmatpush1.xpose.msra.mxu0 %v353
      %375 = vmatprep.subr.mxu0 0.0
      %376 = vmatpush1.xpose.msra.mxu0 %v356
      %377 = vmatprep.subr.mxu0 0.0
      %378 = vmatpush1.xpose.msra.mxu0 %v359
      %379 = vmatprep.subr.mxu0 0.0
      %380 = vmatpush1.xpose.msra.mxu0 %v362
      %381 = vmatprep.subr.mxu0 0.0
      %382 = vmatpush1.xpose.msra.mxu0 %v365
      %383 = vmatprep.subr.mxu0 0.0
      %384 = vmatpush1.xpose.msra.mxu0 0.0
      %385 = vmatprep.subr.mxu0 0.0
      %386 = vmatpush1.xpose.msra.mxu0 0.0
      %387 = vmatprep.subr.mxu0 0.0
      %388 = vmatpush1.xpose.msra.mxu0 0.0
      %389 = vmatprep.subr.mxu0 0.0
      %390 = vmatpush1.xpose.msra.mxu0 0.0
      %391 = vmatprep.subr.mxu0 0.0
      %392 = vmatpush1.xpose.msra.mxu0 0.0
      %393 = vmatprep.subr.mxu0 0.0
      %394 = vmatpush1.xpose.msra.mxu0 0.0
      %395 = vmatprep.subr.mxu0 0.0
      %396 = vmatpush1.xpose.msra.mxu0 0.0
      %397 = vmatprep.subr.mxu0 0.0
      %398 = vmatpush1.xpose.msra.mxu0 0.0
      %399 = vmatprep.subr.mxu0 0.0
      %400 = vmatpush1.xpose.msra.mxu0 0.0
      %401 = vmatprep.subr.mxu0 0.0
      %402 = vmatpush1.xpose.msra.mxu0 0.0
      %403 = vmatprep.subr.mxu0 0.0
      %404 = vmatpush1.xpose.msra.mxu0 0.0
      %405 = vmatprep.subr.mxu0 0.0
      %406 = vmatpush1.xpose.msra.mxu0 0.0
      %407 = vmatprep.subr.mxu0 0.0
      %408 = vmatpush1.xpose.msra.mxu0 0.0
      %409 = vmatprep.subr.mxu0 0.0
      %410 = vmatpush1.xpose.msra.mxu0 0.0
      %411 = vmatprep.subr.mxu0 0.0
      %412 = vmatpush1.xpose.msra.mxu0 0.0
      %413 = vmatprep.subr.mxu0 0.0
      %414 = vmatpush1.xpose.msra.mxu0 0.0
      %415 = vmatprep.subr.mxu0 0.0
      %416 = vmatpush1.xpose.msra.mxu0 0.0
      %417 = vmatprep.subr.mxu0 0.0
      %418 = vmatpush1.xpose.msra.mxu0 0.0
      %419 = vmatprep.subr.mxu0 0.0
      %420 = vmatpush1.xpose.msra.mxu0 0.0
      %421 = vmatprep.subr.mxu0 0.0
      %422 = vmatpush1.xpose.msra.mxu0 0.0
      %423 = vmatprep.subr.mxu0 0.0
      %424 = vmatpush1.xpose.msra.mxu0 0.0
      %425 = vmatprep.subr.mxu0 0.0
      %426 = vmatpush1.xpose.msra.mxu0 0.0
      %427 = vmatprep.subr.mxu0 0.0
      %428 = vmatpush1.xpose.msra.mxu0 0.0
      %429 = vmatprep.subr.mxu0 0.0
      %430 = vmatpush1.xpose.msra.mxu0 0.0
      %431 = vmatprep.mubr.f32.mxu0 0.0
      %432 = vmatmul.mubr.f32.gmra.mrb[0].mxu0 %v341
      %v433 = vpop.f32.mrb[0].mxu0
      %v434 = vadd.f32 %v337, %v433
      %v435 = vpop.f32.mrb[0].mxu0
      %436 = vdwg.mxu0
      %v437 = vld [vmem:[%s4] sm:$0xff]
      %v438 = vld [vmem:[%s4 + $0x8] sm:$0xff]
      %v439 = vld [vmem:[%s4 + $0x10] sm:$0xff]
      %v440 = vld [vmem:[%s4 + $0x18] sm:$0xff]
      %v441 = vld [vmem:[%s4 + $0x20] sm:$0xff]
      %v442 = vld [vmem:[%s4 + $0x28] sm:$0xff]
      %v443 = vld [vmem:[%s4 + $0x30] sm:$0xff]
      %v444 = vld [vmem:[%s4 + $0x38] sm:$0xff]
      %v445 = vld [vmem:[%s4 + $0x40] sm:$0xff]
      %v446 = vld [vmem:[%s4 + $0x48] sm:$0xff]
      %v447 = vld [vmem:[%s4 + $0x50] sm:$0xff]
      %v448 = vld [vmem:[%s4 + $0x58] sm:$0xff]
      %v449 = vld [vmem:[%s4 + $0x60] sm:$0xff]
      %v450 = vld [vmem:[%s4 + $0x68] sm:$0xff]
      %v451 = vld [vmem:[%s4 + $0x70] sm:$0xff]
      %v452 = vld [vmem:[%s4 + $0x78] sm:$0xff]
      %v453 = vld [vmem:[%s5] sm:$0x1]
      %v455 = vlaneseq
      %v456 = vshrl.u32 %v455, 7
      %v457 = vsub.s32 0, %v456
      %v458 = vrot.slane %v453, %v457
      %v461 = vsel %vm339, %v322, 0
      %v464 = vsel %vm339, %v323, 0
      %v467 = vsel %vm339, %v437, 0
      %v470 = vsel %vm339, %v438, 0
      %v473 = vsel %vm339, %v439, 0
      %v476 = vsel %vm339, %v440, 0
      %v479 = vsel %vm339, %v441, 0
      %v482 = vsel %vm339, %v442, 0
      %v485 = vsel %vm339, %v443, 0
      %v488 = vsel %vm339, %v444, 0
      %v491 = vsel %vm339, %v445, 0
      %v494 = vsel %vm339, %v446, 0
      %v497 = vsel %vm339, %v447, 0
      %v500 = vsel %vm339, %v448, 0
      %v503 = vsel %vm339, %v449, 0
      %v506 = vsel %vm339, %v450, 0
      %v509 = vsel %vm339, %v451, 0
      %v512 = vsel %vm339, %v452, 0
      %514 = vmatprep.subr.mxu0 0.0
      %515 = vmatpush1.xpose.msra.mxu0 %v467
      %516 = vmatprep.subr.mxu0 0.0
      %517 = vmatpush1.xpose.msra.mxu0 %v470
      %518 = vmatprep.subr.mxu0 0.0
      %519 = vmatpush1.xpose.msra.mxu0 %v473
      %520 = vmatprep.subr.mxu0 0.0
      %521 = vmatpush1.xpose.msra.mxu0 %v476
      %522 = vmatprep.subr.mxu0 0.0
      %523 = vmatpush1.xpose.msra.mxu0 %v479
      %524 = vmatprep.subr.mxu0 0.0
      %525 = vmatpush1.xpose.msra.mxu0 %v482
      %526 = vmatprep.subr.mxu0 0.0
      %527 = vmatpush1.xpose.msra.mxu0 %v485
      %528 = vmatprep.subr.mxu0 0.0
      %529 = vmatpush1.xpose.msra.mxu0 %v488
      %530 = vmatprep.subr.mxu0 0.0
      %531 = vmatpush1.xpose.msra.mxu0 %v491
      %532 = vmatprep.subr.mxu0 0.0
      %533 = vmatpush1.xpose.msra.mxu0 %v494
      %534 = vmatprep.subr.mxu0 0.0
      %535 = vmatpush1.xpose.msra.mxu0 %v497
      %536 = vmatprep.subr.mxu0 0.0
      %537 = vmatpush1.xpose.msra.mxu0 %v500
      %538 = vmatprep.subr.mxu0 0.0
      %539 = vmatpush1.xpose.msra.mxu0 %v503
      %540 = vmatprep.subr.mxu0 0.0
      %541 = vmatpush1.xpose.msra.mxu0 %v506
      %542 = vmatprep.subr.mxu0 0.0
      %543 = vmatpush1.xpose.msra.mxu0 %v509
      %544 = vmatprep.subr.mxu0 0.0
      %545 = vmatpush1.xpose.msra.mxu0 %v512
      %546 = vmatprep.subr.mxu0 0.0
      %547 = vmatpush1.xpose.msra.mxu0 0.0
      %548 = vmatprep.subr.mxu0 0.0
      %549 = vmatpush1.xpose.msra.mxu0 0.0
      %550 = vmatprep.subr.mxu0 0.0
      %551 = vmatpush1.xpose.msra.mxu0 0.0
      %552 = vmatprep.subr.mxu0 0.0
      %553 = vmatpush1.xpose.msra.mxu0 0.0
      %554 = vmatprep.subr.mxu0 0.0
      %555 = vmatpush1.xpose.msra.mxu0 0.0
      %556 = vmatprep.subr.mxu0 0.0
      %557 = vmatpush1.xpose.msra.mxu0 0.0
      %558 = vmatprep.subr.mxu0 0.0
      %559 = vmatpush1.xpose.msra.mxu0 0.0
      %560 = vmatprep.subr.mxu0 0.0
      %561 = vmatpush1.xpose.msra.mxu0 0.0
      %562 = vmatprep.subr.mxu0 0.0
      %563 = vmatpush1.xpose.msra.mxu0 0.0
      %564 = vmatprep.subr.mxu0 0.0
      %565 = vmatpush1.xpose.msra.mxu0 0.0
      %566 = vmatprep.subr.mxu0 0.0
      %567 = vmatpush1.xpose.msra.mxu0 0.0
      %568 = vmatprep.subr.mxu0 0.0
      %569 = vmatpush1.xpose.msra.mxu0 0.0
      %570 = vmatprep.subr.mxu0 0.0
      %571 = vmatpush1.xpose.msra.mxu0 0.0
      %572 = vmatprep.subr.mxu0 0.0
      %573 = vmatpush1.xpose.msra.mxu0 0.0
      %574 = vmatprep.subr.mxu0 0.0
      %575 = vmatpush1.xpose.msra.mxu0 0.0
      %576 = vmatprep.subr.mxu0 0.0
      %577 = vmatpush1.xpose.msra.mxu0 0.0
      %578 = vmatprep.mubr.f32.mxu0 0.0
      %579 = vmatmul.mubr.f32.gmra.mrb[0].mxu0 %v461
      %v580 = vpop.f32.mrb[0].mxu0
      %v581 = vadd.f32 %v458, %v580
      %v582 = vpop.f32.mrb[0].mxu0
      %583 = vmatprep.mubr.f32.mxu0 0.0
      %584 = vmatmul.mubr.f32.gmra.mrb[0].mxu0 %v464
      %v585 = vpop.f32.mrb[0].mxu0
      %v586 = vadd.f32 %v458, %v585
      %v587 = vpop.f32.mrb[0].mxu0
      %588 = vdwg.mxu0
      %590 = vrot.lane.b32.xlu0 %v434, 120
      %v591 = vpop.permute.xlu0 %590
      %593 = vrot.lane.b32.xlu0 %v434, 112
      %v594 = vpop.permute.xlu0 %593
      %596 = vrot.lane.b32.xlu0 %v434, 104
      %v597 = vpop.permute.xlu0 %596
      %599 = vrot.lane.b32.xlu0 %v434, 96
      %v600 = vpop.permute.xlu0 %599
      %602 = vrot.lane.b32.xlu0 %v434, 88
      %v603 = vpop.permute.xlu0 %602
      %605 = vrot.lane.b32.xlu0 %v434, 80
      %v606 = vpop.permute.xlu0 %605
      %608 = vrot.lane.b32.xlu0 %v434, 72
      %v609 = vpop.permute.xlu0 %608
      %v611 = vcombine.low %v434, %v594
      %v612 = vcombine.high %v434, %v594
      %v614 = vunpack.c.l.s4 1983009808
      %v615 = vunpack.c.0.s8 %v614
      %v616 = vlaneseq
      %v617 = vshrl.u32 %v616, 7
      %v618 = vsub.s32 %v615, %v617
      %v619 = vrot.slane %v611, %v618
      %v621 = vunpack.c.l.s4 1983009808
      %v622 = vunpack.c.0.s8 %v621
      %v623 = vlaneseq
      %v624 = vshrl.u32 %v623, 7
      %v625 = vsub.s32 %v622, %v624
      %v626 = vrot.slane %v612, %v625
      %v627 = vcombine.low %v591, %v597
      %v628 = vcombine.high %v591, %v597
      %v630 = vunpack.c.l.s4 1983009808
      %v631 = vunpack.c.0.s8 %v630
      %v632 = vlaneseq
      %v633 = vshrl.u32 %v632, 7
      %v634 = vsub.s32 %v631, %v633
      %v635 = vrot.slane %v627, %v634
      %v637 = vunpack.c.l.s4 1983009808
      %v638 = vunpack.c.0.s8 %v637
      %v639 = vlaneseq
      %v640 = vshrl.u32 %v639, 7
      %v641 = vsub.s32 %v638, %v640
      %v642 = vrot.slane %v628, %v641
      %v643 = vcombine.low %v600, %v606
      %v644 = vcombine.high %v600, %v606
      %v646 = vunpack.c.l.s4 1983009808
      %v647 = vunpack.c.0.s8 %v646
      %v648 = vlaneseq
      %v649 = vshrl.u32 %v648, 7
      %v650 = vsub.s32 %v647, %v649
      %v651 = vrot.slane %v643, %v650
      %v653 = vunpack.c.l.s4 1983009808
      %v654 = vunpack.c.0.s8 %v653
      %v655 = vlaneseq
      %v656 = vshrl.u32 %v655, 7
      %v657 = vsub.s32 %v654, %v656
      %v658 = vrot.slane %v644, %v657
      %v659 = vcombine.low %v603, %v609
      %v660 = vcombine.high %v603, %v609
      %v662 = vunpack.c.l.s4 1983009808
      %v663 = vunpack.c.0.s8 %v662
      %v664 = vlaneseq
      %v665 = vshrl.u32 %v664, 7
      %v666 = vsub.s32 %v663, %v665
      %v667 = vrot.slane %v659, %v666
      %v669 = vunpack.c.l.s4 1983009808
      %v670 = vunpack.c.0.s8 %v669
      %v671 = vlaneseq
      %v672 = vshrl.u32 %v671, 7
      %v673 = vsub.s32 %v670, %v672
      %v674 = vrot.slane %v660, %v673
      %v675 = vcombine.low %v619, %v635
      %v676 = vcombine.high %v619, %v635
      %v678 = vunpack.c.l.s4 1934713408
      %v679 = vunpack.c.0.s8 %v678
      %v680 = vlaneseq
      %v681 = vshrl.u32 %v680, 7
      %v682 = vsub.s32 %v679, %v681
      %v683 = vrot.slane %v675, %v682
      %v685 = vunpack.c.l.s4 1934713408
      %v686 = vunpack.c.0.s8 %v685
      %v687 = vlaneseq
      %v688 = vshrl.u32 %v687, 7
      %v689 = vsub.s32 %v686, %v688
      %v690 = vrot.slane %v676, %v689
      %v691 = vcombine.low %v626, %v642
      %v692 = vcombine.high %v626, %v642
      %v694 = vunpack.c.l.s4 1934713408
      %v695 = vunpack.c.0.s8 %v694
      %v696 = vlaneseq
      %v697 = vshrl.u32 %v696, 7
      %v698 = vsub.s32 %v695, %v697
      %v699 = vrot.slane %v691, %v698
      %v701 = vunpack.c.l.s4 1934713408
      %v702 = vunpack.c.0.s8 %v701
      %v703 = vlaneseq
      %v704 = vshrl.u32 %v703, 7
      %v705 = vsub.s32 %v702, %v704
      %v706 = vrot.slane %v692, %v705
      %v707 = vcombine.low %v651, %v667
      %v708 = vcombine.high %v651, %v667
      %v710 = vunpack.c.l.s4 1934713408
      %v711 = vunpack.c.0.s8 %v710
      %v712 = vlaneseq
      %v713 = vshrl.u32 %v712, 7
      %v714 = vsub.s32 %v711, %v713
      %v715 = vrot.slane %v707, %v714
      %v717 = vunpack.c.l.s4 1934713408
      %v718 = vunpack.c.0.s8 %v717
      %v719 = vlaneseq
      %v720 = vshrl.u32 %v719, 7
      %v721 = vsub.s32 %v718, %v720
      %v722 = vrot.slane %v708, %v721
      %v723 = vcombine.low %v658, %v674
      %v724 = vcombine.high %v658, %v674
      %v726 = vunpack.c.l.s4 1934713408
      %v727 = vunpack.c.0.s8 %v726
      %v728 = vlaneseq
      %v729 = vshrl.u32 %v728, 7
      %v730 = vsub.s32 %v727, %v729
      %v731 = vrot.slane %v723, %v730
      %v733 = vunpack.c.l.s4 1934713408
      %v734 = vunpack.c.0.s8 %v733
      %v735 = vlaneseq
      %v736 = vshrl.u32 %v735, 7
      %v737 = vsub.s32 %v734, %v736
      %v738 = vrot.slane %v724, %v737
      %v739 = vcombine.low %v683, %v715
      %v740 = vcombine.high %v683, %v715
      %v741 = vcombine.low %v690, %v722
      %v742 = vcombine.high %v690, %v722
      %v743 = vcombine.low %v699, %v731
      %v744 = vcombine.high %v699, %v731
      %v745 = vcombine.low %v706, %v738
      %v746 = vcombine.high %v706, %v738
      %v747 = vcombine.low %v739, %v741
      %v748 = vcombine.high %v739, %v741
      %v750 = vunpack.c.l.s4 1983009808
      %v751 = vunpack.c.0.s8 %v750
      %v752 = vlaneseq
      %v753 = vshrl.u32 %v752, 7
      %v754 = vsub.s32 %v751, %v753
      %v755 = vrot.slane %v747, %v754
      %v757 = vunpack.c.l.s4 1983009808
      %v758 = vunpack.c.0.s8 %v757
      %v759 = vlaneseq
      %v760 = vshrl.u32 %v759, 7
      %v761 = vsub.s32 %v758, %v760
      %v762 = vrot.slane %v748, %v761
      %v763 = vcombine.low %v740, %v742
      %v764 = vcombine.high %v740, %v742
      %v766 = vunpack.c.l.s4 1983009808
      %v767 = vunpack.c.0.s8 %v766
      %v768 = vlaneseq
      %v769 = vshrl.u32 %v768, 7
      %v770 = vsub.s32 %v767, %v769
      %v771 = vrot.slane %v763, %v770
      %v773 = vunpack.c.l.s4 1983009808
      %v774 = vunpack.c.0.s8 %v773
      %v775 = vlaneseq
      %v776 = vshrl.u32 %v775, 7
      %v777 = vsub.s32 %v774, %v776
      %v778 = vrot.slane %v764, %v777
      %v779 = vcombine.low %v743, %v745
      %v780 = vcombine.high %v743, %v745
      %v782 = vunpack.c.l.s4 1983009808
      %v783 = vunpack.c.0.s8 %v782
      %v784 = vlaneseq
      %v785 = vshrl.u32 %v784, 7
      %v786 = vsub.s32 %v783, %v785
      %v787 = vrot.slane %v779, %v786
      %v789 = vunpack.c.l.s4 1983009808
      %v790 = vunpack.c.0.s8 %v789
      %v791 = vlaneseq
      %v792 = vshrl.u32 %v791, 7
      %v793 = vsub.s32 %v790, %v792
      %v794 = vrot.slane %v780, %v793
      %v795 = vcombine.low %v744, %v746
      %v796 = vcombine.high %v744, %v746
      %v798 = vunpack.c.l.s4 1983009808
      %v799 = vunpack.c.0.s8 %v798
      %v800 = vlaneseq
      %v801 = vshrl.u32 %v800, 7
      %v802 = vsub.s32 %v799, %v801
      %v803 = vrot.slane %v795, %v802
      %v805 = vunpack.c.l.s4 1983009808
      %v806 = vunpack.c.0.s8 %v805
      %v807 = vlaneseq
      %v808 = vshrl.u32 %v807, 7
      %v809 = vsub.s32 %v806, %v808
      %v810 = vrot.slane %v796, %v809
      %v811 = vcombine.low %v755, %v771
      %v812 = vcombine.high %v755, %v771
      %v814 = vunpack.c.l.s4 1934713408
      %v815 = vunpack.c.0.s8 %v814
      %v816 = vlaneseq
      %v817 = vshrl.u32 %v816, 7
      %v818 = vsub.s32 %v815, %v817
      %v819 = vrot.slane %v811, %v818
      %v821 = vunpack.c.l.s4 1934713408
      %v822 = vunpack.c.0.s8 %v821
      %v823 = vlaneseq
      %v824 = vshrl.u32 %v823, 7
      %v825 = vsub.s32 %v822, %v824
      %v826 = vrot.slane %v812, %v825
      %v827 = vcombine.low %v762, %v778
      %v828 = vcombine.high %v762, %v778
      %v830 = vunpack.c.l.s4 1934713408
      %v831 = vunpack.c.0.s8 %v830
      %v832 = vlaneseq
      %v833 = vshrl.u32 %v832, 7
      %v834 = vsub.s32 %v831, %v833
      %v835 = vrot.slane %v827, %v834
      %v837 = vunpack.c.l.s4 1934713408
      %v838 = vunpack.c.0.s8 %v837
      %v839 = vlaneseq
      %v840 = vshrl.u32 %v839, 7
      %v841 = vsub.s32 %v838, %v840
      %v842 = vrot.slane %v828, %v841
      %v843 = vcombine.low %v787, %v803
      %v844 = vcombine.high %v787, %v803
      %v846 = vunpack.c.l.s4 1934713408
      %v847 = vunpack.c.0.s8 %v846
      %v848 = vlaneseq
      %v849 = vshrl.u32 %v848, 7
      %v850 = vsub.s32 %v847, %v849
      %v851 = vrot.slane %v843, %v850
      %v853 = vunpack.c.l.s4 1934713408
      %v854 = vunpack.c.0.s8 %v853
      %v855 = vlaneseq
      %v856 = vshrl.u32 %v855, 7
      %v857 = vsub.s32 %v854, %v856
      %v858 = vrot.slane %v844, %v857
      %v859 = vcombine.low %v794, %v810
      %v860 = vcombine.high %v794, %v810
      %v862 = vunpack.c.l.s4 1934713408
      %v863 = vunpack.c.0.s8 %v862
      %v864 = vlaneseq
      %v865 = vshrl.u32 %v864, 7
      %v866 = vsub.s32 %v863, %v865
      %v867 = vrot.slane %v859, %v866
      %v869 = vunpack.c.l.s4 1934713408
      %v870 = vunpack.c.0.s8 %v869
      %v871 = vlaneseq
      %v872 = vshrl.u32 %v871, 7
      %v873 = vsub.s32 %v870, %v872
      %v874 = vrot.slane %v860, %v873
      %v875 = vcombine.low %v819, %v851
      %v876 = vcombine.high %v819, %v851
      %v877 = vcombine.low %v826, %v858
      %v878 = vcombine.high %v826, %v858
      %v879 = vcombine.low %v835, %v867
      %v880 = vcombine.high %v835, %v867
      %v881 = vcombine.low %v842, %v874
      %v882 = vcombine.high %v842, %v874
      %885 = vrot.lane.b32.xlu0 %v581, 120
      %v886 = vpop.permute.xlu0 %885
      %887 = vrot.lane.b32.xlu0 %v586, 120
      %v888 = vpop.permute.xlu0 %887
      %891 = vrot.lane.b32.xlu0 %v581, 112
      %v892 = vpop.permute.xlu0 %891
      %893 = vrot.lane.b32.xlu0 %v586, 112
      %v894 = vpop.permute.xlu0 %893
      %897 = vrot.lane.b32.xlu0 %v581, 104
      %v898 = vpop.permute.xlu0 %897
      %899 = vrot.lane.b32.xlu0 %v586, 104
      %v900 = vpop.permute.xlu0 %899
      %903 = vrot.lane.b32.xlu0 %v581, 96
      %v904 = vpop.permute.xlu0 %903
      %905 = vrot.lane.b32.xlu0 %v586, 96
      %v906 = vpop.permute.xlu0 %905
      %909 = vrot.lane.b32.xlu0 %v581, 88
      %v910 = vpop.permute.xlu0 %909
      %911 = vrot.lane.b32.xlu0 %v586, 88
      %v912 = vpop.permute.xlu0 %911
      %915 = vrot.lane.b32.xlu0 %v581, 80
      %v916 = vpop.permute.xlu0 %915
      %917 = vrot.lane.b32.xlu0 %v586, 80
      %v918 = vpop.permute.xlu0 %917
      %921 = vrot.lane.b32.xlu0 %v581, 72
      %v922 = vpop.permute.xlu0 %921
      %923 = vrot.lane.b32.xlu0 %v586, 72
      %v924 = vpop.permute.xlu0 %923
      %v927 = vcombine.low %v581, %v892
      %v928 = vcombine.high %v581, %v892
      %v930 = vunpack.c.l.s4 1983009808
      %v931 = vunpack.c.0.s8 %v930
      %v932 = vlaneseq
      %v933 = vshrl.u32 %v932, 7
      %v934 = vsub.s32 %v931, %v933
      %v935 = vrot.slane %v927, %v934
      %v937 = vunpack.c.l.s4 1983009808
      %v938 = vunpack.c.0.s8 %v937
      %v939 = vlaneseq
      %v940 = vshrl.u32 %v939, 7
      %v941 = vsub.s32 %v938, %v940
      %v942 = vrot.slane %v928, %v941
      %v943 = vcombine.low %v886, %v898
      %v944 = vcombine.high %v886, %v898
      %v946 = vunpack.c.l.s4 1983009808
      %v947 = vunpack.c.0.s8 %v946
      %v948 = vlaneseq
      %v949 = vshrl.u32 %v948, 7
      %v950 = vsub.s32 %v947, %v949
      %v951 = vrot.slane %v943, %v950
      %v953 = vunpack.c.l.s4 1983009808
      %v954 = vunpack.c.0.s8 %v953
      %v955 = vlaneseq
      %v956 = vshrl.u32 %v955, 7
      %v957 = vsub.s32 %v954, %v956
      %v958 = vrot.slane %v944, %v957
      %v959 = vcombine.low %v904, %v916
      %v960 = vcombine.high %v904, %v916
      %v962 = vunpack.c.l.s4 1983009808
      %v963 = vunpack.c.0.s8 %v962
      %v964 = vlaneseq
      %v965 = vshrl.u32 %v964, 7
      %v966 = vsub.s32 %v963, %v965
      %v967 = vrot.slane %v959, %v966
      %v969 = vunpack.c.l.s4 1983009808
      %v970 = vunpack.c.0.s8 %v969
      %v971 = vlaneseq
      %v972 = vshrl.u32 %v971, 7
      %v973 = vsub.s32 %v970, %v972
      %v974 = vrot.slane %v960, %v973
      %v975 = vcombine.low %v910, %v922
      %v976 = vcombine.high %v910, %v922
      %v978 = vunpack.c.l.s4 1983009808
      %v979 = vunpack.c.0.s8 %v978
      %v980 = vlaneseq
      %v981 = vshrl.u32 %v980, 7
      %v982 = vsub.s32 %v979, %v981
      %v983 = vrot.slane %v975, %v982
      %v985 = vunpack.c.l.s4 1983009808
      %v986 = vunpack.c.0.s8 %v985
      %v987 = vlaneseq
      %v988 = vshrl.u32 %v987, 7
      %v989 = vsub.s32 %v986, %v988
      %v990 = vrot.slane %v976, %v989
      %v991 = vcombine.low %v935, %v951
      %v992 = vcombine.high %v935, %v951
      %v994 = vunpack.c.l.s4 1934713408
      %v995 = vunpack.c.0.s8 %v994
      %v996 = vlaneseq
      %v997 = vshrl.u32 %v996, 7
      %v998 = vsub.s32 %v995, %v997
      %v999 = vrot.slane %v991, %v998
      %v1001 = vunpack.c.l.s4 1934713408
      %v1002 = vunpack.c.0.s8 %v1001
      %v1003 = vlaneseq
      %v1004 = vshrl.u32 %v1003, 7
      %v1005 = vsub.s32 %v1002, %v1004
      %v1006 = vrot.slane %v992, %v1005
      %v1007 = vcombine.low %v942, %v958
      %v1008 = vcombine.high %v942, %v958
      %v1010 = vunpack.c.l.s4 1934713408
      %v1011 = vunpack.c.0.s8 %v1010
      %v1012 = vlaneseq
      %v1013 = vshrl.u32 %v1012, 7
      %v1014 = vsub.s32 %v1011, %v1013
      %v1015 = vrot.slane %v1007, %v1014
      %v1017 = vunpack.c.l.s4 1934713408
      %v1018 = vunpack.c.0.s8 %v1017
      %v1019 = vlaneseq
      %v1020 = vshrl.u32 %v1019, 7
      %v1021 = vsub.s32 %v1018, %v1020
      %v1022 = vrot.slane %v1008, %v1021
      %v1023 = vcombine.low %v967, %v983
      %v1024 = vcombine.high %v967, %v983
      %v1026 = vunpack.c.l.s4 1934713408
      %v1027 = vunpack.c.0.s8 %v1026
      %v1028 = vlaneseq
      %v1029 = vshrl.u32 %v1028, 7
      %v1030 = vsub.s32 %v1027, %v1029
      %v1031 = vrot.slane %v1023, %v1030
      %v1033 = vunpack.c.l.s4 1934713408
      %v1034 = vunpack.c.0.s8 %v1033
      %v1035 = vlaneseq
      %v1036 = vshrl.u32 %v1035, 7
      %v1037 = vsub.s32 %v1034, %v1036
      %v1038 = vrot.slane %v1024, %v1037
      %v1039 = vcombine.low %v974, %v990
      %v1040 = vcombine.high %v974, %v990
      %v1042 = vunpack.c.l.s4 1934713408
      %v1043 = vunpack.c.0.s8 %v1042
      %v1044 = vlaneseq
      %v1045 = vshrl.u32 %v1044, 7
      %v1046 = vsub.s32 %v1043, %v1045
      %v1047 = vrot.slane %v1039, %v1046
      %v1049 = vunpack.c.l.s4 1934713408
      %v1050 = vunpack.c.0.s8 %v1049
      %v1051 = vlaneseq
      %v1052 = vshrl.u32 %v1051, 7
      %v1053 = vsub.s32 %v1050, %v1052
      %v1054 = vrot.slane %v1040, %v1053
      %v1055 = vcombine.low %v999, %v1031
      %v1056 = vcombine.high %v999, %v1031
      %v1057 = vcombine.low %v1006, %v1038
      %v1058 = vcombine.high %v1006, %v1038
      %v1059 = vcombine.low %v1015, %v1047
      %v1060 = vcombine.high %v1015, %v1047
      %v1061 = vcombine.low %v1022, %v1054
      %v1062 = vcombine.high %v1022, %v1054
      %v1063 = vcombine.low %v586, %v894
      %v1065 = vunpack.c.l.s4 1983009808
      %v1066 = vunpack.c.0.s8 %v1065
      %v1067 = vlaneseq
      %v1068 = vshrl.u32 %v1067, 7
      %v1069 = vsub.s32 %v1066, %v1068
      %v1070 = vrot.slane %v1063, %v1069
      %v1071 = vcombine.low %v888, %v900
      %v1073 = vunpack.c.l.s4 1983009808
      %v1074 = vunpack.c.0.s8 %v1073
      %v1075 = vlaneseq
      %v1076 = vshrl.u32 %v1075, 7
      %v1077 = vsub.s32 %v1074, %v1076
      %v1078 = vrot.slane %v1071, %v1077
      %v1079 = vcombine.low %v906, %v918
      %v1081 = vunpack.c.l.s4 1983009808
      %v1082 = vunpack.c.0.s8 %v1081
      %v1083 = vlaneseq
      %v1084 = vshrl.u32 %v1083, 7
      %v1085 = vsub.s32 %v1082, %v1084
      %v1086 = vrot.slane %v1079, %v1085
      %v1087 = vcombine.low %v912, %v924
      %v1089 = vunpack.c.l.s4 1983009808
      %v1090 = vunpack.c.0.s8 %v1089
      %v1091 = vlaneseq
      %v1092 = vshrl.u32 %v1091, 7
      %v1093 = vsub.s32 %v1090, %v1092
      %v1094 = vrot.slane %v1087, %v1093
      %v1095 = vcombine.low %v1070, %v1078
      %v1096 = vcombine.high %v1070, %v1078
      %v1098 = vunpack.c.l.s4 1934713408
      %v1099 = vunpack.c.0.s8 %v1098
      %v1100 = vlaneseq
      %v1101 = vshrl.u32 %v1100, 7
      %v1102 = vsub.s32 %v1099, %v1101
      %v1103 = vrot.slane %v1095, %v1102
      %v1105 = vunpack.c.l.s4 1934713408
      %v1106 = vunpack.c.0.s8 %v1105
      %v1107 = vlaneseq
      %v1108 = vshrl.u32 %v1107, 7
      %v1109 = vsub.s32 %v1106, %v1108
      %v1110 = vrot.slane %v1096, %v1109
      %v1111 = vcombine.low %v1086, %v1094
      %v1112 = vcombine.high %v1086, %v1094
      %v1114 = vunpack.c.l.s4 1934713408
      %v1115 = vunpack.c.0.s8 %v1114
      %v1116 = vlaneseq
      %v1117 = vshrl.u32 %v1116, 7
      %v1118 = vsub.s32 %v1115, %v1117
      %v1119 = vrot.slane %v1111, %v1118
      %v1121 = vunpack.c.l.s4 1934713408
      %v1122 = vunpack.c.0.s8 %v1121
      %v1123 = vlaneseq
      %v1124 = vshrl.u32 %v1123, 7
      %v1125 = vsub.s32 %v1122, %v1124
      %v1126 = vrot.slane %v1112, %v1125
      %v1127 = vcombine.low %v1103, %v1119
      %v1128 = vcombine.high %v1103, %v1119
      %v1129 = vcombine.low %v1110, %v1126
      %v1130 = vcombine.high %v1110, %v1126
      %v1131 = vcombine.low %v1055, %v1057
      %v1132 = vcombine.high %v1055, %v1057
      %v1134 = vunpack.c.l.s4 1983009808
      %v1135 = vunpack.c.0.s8 %v1134
      %v1136 = vlaneseq
      %v1137 = vshrl.u32 %v1136, 7
      %v1138 = vsub.s32 %v1135, %v1137
      %v1139 = vrot.slane %v1131, %v1138
      %v1141 = vunpack.c.l.s4 1983009808
      %v1142 = vunpack.c.0.s8 %v1141
      %v1143 = vlaneseq
      %v1144 = vshrl.u32 %v1143, 7
      %v1145 = vsub.s32 %v1142, %v1144
      %v1146 = vrot.slane %v1132, %v1145
      %v1147 = vcombine.low %v1056, %v1058
      %v1148 = vcombine.high %v1056, %v1058
      %v1150 = vunpack.c.l.s4 1983009808
      %v1151 = vunpack.c.0.s8 %v1150
      %v1152 = vlaneseq
      %v1153 = vshrl.u32 %v1152, 7
      %v1154 = vsub.s32 %v1151, %v1153
      %v1155 = vrot.slane %v1147, %v1154
      %v1157 = vunpack.c.l.s4 1983009808
      %v1158 = vunpack.c.0.s8 %v1157
      %v1159 = vlaneseq
      %v1160 = vshrl.u32 %v1159, 7
      %v1161 = vsub.s32 %v1158, %v1160
      %v1162 = vrot.slane %v1148, %v1161
      %v1163 = vcombine.low %v1059, %v1061
      %v1164 = vcombine.high %v1059, %v1061
      %v1166 = vunpack.c.l.s4 1983009808
      %v1167 = vunpack.c.0.s8 %v1166
      %v1168 = vlaneseq
      %v1169 = vshrl.u32 %v1168, 7
      %v1170 = vsub.s32 %v1167, %v1169
      %v1171 = vrot.slane %v1163, %v1170
      %v1173 = vunpack.c.l.s4 1983009808
      %v1174 = vunpack.c.0.s8 %v1173
      %v1175 = vlaneseq
      %v1176 = vshrl.u32 %v1175, 7
      %v1177 = vsub.s32 %v1174, %v1176
      %v1178 = vrot.slane %v1164, %v1177
      %v1179 = vcombine.low %v1060, %v1062
      %v1180 = vcombine.high %v1060, %v1062
      %v1182 = vunpack.c.l.s4 1983009808
      %v1183 = vunpack.c.0.s8 %v1182
      %v1184 = vlaneseq
      %v1185 = vshrl.u32 %v1184, 7
      %v1186 = vsub.s32 %v1183, %v1185
      %v1187 = vrot.slane %v1179, %v1186
      %v1189 = vunpack.c.l.s4 1983009808
      %v1190 = vunpack.c.0.s8 %v1189
      %v1191 = vlaneseq
      %v1192 = vshrl.u32 %v1191, 7
      %v1193 = vsub.s32 %v1190, %v1192
      %v1194 = vrot.slane %v1180, %v1193
      %v1195 = vcombine.low %v1139, %v1155
      %v1196 = vcombine.high %v1139, %v1155
      %v1198 = vunpack.c.l.s4 1934713408
      %v1199 = vunpack.c.0.s8 %v1198
      %v1200 = vlaneseq
      %v1201 = vshrl.u32 %v1200, 7
      %v1202 = vsub.s32 %v1199, %v1201
      %v1203 = vrot.slane %v1195, %v1202
      %v1205 = vunpack.c.l.s4 1934713408
      %v1206 = vunpack.c.0.s8 %v1205
      %v1207 = vlaneseq
      %v1208 = vshrl.u32 %v1207, 7
      %v1209 = vsub.s32 %v1206, %v1208
      %v1210 = vrot.slane %v1196, %v1209
      %v1211 = vcombine.low %v1146, %v1162
      %v1212 = vcombine.high %v1146, %v1162
      %v1214 = vunpack.c.l.s4 1934713408
      %v1215 = vunpack.c.0.s8 %v1214
      %v1216 = vlaneseq
      %v1217 = vshrl.u32 %v1216, 7
      %v1218 = vsub.s32 %v1215, %v1217
      %v1219 = vrot.slane %v1211, %v1218
      %v1221 = vunpack.c.l.s4 1934713408
      %v1222 = vunpack.c.0.s8 %v1221
      %v1223 = vlaneseq
      %v1224 = vshrl.u32 %v1223, 7
      %v1225 = vsub.s32 %v1222, %v1224
      %v1226 = vrot.slane %v1212, %v1225
      %v1227 = vcombine.low %v1171, %v1187
      %v1228 = vcombine.high %v1171, %v1187
      %v1230 = vunpack.c.l.s4 1934713408
      %v1231 = vunpack.c.0.s8 %v1230
      %v1232 = vlaneseq
      %v1233 = vshrl.u32 %v1232, 7
      %v1234 = vsub.s32 %v1231, %v1233
      %v1235 = vrot.slane %v1227, %v1234
      %v1237 = vunpack.c.l.s4 1934713408
      %v1238 = vunpack.c.0.s8 %v1237
      %v1239 = vlaneseq
      %v1240 = vshrl.u32 %v1239, 7
      %v1241 = vsub.s32 %v1238, %v1240
      %v1242 = vrot.slane %v1228, %v1241
      %v1243 = vcombine.low %v1178, %v1194
      %v1244 = vcombine.high %v1178, %v1194
      %v1246 = vunpack.c.l.s4 1934713408
      %v1247 = vunpack.c.0.s8 %v1246
      %v1248 = vlaneseq
      %v1249 = vshrl.u32 %v1248, 7
      %v1250 = vsub.s32 %v1247, %v1249
      %v1251 = vrot.slane %v1243, %v1250
      %v1253 = vunpack.c.l.s4 1934713408
      %v1254 = vunpack.c.0.s8 %v1253
      %v1255 = vlaneseq
      %v1256 = vshrl.u32 %v1255, 7
      %v1257 = vsub.s32 %v1254, %v1256
      %v1258 = vrot.slane %v1244, %v1257
      %v1259 = vcombine.low %v1203, %v1235
      %v1260 = vcombine.high %v1203, %v1235
      %v1261 = vcombine.low %v1210, %v1242
      %v1262 = vcombine.high %v1210, %v1242
      %v1263 = vcombine.low %v1219, %v1251
      %v1264 = vcombine.high %v1219, %v1251
      %v1265 = vcombine.low %v1226, %v1258
      %v1266 = vcombine.high %v1226, %v1258
      %v1267 = vcombine.low %v1127, %v1129
      %v1268 = vcombine.high %v1127, %v1129
      %v1270 = vunpack.c.l.s4 1983009808
      %v1271 = vunpack.c.0.s8 %v1270
      %v1272 = vlaneseq
      %v1273 = vshrl.u32 %v1272, 7
      %v1274 = vsub.s32 %v1271, %v1273
      %v1275 = vrot.slane %v1267, %v1274
      %v1277 = vunpack.c.l.s4 1983009808
      %v1278 = vunpack.c.0.s8 %v1277
      %v1279 = vlaneseq
      %v1280 = vshrl.u32 %v1279, 7
      %v1281 = vsub.s32 %v1278, %v1280
      %v1282 = vrot.slane %v1268, %v1281
      %v1283 = vcombine.low %v1128, %v1130
      %v1284 = vcombine.high %v1128, %v1130
      %v1286 = vunpack.c.l.s4 1983009808
      %v1287 = vunpack.c.0.s8 %v1286
      %v1288 = vlaneseq
      %v1289 = vshrl.u32 %v1288, 7
      %v1290 = vsub.s32 %v1287, %v1289
      %v1291 = vrot.slane %v1283, %v1290
      %v1293 = vunpack.c.l.s4 1983009808
      %v1294 = vunpack.c.0.s8 %v1293
      %v1295 = vlaneseq
      %v1296 = vshrl.u32 %v1295, 7
      %v1297 = vsub.s32 %v1294, %v1296
      %v1298 = vrot.slane %v1284, %v1297
      %v1299 = vcombine.low %v1275, %v1291
      %v1300 = vcombine.high %v1275, %v1291
      %v1302 = vunpack.c.l.s4 1934713408
      %v1303 = vunpack.c.0.s8 %v1302
      %v1304 = vlaneseq
      %v1305 = vshrl.u32 %v1304, 7
      %v1306 = vsub.s32 %v1303, %v1305
      %v1307 = vrot.slane %v1299, %v1306
      %v1309 = vunpack.c.l.s4 1934713408
      %v1310 = vunpack.c.0.s8 %v1309
      %v1311 = vlaneseq
      %v1312 = vshrl.u32 %v1311, 7
      %v1313 = vsub.s32 %v1310, %v1312
      %v1314 = vrot.slane %v1300, %v1313
      %v1315 = vcombine.low %v1282, %v1298
      %v1316 = vcombine.high %v1282, %v1298
      %v1318 = vunpack.c.l.s4 1934713408
      %v1319 = vunpack.c.0.s8 %v1318
      %v1320 = vlaneseq
      %v1321 = vshrl.u32 %v1320, 7
      %v1322 = vsub.s32 %v1319, %v1321
      %v1323 = vrot.slane %v1315, %v1322
      %v1325 = vunpack.c.l.s4 1934713408
      %v1326 = vunpack.c.0.s8 %v1325
      %v1327 = vlaneseq
      %v1328 = vshrl.u32 %v1327, 7
      %v1329 = vsub.s32 %v1326, %v1328
      %v1330 = vrot.slane %v1316, %v1329
      %v1331 = vcombine.high %v1307, 0.0
      %v1332 = vcombine.high %v1314, 0.0
      %v1333 = vcombine.high %v1323, 0.0
      %v1334 = vcombine.high %v1330, 0.0
      %1335 = vrot.lane.b32.xlu0 %v581, 64
      %v1336 = vpop.permute.xlu0 %1335
      %1337 = vrot.lane.b32.xlu0 %v586, 64
      %v1338 = vpop.permute.xlu0 %1337
      %1339 = vrot.lane.b32.xlu0 %v886, 64
      %v1340 = vpop.permute.xlu0 %1339
      %1341 = vrot.lane.b32.xlu0 %v888, 64
      %v1342 = vpop.permute.xlu0 %1341
      %1343 = vrot.lane.b32.xlu0 %v892, 64
      %v1344 = vpop.permute.xlu0 %1343
      %1345 = vrot.lane.b32.xlu0 %v894, 64
      %v1346 = vpop.permute.xlu0 %1345
      %1347 = vrot.lane.b32.xlu0 %v898, 64
      %v1348 = vpop.permute.xlu0 %1347
      %1349 = vrot.lane.b32.xlu0 %v900, 64
      %v1350 = vpop.permute.xlu0 %1349
      %1351 = vrot.lane.b32.xlu0 %v904, 64
      %v1352 = vpop.permute.xlu0 %1351
      %1353 = vrot.lane.b32.xlu0 %v906, 64
      %v1354 = vpop.permute.xlu0 %1353
      %1355 = vrot.lane.b32.xlu0 %v910, 64
      %v1356 = vpop.permute.xlu0 %1355
      %1357 = vrot.lane.b32.xlu0 %v912, 64
      %v1358 = vpop.permute.xlu0 %1357
      %1359 = vrot.lane.b32.xlu0 %v916, 64
      %v1360 = vpop.permute.xlu0 %1359
      %1361 = vrot.lane.b32.xlu0 %v918, 64
      %v1362 = vpop.permute.xlu0 %1361
      %1363 = vrot.lane.b32.xlu0 %v922, 64
      %v1364 = vpop.permute.xlu0 %1363
      %1365 = vrot.lane.b32.xlu0 %v924, 64
      %v1366 = vpop.permute.xlu0 %1365
      %v1383 = vcombine.low %v1336, %v1344
      %v1384 = vcombine.high %v1336, %v1344
      %v1386 = vunpack.c.l.s4 1983009808
      %v1387 = vunpack.c.0.s8 %v1386
      %v1388 = vlaneseq
      %v1389 = vshrl.u32 %v1388, 7
      %v1390 = vsub.s32 %v1387, %v1389
      %v1391 = vrot.slane %v1383, %v1390
      %v1393 = vunpack.c.l.s4 1983009808
      %v1394 = vunpack.c.0.s8 %v1393
      %v1395 = vlaneseq
      %v1396 = vshrl.u32 %v1395, 7
      %v1397 = vsub.s32 %v1394, %v1396
      %v1398 = vrot.slane %v1384, %v1397
      %v1399 = vcombine.low %v1340, %v1348
      %v1400 = vcombine.high %v1340, %v1348
      %v1402 = vunpack.c.l.s4 1983009808
      %v1403 = vunpack.c.0.s8 %v1402
      %v1404 = vlaneseq
      %v1405 = vshrl.u32 %v1404, 7
      %v1406 = vsub.s32 %v1403, %v1405
      %v1407 = vrot.slane %v1399, %v1406
      %v1409 = vunpack.c.l.s4 1983009808
      %v1410 = vunpack.c.0.s8 %v1409
      %v1411 = vlaneseq
      %v1412 = vshrl.u32 %v1411, 7
      %v1413 = vsub.s32 %v1410, %v1412
      %v1414 = vrot.slane %v1400, %v1413
      %v1415 = vcombine.low %v1352, %v1360
      %v1416 = vcombine.high %v1352, %v1360
      %v1418 = vunpack.c.l.s4 1983009808
      %v1419 = vunpack.c.0.s8 %v1418
      %v1420 = vlaneseq
      %v1421 = vshrl.u32 %v1420, 7
      %v1422 = vsub.s32 %v1419, %v1421
      %v1423 = vrot.slane %v1415, %v1422
      %v1425 = vunpack.c.l.s4 1983009808
      %v1426 = vunpack.c.0.s8 %v1425
      %v1427 = vlaneseq
      %v1428 = vshrl.u32 %v1427, 7
      %v1429 = vsub.s32 %v1426, %v1428
      %v1430 = vrot.slane %v1416, %v1429
      %v1431 = vcombine.low %v1356, %v1364
      %v1432 = vcombine.high %v1356, %v1364
      %v1434 = vunpack.c.l.s4 1983009808
      %v1435 = vunpack.c.0.s8 %v1434
      %v1436 = vlaneseq
      %v1437 = vshrl.u32 %v1436, 7
      %v1438 = vsub.s32 %v1435, %v1437
      %v1439 = vrot.slane %v1431, %v1438
      %v1441 = vunpack.c.l.s4 1983009808
      %v1442 = vunpack.c.0.s8 %v1441
      %v1443 = vlaneseq
      %v1444 = vshrl.u32 %v1443, 7
      %v1445 = vsub.s32 %v1442, %v1444
      %v1446 = vrot.slane %v1432, %v1445
      %v1447 = vcombine.low %v1391, %v1407
      %v1448 = vcombine.high %v1391, %v1407
      %v1450 = vunpack.c.l.s4 1934713408
      %v1451 = vunpack.c.0.s8 %v1450
      %v1452 = vlaneseq
      %v1453 = vshrl.u32 %v1452, 7
      %v1454 = vsub.s32 %v1451, %v1453
      %v1455 = vrot.slane %v1447, %v1454
      %v1457 = vunpack.c.l.s4 1934713408
      %v1458 = vunpack.c.0.s8 %v1457
      %v1459 = vlaneseq
      %v1460 = vshrl.u32 %v1459, 7
      %v1461 = vsub.s32 %v1458, %v1460
      %v1462 = vrot.slane %v1448, %v1461
      %v1463 = vcombine.low %v1398, %v1414
      %v1464 = vcombine.high %v1398, %v1414
      %v1466 = vunpack.c.l.s4 1934713408
      %v1467 = vunpack.c.0.s8 %v1466
      %v1468 = vlaneseq
      %v1469 = vshrl.u32 %v1468, 7
      %v1470 = vsub.s32 %v1467, %v1469
      %v1471 = vrot.slane %v1463, %v1470
      %v1473 = vunpack.c.l.s4 1934713408
      %v1474 = vunpack.c.0.s8 %v1473
      %v1475 = vlaneseq
      %v1476 = vshrl.u32 %v1475, 7
      %v1477 = vsub.s32 %v1474, %v1476
      %v1478 = vrot.slane %v1464, %v1477
      %v1479 = vcombine.low %v1423, %v1439
      %v1480 = vcombine.high %v1423, %v1439
      %v1482 = vunpack.c.l.s4 1934713408
      %v1483 = vunpack.c.0.s8 %v1482
      %v1484 = vlaneseq
      %v1485 = vshrl.u32 %v1484, 7
      %v1486 = vsub.s32 %v1483, %v1485
      %v1487 = vrot.slane %v1479, %v1486
      %v1489 = vunpack.c.l.s4 1934713408
      %v1490 = vunpack.c.0.s8 %v1489
      %v1491 = vlaneseq
      %v1492 = vshrl.u32 %v1491, 7
      %v1493 = vsub.s32 %v1490, %v1492
      %v1494 = vrot.slane %v1480, %v1493
      %v1495 = vcombine.low %v1430, %v1446
      %v1496 = vcombine.high %v1430, %v1446
      %v1498 = vunpack.c.l.s4 1934713408
      %v1499 = vunpack.c.0.s8 %v1498
      %v1500 = vlaneseq
      %v1501 = vshrl.u32 %v1500, 7
      %v1502 = vsub.s32 %v1499, %v1501
      %v1503 = vrot.slane %v1495, %v1502
      %v1505 = vunpack.c.l.s4 1934713408
      %v1506 = vunpack.c.0.s8 %v1505
      %v1507 = vlaneseq
      %v1508 = vshrl.u32 %v1507, 7
      %v1509 = vsub.s32 %v1506, %v1508
      %v1510 = vrot.slane %v1496, %v1509
      %v1511 = vcombine.low %v1455, %v1487
      %v1512 = vcombine.high %v1455, %v1487
      %v1513 = vcombine.low %v1462, %v1494
      %v1514 = vcombine.high %v1462, %v1494
      %v1515 = vcombine.low %v1471, %v1503
      %v1516 = vcombine.high %v1471, %v1503
      %v1517 = vcombine.low %v1478, %v1510
      %v1518 = vcombine.high %v1478, %v1510
      %v1519 = vcombine.low %v1338, %v1346
      %v1521 = vunpack.c.l.s4 1983009808
      %v1522 = vunpack.c.0.s8 %v1521
      %v1523 = vlaneseq
      %v1524 = vshrl.u32 %v1523, 7
      %v1525 = vsub.s32 %v1522, %v1524
      %v1526 = vrot.slane %v1519, %v1525
      %v1527 = vcombine.low %v1342, %v1350
      %v1529 = vunpack.c.l.s4 1983009808
      %v1530 = vunpack.c.0.s8 %v1529
      %v1531 = vlaneseq
      %v1532 = vshrl.u32 %v1531, 7
      %v1533 = vsub.s32 %v1530, %v1532
      %v1534 = vrot.slane %v1527, %v1533
      %v1535 = vcombine.low %v1354, %v1362
      %v1537 = vunpack.c.l.s4 1983009808
      %v1538 = vunpack.c.0.s8 %v1537
      %v1539 = vlaneseq
      %v1540 = vshrl.u32 %v1539, 7
      %v1541 = vsub.s32 %v1538, %v1540
      %v1542 = vrot.slane %v1535, %v1541
      %v1543 = vcombine.low %v1358, %v1366
      %v1545 = vunpack.c.l.s4 1983009808
      %v1546 = vunpack.c.0.s8 %v1545
      %v1547 = vlaneseq
      %v1548 = vshrl.u32 %v1547, 7
      %v1549 = vsub.s32 %v1546, %v1548
      %v1550 = vrot.slane %v1543, %v1549
      %v1551 = vcombine.low %v1526, %v1534
      %v1552 = vcombine.high %v1526, %v1534
      %v1554 = vunpack.c.l.s4 1934713408
      %v1555 = vunpack.c.0.s8 %v1554
      %v1556 = vlaneseq
      %v1557 = vshrl.u32 %v1556, 7
      %v1558 = vsub.s32 %v1555, %v1557
      %v1559 = vrot.slane %v1551, %v1558
      %v1561 = vunpack.c.l.s4 1934713408
      %v1562 = vunpack.c.0.s8 %v1561
      %v1563 = vlaneseq
      %v1564 = vshrl.u32 %v1563, 7
      %v1565 = vsub.s32 %v1562, %v1564
      %v1566 = vrot.slane %v1552, %v1565
      %v1567 = vcombine.low %v1542, %v1550
      %v1568 = vcombine.high %v1542, %v1550
      %v1570 = vunpack.c.l.s4 1934713408
      %v1571 = vunpack.c.0.s8 %v1570
      %v1572 = vlaneseq
      %v1573 = vshrl.u32 %v1572, 7
      %v1574 = vsub.s32 %v1571, %v1573
      %v1575 = vrot.slane %v1567, %v1574
      %v1577 = vunpack.c.l.s4 1934713408
      %v1578 = vunpack.c.0.s8 %v1577
      %v1579 = vlaneseq
      %v1580 = vshrl.u32 %v1579, 7
      %v1581 = vsub.s32 %v1578, %v1580
      %v1582 = vrot.slane %v1568, %v1581
      %v1583 = vcombine.low %v1559, %v1575
      %v1584 = vcombine.high %v1559, %v1575
      %v1585 = vcombine.low %v1566, %v1582
      %v1586 = vcombine.high %v1566, %v1582
      %v1587 = vcombine.low %v1511, %v1513
      %v1588 = vcombine.high %v1511, %v1513
      %v1590 = vunpack.c.l.s4 1983009808
      %v1591 = vunpack.c.0.s8 %v1590
      %v1592 = vlaneseq
      %v1593 = vshrl.u32 %v1592, 7
      %v1594 = vsub.s32 %v1591, %v1593
      %v1595 = vrot.slane %v1587, %v1594
      %v1597 = vunpack.c.l.s4 1983009808
      %v1598 = vunpack.c.0.s8 %v1597
      %v1599 = vlaneseq
      %v1600 = vshrl.u32 %v1599, 7
      %v1601 = vsub.s32 %v1598, %v1600
      %v1602 = vrot.slane %v1588, %v1601
      %v1603 = vcombine.low %v1512, %v1514
      %v1604 = vcombine.high %v1512, %v1514
      %v1606 = vunpack.c.l.s4 1983009808
      %v1607 = vunpack.c.0.s8 %v1606
      %v1608 = vlaneseq
      %v1609 = vshrl.u32 %v1608, 7
      %v1610 = vsub.s32 %v1607, %v1609
      %v1611 = vrot.slane %v1603, %v1610
      %v1613 = vunpack.c.l.s4 1983009808
      %v1614 = vunpack.c.0.s8 %v1613
      %v1615 = vlaneseq
      %v1616 = vshrl.u32 %v1615, 7
      %v1617 = vsub.s32 %v1614, %v1616
      %v1618 = vrot.slane %v1604, %v1617
      %v1619 = vcombine.low %v1515, %v1517
      %v1620 = vcombine.high %v1515, %v1517
      %v1622 = vunpack.c.l.s4 1983009808
      %v1623 = vunpack.c.0.s8 %v1622
      %v1624 = vlaneseq
      %v1625 = vshrl.u32 %v1624, 7
      %v1626 = vsub.s32 %v1623, %v1625
      %v1627 = vrot.slane %v1619, %v1626
      %v1629 = vunpack.c.l.s4 1983009808
      %v1630 = vunpack.c.0.s8 %v1629
      %v1631 = vlaneseq
      %v1632 = vshrl.u32 %v1631, 7
      %v1633 = vsub.s32 %v1630, %v1632
      %v1634 = vrot.slane %v1620, %v1633
      %v1635 = vcombine.low %v1516, %v1518
      %v1636 = vcombine.high %v1516, %v1518
      %v1638 = vunpack.c.l.s4 1983009808
      %v1639 = vunpack.c.0.s8 %v1638
      %v1640 = vlaneseq
      %v1641 = vshrl.u32 %v1640, 7
      %v1642 = vsub.s32 %v1639, %v1641
      %v1643 = vrot.slane %v1635, %v1642
      %v1645 = vunpack.c.l.s4 1983009808
      %v1646 = vunpack.c.0.s8 %v1645
      %v1647 = vlaneseq
      %v1648 = vshrl.u32 %v1647, 7
      %v1649 = vsub.s32 %v1646, %v1648
      %v1650 = vrot.slane %v1636, %v1649
      %v1651 = vcombine.low %v1595, %v1611
      %v1652 = vcombine.high %v1595, %v1611
      %v1654 = vunpack.c.l.s4 1934713408
      %v1655 = vunpack.c.0.s8 %v1654
      %v1656 = vlaneseq
      %v1657 = vshrl.u32 %v1656, 7
      %v1658 = vsub.s32 %v1655, %v1657
      %v1659 = vrot.slane %v1651, %v1658
      %v1661 = vunpack.c.l.s4 1934713408
      %v1662 = vunpack.c.0.s8 %v1661
      %v1663 = vlaneseq
      %v1664 = vshrl.u32 %v1663, 7
      %v1665 = vsub.s32 %v1662, %v1664
      %v1666 = vrot.slane %v1652, %v1665
      %v1667 = vcombine.low %v1602, %v1618
      %v1668 = vcombine.high %v1602, %v1618
      %v1670 = vunpack.c.l.s4 1934713408
      %v1671 = vunpack.c.0.s8 %v1670
      %v1672 = vlaneseq
      %v1673 = vshrl.u32 %v1672, 7
      %v1674 = vsub.s32 %v1671, %v1673
      %v1675 = vrot.slane %v1667, %v1674
      %v1677 = vunpack.c.l.s4 1934713408
      %v1678 = vunpack.c.0.s8 %v1677
      %v1679 = vlaneseq
      %v1680 = vshrl.u32 %v1679, 7
      %v1681 = vsub.s32 %v1678, %v1680
      %v1682 = vrot.slane %v1668, %v1681
      %v1683 = vcombine.low %v1627, %v1643
      %v1684 = vcombine.high %v1627, %v1643
      %v1686 = vunpack.c.l.s4 1934713408
      %v1687 = vunpack.c.0.s8 %v1686
      %v1688 = vlaneseq
      %v1689 = vshrl.u32 %v1688, 7
      %v1690 = vsub.s32 %v1687, %v1689
      %v1691 = vrot.slane %v1683, %v1690
      %v1693 = vunpack.c.l.s4 1934713408
      %v1694 = vunpack.c.0.s8 %v1693
      %v1695 = vlaneseq
      %v1696 = vshrl.u32 %v1695, 7
      %v1697 = vsub.s32 %v1694, %v1696
      %v1698 = vrot.slane %v1684, %v1697
      %v1699 = vcombine.low %v1634, %v1650
      %v1700 = vcombine.high %v1634, %v1650
      %v1702 = vunpack.c.l.s4 1934713408
      %v1703 = vunpack.c.0.s8 %v1702
      %v1704 = vlaneseq
      %v1705 = vshrl.u32 %v1704, 7
      %v1706 = vsub.s32 %v1703, %v1705
      %v1707 = vrot.slane %v1699, %v1706
      %v1709 = vunpack.c.l.s4 1934713408
      %v1710 = vunpack.c.0.s8 %v1709
      %v1711 = vlaneseq
      %v1712 = vshrl.u32 %v1711, 7
      %v1713 = vsub.s32 %v1710, %v1712
      %v1714 = vrot.slane %v1700, %v1713
      %v1715 = vcombine.low %v1659, %v1691
      %v1716 = vcombine.high %v1659, %v1691
      %v1717 = vcombine.low %v1666, %v1698
      %v1718 = vcombine.high %v1666, %v1698
      %v1719 = vcombine.low %v1675, %v1707
      %v1720 = vcombine.high %v1675, %v1707
      %v1721 = vcombine.low %v1682, %v1714
      %v1722 = vcombine.high %v1682, %v1714
      %v1723 = vcombine.low %v1583, %v1585
      %v1724 = vcombine.high %v1583, %v1585
      %v1726 = vunpack.c.l.s4 1983009808
      %v1727 = vunpack.c.0.s8 %v1726
      %v1728 = vlaneseq
      %v1729 = vshrl.u32 %v1728, 7
      %v1730 = vsub.s32 %v1727, %v1729
      %v1731 = vrot.slane %v1723, %v1730
      %v1733 = vunpack.c.l.s4 1983009808
      %v1734 = vunpack.c.0.s8 %v1733
      %v1735 = vlaneseq
      %v1736 = vshrl.u32 %v1735, 7
      %v1737 = vsub.s32 %v1734, %v1736
      %v1738 = vrot.slane %v1724, %v1737
      %v1739 = vcombine.low %v1584, %v1586
      %v1740 = vcombine.high %v1584, %v1586
      %v1742 = vunpack.c.l.s4 1983009808
      %v1743 = vunpack.c.0.s8 %v1742
      %v1744 = vlaneseq
      %v1745 = vshrl.u32 %v1744, 7
      %v1746 = vsub.s32 %v1743, %v1745
      %v1747 = vrot.slane %v1739, %v1746
      %v1749 = vunpack.c.l.s4 1983009808
      %v1750 = vunpack.c.0.s8 %v1749
      %v1751 = vlaneseq
      %v1752 = vshrl.u32 %v1751, 7
      %v1753 = vsub.s32 %v1750, %v1752
      %v1754 = vrot.slane %v1740, %v1753
      %v1755 = vcombine.low %v1731, %v1747
      %v1756 = vcombine.high %v1731, %v1747
      %v1758 = vunpack.c.l.s4 1934713408
      %v1759 = vunpack.c.0.s8 %v1758
      %v1760 = vlaneseq
      %v1761 = vshrl.u32 %v1760, 7
      %v1762 = vsub.s32 %v1759, %v1761
      %v1763 = vrot.slane %v1755, %v1762
      %v1765 = vunpack.c.l.s4 1934713408
      %v1766 = vunpack.c.0.s8 %v1765
      %v1767 = vlaneseq
      %v1768 = vshrl.u32 %v1767, 7
      %v1769 = vsub.s32 %v1766, %v1768
      %v1770 = vrot.slane %v1756, %v1769
      %v1771 = vcombine.low %v1738, %v1754
      %v1772 = vcombine.high %v1738, %v1754
      %v1774 = vunpack.c.l.s4 1934713408
      %v1775 = vunpack.c.0.s8 %v1774
      %v1776 = vlaneseq
      %v1777 = vshrl.u32 %v1776, 7
      %v1778 = vsub.s32 %v1775, %v1777
      %v1779 = vrot.slane %v1771, %v1778
      %v1781 = vunpack.c.l.s4 1934713408
      %v1782 = vunpack.c.0.s8 %v1781
      %v1783 = vlaneseq
      %v1784 = vshrl.u32 %v1783, 7
      %v1785 = vsub.s32 %v1782, %v1784
      %v1786 = vrot.slane %v1772, %v1785
      %v1787 = vcombine.high %v1763, 0.0
      %v1788 = vcombine.high %v1770, 0.0
      %v1789 = vcombine.high %v1779, 0.0
      %v1790 = vcombine.high %v1786, 0.0
      %vm1791 = vcmask 64512
      %v1793 = vsel %vm1791, %v875, 0
      %v1796 = vsel %vm1791, %v1259, 0
      %v1799 = vsel %vm1791, %v1307, 0
      %1801 = vmatprep.subr.mxu0 0.0
      %1802 = vmatpush1.xpose.msra.mxu0 %v1796
      %1803 = vmatprep.subr.mxu0 0.0
      %1804 = vmatpush1.xpose.msra.mxu0 %v1799
      %1805 = vmatprep.subr.mxu0 0.0
      %1806 = vmatpush1.xpose.msra.mxu0 0.0
      %1807 = vmatprep.subr.mxu0 0.0
      %1808 = vmatpush1.xpose.msra.mxu0 0.0
      %1809 = vmatprep.subr.mxu0 0.0
      %1810 = vmatpush1.xpose.msra.mxu0 0.0
      %1811 = vmatprep.subr.mxu0 0.0
      %1812 = vmatpush1.xpose.msra.mxu0 0.0
      %1813 = vmatprep.subr.mxu0 0.0
      %1814 = vmatpush1.xpose.msra.mxu0 0.0
      %1815 = vmatprep.subr.mxu0 0.0
      %1816 = vmatpush1.xpose.msra.mxu0 0.0
      %1817 = vmatprep.subr.mxu0 0.0
      %1818 = vmatpush1.xpose.msra.mxu0 0.0
      %1819 = vmatprep.subr.mxu0 0.0
      %1820 = vmatpush1.xpose.msra.mxu0 0.0
      %1821 = vmatprep.subr.mxu0 0.0
      %1822 = vmatpush1.xpose.msra.mxu0 0.0
      %1823 = vmatprep.subr.mxu0 0.0
      %1824 = vmatpush1.xpose.msra.mxu0 0.0
      %1825 = vmatprep.subr.mxu0 0.0
      %1826 = vmatpush1.xpose.msra.mxu0 0.0
      %1827 = vmatprep.subr.mxu0 0.0
      %1828 = vmatpush1.xpose.msra.mxu0 0.0
      %1829 = vmatprep.subr.mxu0 0.0
      %1830 = vmatpush1.xpose.msra.mxu0 0.0
      %1831 = vmatprep.subr.mxu0 0.0
      %1832 = vmatpush1.xpose.msra.mxu0 0.0
      %1833 = vmatprep.subr.mxu0 0.0
      %1834 = vmatpush1.xpose.msra.mxu0 0.0
      %1835 = vmatprep.subr.mxu0 0.0
      %1836 = vmatpush1.xpose.msra.mxu0 0.0
      %1837 = vmatprep.subr.mxu0 0.0
      %1838 = vmatpush1.xpose.msra.mxu0 0.0
      %1839 = vmatprep.subr.mxu0 0.0
      %1840 = vmatpush1.xpose.msra.mxu0 0.0
      %1841 = vmatprep.subr.mxu0 0.0
      %1842 = vmatpush1.xpose.msra.mxu0 0.0
      %1843 = vmatprep.subr.mxu0 0.0
      %1844 = vmatpush1.xpose.msra.mxu0 0.0
      %1845 = vmatprep.subr.mxu0 0.0
      %1846 = vmatpush1.xpose.msra.mxu0 0.0
      %1847 = vmatprep.subr.mxu0 0.0
      %1848 = vmatpush1.xpose.msra.mxu0 0.0
      %1849 = vmatprep.subr.mxu0 0.0
      %1850 = vmatpush1.xpose.msra.mxu0 0.0
      %1851 = vmatprep.subr.mxu0 0.0
      %1852 = vmatpush1.xpose.msra.mxu0 0.0
      %1853 = vmatprep.subr.mxu0 0.0
      %1854 = vmatpush1.xpose.msra.mxu0 0.0
      %1855 = vmatprep.subr.mxu0 0.0
      %1856 = vmatpush1.xpose.msra.mxu0 0.0
      %1857 = vmatprep.subr.mxu0 0.0
      %1858 = vmatpush1.xpose.msra.mxu0 0.0
      %1859 = vmatprep.subr.mxu0 0.0
      %1860 = vmatpush1.xpose.msra.mxu0 0.0
      %1861 = vmatprep.subr.mxu0 0.0
      %1862 = vmatpush1.xpose.msra.mxu0 0.0
      %1863 = vmatprep.subr.mxu0 0.0
      %1864 = vmatpush1.xpose.msra.mxu0 0.0
      %1865 = vmatprep.mubr.f32.mxu0 0.0
      %1866 = vmatmul.mubr.f32.gmra.mrb[0].mxu0 %v1793
      %v1867 = vpop.f32.mrb[0].mxu0
      %v1868 = vadd.f32 0.0, %v1867
      %v1869 = vpop.f32.mrb[0].mxu0
      %1870 = vdwg.mxu0
      %v1872 = vsel %vm1791, %v876, 0
      %v1875 = vsel %vm1791, %v1260, 0
      %v1878 = vsel %vm1791, %v1331, 0
      %1880 = vmatprep.subr.mxu0 0.0
      %1881 = vmatpush1.xpose.msra.mxu0 %v1875
      %1882 = vmatprep.subr.mxu0 0.0
      %1883 = vmatpush1.xpose.msra.mxu0 %v1878
      %1884 = vmatprep.subr.mxu0 0.0
      %1885 = vmatpush1.xpose.msra.mxu0 0.0
      %1886 = vmatprep.subr.mxu0 0.0
      %1887 = vmatpush1.xpose.msra.mxu0 0.0
      %1888 = vmatprep.subr.mxu0 0.0
      %1889 = vmatpush1.xpose.msra.mxu0 0.0
      %1890 = vmatprep.subr.mxu0 0.0
      %1891 = vmatpush1.xpose.msra.mxu0 0.0
      %1892 = vmatprep.subr.mxu0 0.0
      %1893 = vmatpush1.xpose.msra.mxu0 0.0
      %1894 = vmatprep.subr.mxu0 0.0
      %1895 = vmatpush1.xpose.msra.mxu0 0.0
      %1896 = vmatprep.subr.mxu0 0.0
      %1897 = vmatpush1.xpose.msra.mxu0 0.0
      %1898 = vmatprep.subr.mxu0 0.0
      %1899 = vmatpush1.xpose.msra.mxu0 0.0
      %1900 = vmatprep.subr.mxu0 0.0
      %1901 = vmatpush1.xpose.msra.mxu0 0.0
      %1902 = vmatprep.subr.mxu0 0.0
      %1903 = vmatpush1.xpose.msra.mxu0 0.0
      %1904 = vmatprep.subr.mxu0 0.0
      %1905 = vmatpush1.xpose.msra.mxu0 0.0
      %1906 = vmatprep.subr.mxu0 0.0
      %1907 = vmatpush1.xpose.msra.mxu0 0.0
      %1908 = vmatprep.subr.mxu0 0.0
      %1909 = vmatpush1.xpose.msra.mxu0 0.0
      %1910 = vmatprep.subr.mxu0 0.0
      %1911 = vmatpush1.xpose.msra.mxu0 0.0
      %1912 = vmatprep.subr.mxu0 0.0
      %1913 = vmatpush1.xpose.msra.mxu0 0.0
      %1914 = vmatprep.subr.mxu0 0.0
      %1915 = vmatpush1.xpose.msra.mxu0 0.0
      %1916 = vmatprep.subr.mxu0 0.0
      %1917 = vmatpush1.xpose.msra.mxu0 0.0
      %1918 = vmatprep.subr.mxu0 0.0
      %1919 = vmatpush1.xpose.msra.mxu0 0.0
      %1920 = vmatprep.subr.mxu0 0.0
      %1921 = vmatpush1.xpose.msra.mxu0 0.0
      %1922 = vmatprep.subr.mxu0 0.0
      %1923 = vmatpush1.xpose.msra.mxu0 0.0
      %1924 = vmatprep.subr.mxu0 0.0
      %1925 = vmatpush1.xpose.msra.mxu0 0.0
      %1926 = vmatprep.subr.mxu0 0.0
      %1927 = vmatpush1.xpose.msra.mxu0 0.0
      %1928 = vmatprep.subr.mxu0 0.0
      %1929 = vmatpush1.xpose.msra.mxu0 0.0
      %1930 = vmatprep.subr.mxu0 0.0
      %1931 = vmatpush1.xpose.msra.mxu0 0.0
      %1932 = vmatprep.subr.mxu0 0.0
      %1933 = vmatpush1.xpose.msra.mxu0 0.0
      %1934 = vmatprep.subr.mxu0 0.0
      %1935 = vmatpush1.xpose.msra.mxu0 0.0
      %1936 = vmatprep.subr.mxu0 0.0
      %1937 = vmatpush1.xpose.msra.mxu0 0.0
      %1938 = vmatprep.subr.mxu0 0.0
      %1939 = vmatpush1.xpose.msra.mxu0 0.0
      %1940 = vmatprep.subr.mxu0 0.0
      %1941 = vmatpush1.xpose.msra.mxu0 0.0
      %1942 = vmatprep.subr.mxu0 0.0
      %1943 = vmatpush1.xpose.msra.mxu0 0.0
      %1944 = vmatprep.mubr.f32.mxu0 0.0
      %1945 = vmatmul.mubr.f32.gmra.mrb[0].mxu0 %v1872
      %v1946 = vpop.f32.mrb[0].mxu0
      %v1947 = vadd.f32 0.0, %v1946
      %v1948 = vpop.f32.mrb[0].mxu0
      %1949 = vdwg.mxu0
      %v1951 = vsel %vm1791, %v877, 0
      %v1954 = vsel %vm1791, %v1261, 0
      %v1957 = vsel %vm1791, %v1314, 0
      %1959 = vmatprep.subr.mxu0 0.0
      %1960 = vmatpush1.xpose.msra.mxu0 %v1954
      %1961 = vmatprep.subr.mxu0 0.0
      %1962 = vmatpush1.xpose.msra.mxu0 %v1957
      %1963 = vmatprep.subr.mxu0 0.0
      %1964 = vmatpush1.xpose.msra.mxu0 0.0
      %1965 = vmatprep.subr.mxu0 0.0
      %1966 = vmatpush1.xpose.msra.mxu0 0.0
      %1967 = vmatprep.subr.mxu0 0.0
      %1968 = vmatpush1.xpose.msra.mxu0 0.0
      %1969 = vmatprep.subr.mxu0 0.0
      %1970 = vmatpush1.xpose.msra.mxu0 0.0
      %1971 = vmatprep.subr.mxu0 0.0
      %1972 = vmatpush1.xpose.msra.mxu0 0.0
      %1973 = vmatprep.subr.mxu0 0.0
      %1974 = vmatpush1.xpose.msra.mxu0 0.0
      %1975 = vmatprep.subr.mxu0 0.0
      %1976 = vmatpush1.xpose.msra.mxu0 0.0
      %1977 = vmatprep.subr.mxu0 0.0
      %1978 = vmatpush1.xpose.msra.mxu0 0.0
      %1979 = vmatprep.subr.mxu0 0.0
      %1980 = vmatpush1.xpose.msra.mxu0 0.0
      %1981 = vmatprep.subr.mxu0 0.0
      %1982 = vmatpush1.xpose.msra.mxu0 0.0
      %1983 = vmatprep.subr.mxu0 0.0
      %1984 = vmatpush1.xpose.msra.mxu0 0.0
      %1985 = vmatprep.subr.mxu0 0.0
      %1986 = vmatpush1.xpose.msra.mxu0 0.0
      %1987 = vmatprep.subr.mxu0 0.0
      %1988 = vmatpush1.xpose.msra.mxu0 0.0
      %1989 = vmatprep.subr.mxu0 0.0
      %1990 = vmatpush1.xpose.msra.mxu0 0.0
      %1991 = vmatprep.subr.mxu0 0.0
      %1992 = vmatpush1.xpose.msra.mxu0 0.0
      %1993 = vmatprep.subr.mxu0 0.0
      %1994 = vmatpush1.xpose.msra.mxu0 0.0
      %1995 = vmatprep.subr.mxu0 0.0
      %1996 = vmatpush1.xpose.msra.mxu0 0.0
      %1997 = vmatprep.subr.mxu0 0.0
      %1998 = vmatpush1.xpose.msra.mxu0 0.0
      %1999 = vmatprep.subr.mxu0 0.0
      %2000 = vmatpush1.xpose.msra.mxu0 0.0
      %2001 = vmatprep.subr.mxu0 0.0
      %2002 = vmatpush1.xpose.msra.mxu0 0.0
      %2003 = vmatprep.subr.mxu0 0.0
      %2004 = vmatpush1.xpose.msra.mxu0 0.0
      %2005 = vmatprep.subr.mxu0 0.0
      %2006 = vmatpush1.xpose.msra.mxu0 0.0
      %2007 = vmatprep.subr.mxu0 0.0
      %2008 = vmatpush1.xpose.msra.mxu0 0.0
      %2009 = vmatprep.subr.mxu0 0.0
      %2010 = vmatpush1.xpose.msra.mxu0 0.0
      %2011 = vmatprep.subr.mxu0 0.0
      %2012 = vmatpush1.xpose.msra.mxu0 0.0
      %2013 = vmatprep.subr.mxu0 0.0
      %2014 = vmatpush1.xpose.msra.mxu0 0.0
      %2015 = vmatprep.subr.mxu0 0.0
      %2016 = vmatpush1.xpose.msra.mxu0 0.0
      %2017 = vmatprep.subr.mxu0 0.0
      %2018 = vmatpush1.xpose.msra.mxu0 0.0
      %2019 = vmatprep.subr.mxu0 0.0
      %2020 = vmatpush1.xpose.msra.mxu0 0.0
      %2021 = vmatprep.subr.mxu0 0.0
      %2022 = vmatpush1.xpose.msra.mxu0 0.0
      %2023 = vmatprep.mubr.f32.mxu0 0.0
      %2024 = vmatmul.mubr.f32.gmra.mrb[0].mxu0 %v1951
      %v2025 = vpop.f32.mrb[0].mxu0
      %v2026 = vadd.f32 0.0, %v2025
      %v2027 = vpop.f32.mrb[0].mxu0
      %2028 = vdwg.mxu0
      %v2030 = vsel %vm1791, %v878, 0
      %v2033 = vsel %vm1791, %v1262, 0
      %v2036 = vsel %vm1791, %v1332, 0
      %2038 = vmatprep.subr.mxu0 0.0
      %2039 = vmatpush1.xpose.msra.mxu0 %v2033
      %2040 = vmatprep.subr.mxu0 0.0
      %2041 = vmatpush1.xpose.msra.mxu0 %v2036
      %2042 = vmatprep.subr.mxu0 0.0
      %2043 = vmatpush1.xpose.msra.mxu0 0.0
      %2044 = vmatprep.subr.mxu0 0.0
      %2045 = vmatpush1.xpose.msra.mxu0 0.0
      %2046 = vmatprep.subr.mxu0 0.0
      %2047 = vmatpush1.xpose.msra.mxu0 0.0
      %2048 = vmatprep.subr.mxu0 0.0
      %2049 = vmatpush1.xpose.msra.mxu0 0.0
      %2050 = vmatprep.subr.mxu0 0.0
      %2051 = vmatpush1.xpose.msra.mxu0 0.0
      %2052 = vmatprep.subr.mxu0 0.0
      %2053 = vmatpush1.xpose.msra.mxu0 0.0
      %2054 = vmatprep.subr.mxu0 0.0
      %2055 = vmatpush1.xpose.msra.mxu0 0.0
      %2056 = vmatprep.subr.mxu0 0.0
      %2057 = vmatpush1.xpose.msra.mxu0 0.0
      %2058 = vmatprep.subr.mxu0 0.0
      %2059 = vmatpush1.xpose.msra.mxu0 0.0
      %2060 = vmatprep.subr.mxu0 0.0
      %2061 = vmatpush1.xpose.msra.mxu0 0.0
      %2062 = vmatprep.subr.mxu0 0.0
      %2063 = vmatpush1.xpose.msra.mxu0 0.0
      %2064 = vmatprep.subr.mxu0 0.0
      %2065 = vmatpush1.xpose.msra.mxu0 0.0
      %2066 = vmatprep.subr.mxu0 0.0
      %2067 = vmatpush1.xpose.msra.mxu0 0.0
      %2068 = vmatprep.subr.mxu0 0.0
      %2069 = vmatpush1.xpose.msra.mxu0 0.0
      %2070 = vmatprep.subr.mxu0 0.0
      %2071 = vmatpush1.xpose.msra.mxu0 0.0
      %2072 = vmatprep.subr.mxu0 0.0
      %2073 = vmatpush1.xpose.msra.mxu0 0.0
      %2074 = vmatprep.subr.mxu0 0.0
      %2075 = vmatpush1.xpose.msra.mxu0 0.0
      %2076 = vmatprep.subr.mxu0 0.0
      %2077 = vmatpush1.xpose.msra.mxu0 0.0
      %2078 = vmatprep.subr.mxu0 0.0
      %2079 = vmatpush1.xpose.msra.mxu0 0.0
      %2080 = vmatprep.subr.mxu0 0.0
      %2081 = vmatpush1.xpose.msra.mxu0 0.0
      %2082 = vmatprep.subr.mxu0 0.0
      %2083 = vmatpush1.xpose.msra.mxu0 0.0
      %2084 = vmatprep.subr.mxu0 0.0
      %2085 = vmatpush1.xpose.msra.mxu0 0.0
      %2086 = vmatprep.subr.mxu0 0.0
      %2087 = vmatpush1.xpose.msra.mxu0 0.0
      %2088 = vmatprep.subr.mxu0 0.0
      %2089 = vmatpush1.xpose.msra.mxu0 0.0
      %2090 = vmatprep.subr.mxu0 0.0
      %2091 = vmatpush1.xpose.msra.mxu0 0.0
      %2092 = vmatprep.subr.mxu0 0.0
      %2093 = vmatpush1.xpose.msra.mxu0 0.0
      %2094 = vmatprep.subr.mxu0 0.0
      %2095 = vmatpush1.xpose.msra.mxu0 0.0
      %2096 = vmatprep.subr.mxu0 0.0
      %2097 = vmatpush1.xpose.msra.mxu0 0.0
      %2098 = vmatprep.subr.mxu0 0.0
      %2099 = vmatpush1.xpose.msra.mxu0 0.0
      %2100 = vmatprep.subr.mxu0 0.0
      %2101 = vmatpush1.xpose.msra.mxu0 0.0
      %2102 = vmatprep.mubr.f32.mxu0 0.0
      %2103 = vmatmul.mubr.f32.gmra.mrb[0].mxu0 %v2030
      %v2104 = vpop.f32.mrb[0].mxu0
      %v2105 = vadd.f32 0.0, %v2104
      %v2106 = vpop.f32.mrb[0].mxu0
      %2107 = vdwg.mxu0
      %v2109 = vsel %vm1791, %v879, 0
      %v2112 = vsel %vm1791, %v1263, 0
      %v2115 = vsel %vm1791, %v1323, 0
      %2117 = vmatprep.subr.mxu0 0.0
      %2118 = vmatpush1.xpose.msra.mxu0 %v2112
      %2119 = vmatprep.subr.mxu0 0.0
      %2120 = vmatpush1.xpose.msra.mxu0 %v2115
      %2121 = vmatprep.subr.mxu0 0.0
      %2122 = vmatpush1.xpose.msra.mxu0 0.0
      %2123 = vmatprep.subr.mxu0 0.0
      %2124 = vmatpush1.xpose.msra.mxu0 0.0
      %2125 = vmatprep.subr.mxu0 0.0
      %2126 = vmatpush1.xpose.msra.mxu0 0.0
      %2127 = vmatprep.subr.mxu0 0.0
      %2128 = vmatpush1.xpose.msra.mxu0 0.0
      %2129 = vmatprep.subr.mxu0 0.0
      %2130 = vmatpush1.xpose.msra.mxu0 0.0
      %2131 = vmatprep.subr.mxu0 0.0
      %2132 = vmatpush1.xpose.msra.mxu0 0.0
      %2133 = vmatprep.subr.mxu0 0.0
      %2134 = vmatpush1.xpose.msra.mxu0 0.0
      %2135 = vmatprep.subr.mxu0 0.0
      %2136 = vmatpush1.xpose.msra.mxu0 0.0
      %2137 = vmatprep.subr.mxu0 0.0
      %2138 = vmatpush1.xpose.msra.mxu0 0.0
      %2139 = vmatprep.subr.mxu0 0.0
      %2140 = vmatpush1.xpose.msra.mxu0 0.0
      %2141 = vmatprep.subr.mxu0 0.0
      %2142 = vmatpush1.xpose.msra.mxu0 0.0
      %2143 = vmatprep.subr.mxu0 0.0
      %2144 = vmatpush1.xpose.msra.mxu0 0.0
      %2145 = vmatprep.subr.mxu0 0.0
      %2146 = vmatpush1.xpose.msra.mxu0 0.0
      %2147 = vmatprep.subr.mxu0 0.0
      %2148 = vmatpush1.xpose.msra.mxu0 0.0
      %2149 = vmatprep.subr.mxu0 0.0
      %2150 = vmatpush1.xpose.msra.mxu0 0.0
      %2151 = vmatprep.subr.mxu0 0.0
      %2152 = vmatpush1.xpose.msra.mxu0 0.0
      %2153 = vmatprep.subr.mxu0 0.0
      %2154 = vmatpush1.xpose.msra.mxu0 0.0
      %2155 = vmatprep.subr.mxu0 0.0
      %2156 = vmatpush1.xpose.msra.mxu0 0.0
      %2157 = vmatprep.subr.mxu0 0.0
      %2158 = vmatpush1.xpose.msra.mxu0 0.0
      %2159 = vmatprep.subr.mxu0 0.0
      %2160 = vmatpush1.xpose.msra.mxu0 0.0
      %2161 = vmatprep.subr.mxu0 0.0
      %2162 = vmatpush1.xpose.msra.mxu0 0.0
      %2163 = vmatprep.subr.mxu0 0.0
      %2164 = vmatpush1.xpose.msra.mxu0 0.0
      %2165 = vmatprep.subr.mxu0 0.0
      %2166 = vmatpush1.xpose.msra.mxu0 0.0
      %2167 = vmatprep.subr.mxu0 0.0
      %2168 = vmatpush1.xpose.msra.mxu0 0.0
      %2169 = vmatprep.subr.mxu0 0.0
      %2170 = vmatpush1.xpose.msra.mxu0 0.0
      %2171 = vmatprep.subr.mxu0 0.0
      %2172 = vmatpush1.xpose.msra.mxu0 0.0
      %2173 = vmatprep.subr.mxu0 0.0
      %2174 = vmatpush1.xpose.msra.mxu0 0.0
      %2175 = vmatprep.subr.mxu0 0.0
      %2176 = vmatpush1.xpose.msra.mxu0 0.0
      %2177 = vmatprep.subr.mxu0 0.0
      %2178 = vmatpush1.xpose.msra.mxu0 0.0
      %2179 = vmatprep.subr.mxu0 0.0
      %2180 = vmatpush1.xpose.msra.mxu0 0.0
      %2181 = vmatprep.mubr.f32.mxu0 0.0
      %2182 = vmatmul.mubr.f32.gmra.mrb[0].mxu0 %v2109
      %v2183 = vpop.f32.mrb[0].mxu0
      %v2184 = vadd.f32 0.0, %v2183
      %v2185 = vpop.f32.mrb[0].mxu0
      %2186 = vdwg.mxu0
      %v2188 = vsel %vm1791, %v880, 0
      %v2191 = vsel %vm1791, %v1264, 0
      %v2194 = vsel %vm1791, %v1333, 0
      %2196 = vmatprep.subr.mxu0 0.0
      %2197 = vmatpush1.xpose.msra.mxu0 %v2191
      %2198 = vmatprep.subr.mxu0 0.0
      %2199 = vmatpush1.xpose.msra.mxu0 %v2194
      %2200 = vmatprep.subr.mxu0 0.0
      %2201 = vmatpush1.xpose.msra.mxu0 0.0
      %2202 = vmatprep.subr.mxu0 0.0
      %2203 = vmatpush1.xpose.msra.mxu0 0.0
      %2204 = vmatprep.subr.mxu0 0.0
      %2205 = vmatpush1.xpose.msra.mxu0 0.0
      %2206 = vmatprep.subr.mxu0 0.0
      %2207 = vmatpush1.xpose.msra.mxu0 0.0
      %2208 = vmatprep.subr.mxu0 0.0
      %2209 = vmatpush1.xpose.msra.mxu0 0.0
      %2210 = vmatprep.subr.mxu0 0.0
      %2211 = vmatpush1.xpose.msra.mxu0 0.0
      %2212 = vmatprep.subr.mxu0 0.0
      %2213 = vmatpush1.xpose.msra.mxu0 0.0
      %2214 = vmatprep.subr.mxu0 0.0
      %2215 = vmatpush1.xpose.msra.mxu0 0.0
      %2216 = vmatprep.subr.mxu0 0.0
      %2217 = vmatpush1.xpose.msra.mxu0 0.0
      %2218 = vmatprep.subr.mxu0 0.0
      %2219 = vmatpush1.xpose.msra.mxu0 0.0
      %2220 = vmatprep.subr.mxu0 0.0
      %2221 = vmatpush1.xpose.msra.mxu0 0.0
      %2222 = vmatprep.subr.mxu0 0.0
      %2223 = vmatpush1.xpose.msra.mxu0 0.0
      %2224 = vmatprep.subr.mxu0 0.0
      %2225 = vmatpush1.xpose.msra.mxu0 0.0
      %2226 = vmatprep.subr.mxu0 0.0
      %2227 = vmatpush1.xpose.msra.mxu0 0.0
      %2228 = vmatprep.subr.mxu0 0.0
      %2229 = vmatpush1.xpose.msra.mxu0 0.0
      %2230 = vmatprep.subr.mxu0 0.0
      %2231 = vmatpush1.xpose.msra.mxu0 0.0
      %2232 = vmatprep.subr.mxu0 0.0
      %2233 = vmatpush1.xpose.msra.mxu0 0.0
      %2234 = vmatprep.subr.mxu0 0.0
      %2235 = vmatpush1.xpose.msra.mxu0 0.0
      %2236 = vmatprep.subr.mxu0 0.0
      %2237 = vmatpush1.xpose.msra.mxu0 0.0
      %2238 = vmatprep.subr.mxu0 0.0
      %2239 = vmatpush1.xpose.msra.mxu0 0.0
      %2240 = vmatprep.subr.mxu0 0.0
      %2241 = vmatpush1.xpose.msra.mxu0 0.0
      %2242 = vmatprep.subr.mxu0 0.0
      %2243 = vmatpush1.xpose.msra.mxu0 0.0
      %2244 = vmatprep.subr.mxu0 0.0
      %2245 = vmatpush1.xpose.msra.mxu0 0.0
      %2246 = vmatprep.subr.mxu0 0.0
      %2247 = vmatpush1.xpose.msra.mxu0 0.0
      %2248 = vmatprep.subr.mxu0 0.0
      %2249 = vmatpush1.xpose.msra.mxu0 0.0
      %2250 = vmatprep.subr.mxu0 0.0
      %2251 = vmatpush1.xpose.msra.mxu0 0.0
      %2252 = vmatprep.subr.mxu0 0.0
      %2253 = vmatpush1.xpose.msra.mxu0 0.0
      %2254 = vmatprep.subr.mxu0 0.0
      %2255 = vmatpush1.xpose.msra.mxu0 0.0
      %2256 = vmatprep.subr.mxu0 0.0
      %2257 = vmatpush1.xpose.msra.mxu0 0.0
      %2258 = vmatprep.subr.mxu0 0.0
      %2259 = vmatpush1.xpose.msra.mxu0 0.0
      %2260 = vmatprep.mubr.f32.mxu0 0.0
      %2261 = vmatmul.mubr.f32.gmra.mrb[0].mxu0 %v2188
      %v2262 = vpop.f32.mrb[0].mxu0
      %v2263 = vadd.f32 0.0, %v2262
      %v2264 = vpop.f32.mrb[0].mxu0
      %2265 = vdwg.mxu0
      %v2267 = vsel %vm1791, %v881, 0
      %v2270 = vsel %vm1791, %v1265, 0
      %v2273 = vsel %vm1791, %v1330, 0
      %2275 = vmatprep.subr.mxu0 0.0
      %2276 = vmatpush1.xpose.msra.mxu0 %v2270
      %2277 = vmatprep.subr.mxu0 0.0
      %2278 = vmatpush1.xpose.msra.mxu0 %v2273
      %2279 = vmatprep.subr.mxu0 0.0
      %2280 = vmatpush1.xpose.msra.mxu0 0.0
      %2281 = vmatprep.subr.mxu0 0.0
      %2282 = vmatpush1.xpose.msra.mxu0 0.0
      %2283 = vmatprep.subr.mxu0 0.0
      %2284 = vmatpush1.xpose.msra.mxu0 0.0
      %2285 = vmatprep.subr.mxu0 0.0
      %2286 = vmatpush1.xpose.msra.mxu0 0.0
      %2287 = vmatprep.subr.mxu0 0.0
      %2288 = vmatpush1.xpose.msra.mxu0 0.0
      %2289 = vmatprep.subr.mxu0 0.0
      %2290 = vmatpush1.xpose.msra.mxu0 0.0
      %2291 = vmatprep.subr.mxu0 0.0
      %2292 = vmatpush1.xpose.msra.mxu0 0.0
      %2293 = vmatprep.subr.mxu0 0.0
      %2294 = vmatpush1.xpose.msra.mxu0 0.0
      %2295 = vmatprep.subr.mxu0 0.0
      %2296 = vmatpush1.xpose.msra.mxu0 0.0
      %2297 = vmatprep.subr.mxu0 0.0
      %2298 = vmatpush1.xpose.msra.mxu0 0.0
      %2299 = vmatprep.subr.mxu0 0.0
      %2300 = vmatpush1.xpose.msra.mxu0 0.0
      %2301 = vmatprep.subr.mxu0 0.0
      %2302 = vmatpush1.xpose.msra.mxu0 0.0
      %2303 = vmatprep.subr.mxu0 0.0
      %2304 = vmatpush1.xpose.msra.mxu0 0.0
      %2305 = vmatprep.subr.mxu0 0.0
      %2306 = vmatpush1.xpose.msra.mxu0 0.0
      %2307 = vmatprep.subr.mxu0 0.0
      %2308 = vmatpush1.xpose.msra.mxu0 0.0
      %2309 = vmatprep.subr.mxu0 0.0
      %2310 = vmatpush1.xpose.msra.mxu0 0.0
      %2311 = vmatprep.subr.mxu0 0.0
      %2312 = vmatpush1.xpose.msra.mxu0 0.0
      %2313 = vmatprep.subr.mxu0 0.0
      %2314 = vmatpush1.xpose.msra.mxu0 0.0
      %2315 = vmatprep.subr.mxu0 0.0
      %2316 = vmatpush1.xpose.msra.mxu0 0.0
      %2317 = vmatprep.subr.mxu0 0.0
      %2318 = vmatpush1.xpose.msra.mxu0 0.0
      %2319 = vmatprep.subr.mxu0 0.0
      %2320 = vmatpush1.xpose.msra.mxu0 0.0
      %2321 = vmatprep.subr.mxu0 0.0
      %2322 = vmatpush1.xpose.msra.mxu0 0.0
      %2323 = vmatprep.subr.mxu0 0.0
      %2324 = vmatpush1.xpose.msra.mxu0 0.0
      %2325 = vmatprep.subr.mxu0 0.0
      %2326 = vmatpush1.xpose.msra.mxu0 0.0
      %2327 = vmatprep.subr.mxu0 0.0
      %2328 = vmatpush1.xpose.msra.mxu0 0.0
      %2329 = vmatprep.subr.mxu0 0.0
      %2330 = vmatpush1.xpose.msra.mxu0 0.0
      %2331 = vmatprep.subr.mxu0 0.0
      %2332 = vmatpush1.xpose.msra.mxu0 0.0
      %2333 = vmatprep.subr.mxu0 0.0
      %2334 = vmatpush1.xpose.msra.mxu0 0.0
      %2335 = vmatprep.subr.mxu0 0.0
      %2336 = vmatpush1.xpose.msra.mxu0 0.0
      %2337 = vmatprep.subr.mxu0 0.0
      %2338 = vmatpush1.xpose.msra.mxu0 0.0
      %2339 = vmatprep.mubr.f32.mxu0 0.0
      %2340 = vmatmul.mubr.f32.gmra.mrb[0].mxu0 %v2267
      %v2341 = vpop.f32.mrb[0].mxu0
      %v2342 = vadd.f32 0.0, %v2341
      %v2343 = vpop.f32.mrb[0].mxu0
      %2344 = vdwg.mxu0
      %v2346 = vsel %vm1791, %v882, 0
      %v2349 = vsel %vm1791, %v1266, 0
      %v2352 = vsel %vm1791, %v1334, 0
      %2354 = vmatprep.subr.mxu0 0.0
      %2355 = vmatpush1.xpose.msra.mxu0 %v2349
      %2356 = vmatprep.subr.mxu0 0.0
      %2357 = vmatpush1.xpose.msra.mxu0 %v2352
      %2358 = vmatprep.subr.mxu0 0.0
      %2359 = vmatpush1.xpose.msra.mxu0 0.0
      %2360 = vmatprep.subr.mxu0 0.0
      %2361 = vmatpush1.xpose.msra.mxu0 0.0
      %2362 = vmatprep.subr.mxu0 0.0
      %2363 = vmatpush1.xpose.msra.mxu0 0.0
      %2364 = vmatprep.subr.mxu0 0.0
      %2365 = vmatpush1.xpose.msra.mxu0 0.0
      %2366 = vmatprep.subr.mxu0 0.0
      %2367 = vmatpush1.xpose.msra.mxu0 0.0
      %2368 = vmatprep.subr.mxu0 0.0
      %2369 = vmatpush1.xpose.msra.mxu0 0.0
      %2370 = vmatprep.subr.mxu0 0.0
      %2371 = vmatpush1.xpose.msra.mxu0 0.0
      %2372 = vmatprep.subr.mxu0 0.0
      %2373 = vmatpush1.xpose.msra.mxu0 0.0
      %2374 = vmatprep.subr.mxu0 0.0
      %2375 = vmatpush1.xpose.msra.mxu0 0.0
      %2376 = vmatprep.subr.mxu0 0.0
      %2377 = vmatpush1.xpose.msra.mxu0 0.0
      %2378 = vmatprep.subr.mxu0 0.0
      %2379 = vmatpush1.xpose.msra.mxu0 0.0
      %2380 = vmatprep.subr.mxu0 0.0
      %2381 = vmatpush1.xpose.msra.mxu0 0.0
      %2382 = vmatprep.subr.mxu0 0.0
      %2383 = vmatpush1.xpose.msra.mxu0 0.0
      %2384 = vmatprep.subr.mxu0 0.0
      %2385 = vmatpush1.xpose.msra.mxu0 0.0
      %2386 = vmatprep.subr.mxu0 0.0
      %2387 = vmatpush1.xpose.msra.mxu0 0.0
      %2388 = vmatprep.subr.mxu0 0.0
      %2389 = vmatpush1.xpose.msra.mxu0 0.0
      %2390 = vmatprep.subr.mxu0 0.0
      %2391 = vmatpush1.xpose.msra.mxu0 0.0
      %2392 = vmatprep.subr.mxu0 0.0
      %2393 = vmatpush1.xpose.msra.mxu0 0.0
      %2394 = vmatprep.subr.mxu0 0.0
      %2395 = vmatpush1.xpose.msra.mxu0 0.0
      %2396 = vmatprep.subr.mxu0 0.0
      %2397 = vmatpush1.xpose.msra.mxu0 0.0
      %2398 = vmatprep.subr.mxu0 0.0
      %2399 = vmatpush1.xpose.msra.mxu0 0.0
      %2400 = vmatprep.subr.mxu0 0.0
      %2401 = vmatpush1.xpose.msra.mxu0 0.0
      %2402 = vmatprep.subr.mxu0 0.0
      %2403 = vmatpush1.xpose.msra.mxu0 0.0
      %2404 = vmatprep.subr.mxu0 0.0
      %2405 = vmatpush1.xpose.msra.mxu0 0.0
      %2406 = vmatprep.subr.mxu0 0.0
      %2407 = vmatpush1.xpose.msra.mxu0 0.0
      %2408 = vmatprep.subr.mxu0 0.0
      %2409 = vmatpush1.xpose.msra.mxu0 0.0
      %2410 = vmatprep.subr.mxu0 0.0
      %2411 = vmatpush1.xpose.msra.mxu0 0.0
      %2412 = vmatprep.subr.mxu0 0.0
      %2413 = vmatpush1.xpose.msra.mxu0 0.0
      %2414 = vmatprep.subr.mxu0 0.0
      %2415 = vmatpush1.xpose.msra.mxu0 0.0
      %2416 = vmatprep.subr.mxu0 0.0
      %2417 = vmatpush1.xpose.msra.mxu0 0.0
      %2418 = vmatprep.mubr.f32.mxu0 0.0
      %2419 = vmatmul.mubr.f32.gmra.mrb[0].mxu0 %v2346
      %v2420 = vpop.f32.mrb[0].mxu0
      %v2421 = vadd.f32 0.0, %v2420
      %v2422 = vpop.f32.mrb[0].mxu0
      %2423 = vdwg.mxu0
      %vm2424 = vcmask 97280
      %v2425 = vsel %vm2424, %v1868, -inf
      %2426 = vmax.xlane.f32.xlu0 %v2425
      %v2427 = vpop.xlane.xlu0 %2426
      %v2428 = vsel %vm2424, %v1947, -inf
      %2429 = vmax.xlane.f32.xlu0 %v2428
      %v2430 = vpop.xlane.xlu0 %2429
      %v2431 = vsel %vm2424, %v2026, -inf
      %2432 = vmax.xlane.f32.xlu0 %v2431
      %v2433 = vpop.xlane.xlu0 %2432
      %v2434 = vsel %vm2424, %v2105, -inf
      %2435 = vmax.xlane.f32.xlu0 %v2434
      %v2436 = vpop.xlane.xlu0 %2435
      %v2437 = vsel %vm2424, %v2184, -inf
      %2438 = vmax.xlane.f32.xlu0 %v2437
      %v2439 = vpop.xlane.xlu0 %2438
      %v2440 = vsel %vm2424, %v2263, -inf
      %2441 = vmax.xlane.f32.xlu0 %v2440
      %v2442 = vpop.xlane.xlu0 %2441
      %v2443 = vsel %vm2424, %v2342, -inf
      %2444 = vmax.xlane.f32.xlu0 %v2443
      %v2445 = vpop.xlane.xlu0 %2444
      %v2446 = vsel %vm2424, %v2421, -inf
      %2447 = vmax.xlane.f32.xlu0 %v2446
      %v2448 = vpop.xlane.xlu0 %2447
      %v2449 = vsub.f32 %v1868, %v2427
      %v2450 = vsub.f32 %v1947, %v2430
      %v2451 = vsub.f32 %v2026, %v2433
      %v2452 = vsub.f32 %v2105, %v2436
      %v2453 = vsub.f32 %v2184, %v2439
      %v2454 = vsub.f32 %v2263, %v2442
      %v2455 = vsub.f32 %v2342, %v2445
      %v2456 = vsub.f32 %v2421, %v2448
      %v2457 = vmul.f32 %v2449, 1.442695
      %v2458 = vpow.pop %v2457
      %v2459 = vmul.f32 %v2450, 1.442695
      %v2460 = vpow.pop %v2459
      %v2461 = vmul.f32 %v2451, 1.442695
      %v2462 = vpow.pop %v2461
      %v2463 = vmul.f32 %v2452, 1.442695
      %v2464 = vpow.pop %v2463
      %v2465 = vmul.f32 %v2453, 1.442695
      %v2466 = vpow.pop %v2465
      %v2467 = vmul.f32 %v2454, 1.442695
      %v2468 = vpow.pop %v2467
      %v2469 = vmul.f32 %v2455, 1.442695
      %v2470 = vpow.pop %v2469
      %v2471 = vmul.f32 %v2456, 1.442695
      %v2472 = vpow.pop %v2471
      %v2473 = vsel %vm2424, %v2458, 0.0
      %2474 = vadd.xlane.f32.xlu0 %v2473
      %v2475 = vpop.xlane.xlu0 %2474
      %v2476 = vsel %vm2424, %v2460, 0.0
      %2477 = vadd.xlane.f32.xlu0 %v2476
      %v2478 = vpop.xlane.xlu0 %2477
      %v2479 = vsel %vm2424, %v2462, 0.0
      %2480 = vadd.xlane.f32.xlu0 %v2479
      %v2481 = vpop.xlane.xlu0 %2480
      %v2482 = vsel %vm2424, %v2464, 0.0
      %2483 = vadd.xlane.f32.xlu0 %v2482
      %v2484 = vpop.xlane.xlu0 %2483
      %v2485 = vsel %vm2424, %v2466, 0.0
      %2486 = vadd.xlane.f32.xlu0 %v2485
      %v2487 = vpop.xlane.xlu0 %2486
      %v2488 = vsel %vm2424, %v2468, 0.0
      %2489 = vadd.xlane.f32.xlu0 %v2488
      %v2490 = vpop.xlane.xlu0 %2489
      %v2491 = vsel %vm2424, %v2470, 0.0
      %2492 = vadd.xlane.f32.xlu0 %v2491
      %v2493 = vpop.xlane.xlu0 %2492
      %v2494 = vsel %vm2424, %v2472, 0.0
      %2495 = vadd.xlane.f32.xlu0 %v2494
      %v2496 = vpop.xlane.xlu0 %2495
      %v2497 = vrcp.pop %v2475
      %v2498 = vrcp.pop %v2478
      %v2499 = vrcp.pop %v2481
      %v2500 = vrcp.pop %v2484
      %v2501 = vrcp.pop %v2487
      %v2502 = vrcp.pop %v2490
      %v2503 = vrcp.pop %v2493
      %v2504 = vrcp.pop %v2496
      %v2505 = vmul.f32 %v2458, %v2497
      %v2506 = vmul.f32 %v2460, %v2498
      %v2507 = vmul.f32 %v2462, %v2499
      %v2508 = vmul.f32 %v2464, %v2500
      %v2509 = vmul.f32 %v2466, %v2501
      %v2510 = vmul.f32 %v2468, %v2502
      %v2511 = vmul.f32 %v2470, %v2503
      %v2512 = vmul.f32 %v2472, %v2504
      %v2514 = vsel %vm2424, %v2505, 0
      %vm2516 = vcmask 1043456
      %v2518 = vsel %vm2516, %v1763, 0
      %2520 = vmatprep.subr.mxu0 0.0
      %2521 = vmatpush1.msra.mxu0 %v1715
      %2522 = vmatprep.subr.mxu0 0.0
      %2523 = vmatpush1.msra.mxu0 %v2518
      %2524 = vmatprep.subr.mxu0 0.0
      %2525 = vmatpush1.msra.mxu0 0.0
      %2526 = vmatprep.subr.mxu0 0.0
      %2527 = vmatpush1.msra.mxu0 0.0
      %2528 = vmatprep.subr.mxu0 0.0
      %2529 = vmatpush1.msra.mxu0 0.0
      %2530 = vmatprep.subr.mxu0 0.0
      %2531 = vmatpush1.msra.mxu0 0.0
      %2532 = vmatprep.subr.mxu0 0.0
      %2533 = vmatpush1.msra.mxu0 0.0
      %2534 = vmatprep.subr.mxu0 0.0
      %2535 = vmatpush1.msra.mxu0 0.0
      %2536 = vmatprep.subr.mxu0 0.0
      %2537 = vmatpush1.msra.mxu0 0.0
      %2538 = vmatprep.subr.mxu0 0.0
      %2539 = vmatpush1.msra.mxu0 0.0
      %2540 = vmatprep.subr.mxu0 0.0
      %2541 = vmatpush1.msra.mxu0 0.0
      %2542 = vmatprep.subr.mxu0 0.0
      %2543 = vmatpush1.msra.mxu0 0.0
      %2544 = vmatprep.subr.mxu0 0.0
      %2545 = vmatpush1.msra.mxu0 0.0
      %2546 = vmatprep.subr.mxu0 0.0
      %2547 = vmatpush1.msra.mxu0 0.0
      %2548 = vmatprep.subr.mxu0 0.0
      %2549 = vmatpush1.msra.mxu0 0.0
      %2550 = vmatprep.subr.mxu0 0.0
      %2551 = vmatpush1.msra.mxu0 0.0
      %2552 = vmatprep.subr.mxu0 0.0
      %2553 = vmatpush1.msra.mxu0 0.0
      %2554 = vmatprep.subr.mxu0 0.0
      %2555 = vmatpush1.msra.mxu0 0.0
      %2556 = vmatprep.subr.mxu0 0.0
      %2557 = vmatpush1.msra.mxu0 0.0
      %2558 = vmatprep.subr.mxu0 0.0
      %2559 = vmatpush1.msra.mxu0 0.0
      %2560 = vmatprep.subr.mxu0 0.0
      %2561 = vmatpush1.msra.mxu0 0.0
      %2562 = vmatprep.subr.mxu0 0.0
      %2563 = vmatpush1.msra.mxu0 0.0
      %2564 = vmatprep.subr.mxu0 0.0
      %2565 = vmatpush1.msra.mxu0 0.0
      %2566 = vmatprep.subr.mxu0 0.0
      %2567 = vmatpush1.msra.mxu0 0.0
      %2568 = vmatprep.subr.mxu0 0.0
      %2569 = vmatpush1.msra.mxu0 0.0
      %2570 = vmatprep.subr.mxu0 0.0
      %2571 = vmatpush1.msra.mxu0 0.0
      %2572 = vmatprep.subr.mxu0 0.0
      %2573 = vmatpush1.msra.mxu0 0.0
      %2574 = vmatprep.subr.mxu0 0.0
      %2575 = vmatpush1.msra.mxu0 0.0
      %2576 = vmatprep.subr.mxu0 0.0
      %2577 = vmatpush1.msra.mxu0 0.0
      %2578 = vmatprep.subr.mxu0 0.0
      %2579 = vmatpush1.msra.mxu0 0.0
      %2580 = vmatprep.subr.mxu0 0.0
      %2581 = vmatpush1.msra.mxu0 0.0
      %2582 = vmatprep.subr.mxu0 0.0
      %2583 = vmatpush1.msra.mxu0 0.0
      %2584 = vmatprep.mubr.f32.mxu0 0.0
      %2585 = vmatmul.mubr.f32.gmra.mrb[0].mxu0 %v2514
      %v2586 = vpop.f32.mrb[0].mxu0
      %v2587 = vadd.f32 0.0, %v2586
      %v2588 = vpop.f32.mrb[0].mxu0
      %2589 = vdwg.mxu0
      %v2591 = vsel %vm2424, %v2506, 0
      %v2594 = vsel %vm2516, %v1787, 0
      %2596 = vmatprep.subr.mxu0 0.0
      %2597 = vmatpush1.msra.mxu0 %v1716
      %2598 = vmatprep.subr.mxu0 0.0
      %2599 = vmatpush1.msra.mxu0 %v2594
      %2600 = vmatprep.subr.mxu0 0.0
      %2601 = vmatpush1.msra.mxu0 0.0
      %2602 = vmatprep.subr.mxu0 0.0
      %2603 = vmatpush1.msra.mxu0 0.0
      %2604 = vmatprep.subr.mxu0 0.0
      %2605 = vmatpush1.msra.mxu0 0.0
      %2606 = vmatprep.subr.mxu0 0.0
      %2607 = vmatpush1.msra.mxu0 0.0
      %2608 = vmatprep.subr.mxu0 0.0
      %2609 = vmatpush1.msra.mxu0 0.0
      %2610 = vmatprep.subr.mxu0 0.0
      %2611 = vmatpush1.msra.mxu0 0.0
      %2612 = vmatprep.subr.mxu0 0.0
      %2613 = vmatpush1.msra.mxu0 0.0
      %2614 = vmatprep.subr.mxu0 0.0
      %2615 = vmatpush1.msra.mxu0 0.0
      %2616 = vmatprep.subr.mxu0 0.0
      %2617 = vmatpush1.msra.mxu0 0.0
      %2618 = vmatprep.subr.mxu0 0.0
      %2619 = vmatpush1.msra.mxu0 0.0
      %2620 = vmatprep.subr.mxu0 0.0
      %2621 = vmatpush1.msra.mxu0 0.0
      %2622 = vmatprep.subr.mxu0 0.0
      %2623 = vmatpush1.msra.mxu0 0.0
      %2624 = vmatprep.subr.mxu0 0.0
      %2625 = vmatpush1.msra.mxu0 0.0
      %2626 = vmatprep.subr.mxu0 0.0
      %2627 = vmatpush1.msra.mxu0 0.0
      %2628 = vmatprep.subr.mxu0 0.0
      %2629 = vmatpush1.msra.mxu0 0.0
      %2630 = vmatprep.subr.mxu0 0.0
      %2631 = vmatpush1.msra.mxu0 0.0
      %2632 = vmatprep.subr.mxu0 0.0
      %2633 = vmatpush1.msra.mxu0 0.0
      %2634 = vmatprep.subr.mxu0 0.0
      %2635 = vmatpush1.msra.mxu0 0.0
      %2636 = vmatprep.subr.mxu0 0.0
      %2637 = vmatpush1.msra.mxu0 0.0
      %2638 = vmatprep.subr.mxu0 0.0
      %2639 = vmatpush1.msra.mxu0 0.0
      %2640 = vmatprep.subr.mxu0 0.0
      %2641 = vmatpush1.msra.mxu0 0.0
      %2642 = vmatprep.subr.mxu0 0.0
      %2643 = vmatpush1.msra.mxu0 0.0
      %2644 = vmatprep.subr.mxu0 0.0
      %2645 = vmatpush1.msra.mxu0 0.0
      %2646 = vmatprep.subr.mxu0 0.0
      %2647 = vmatpush1.msra.mxu0 0.0
      %2648 = vmatprep.subr.mxu0 0.0
      %2649 = vmatpush1.msra.mxu0 0.0
      %2650 = vmatprep.subr.mxu0 0.0
      %2651 = vmatpush1.msra.mxu0 0.0
      %2652 = vmatprep.subr.mxu0 0.0
      %2653 = vmatpush1.msra.mxu0 0.0
      %2654 = vmatprep.subr.mxu0 0.0
      %2655 = vmatpush1.msra.mxu0 0.0
      %2656 = vmatprep.subr.mxu0 0.0
      %2657 = vmatpush1.msra.mxu0 0.0
      %2658 = vmatprep.subr.mxu0 0.0
      %2659 = vmatpush1.msra.mxu0 0.0
      %2660 = vmatprep.mubr.f32.mxu0 0.0
      %2661 = vmatmul.mubr.f32.gmra.mrb[0].mxu0 %v2591
      %v2662 = vpop.f32.mrb[0].mxu0
      %v2663 = vadd.f32 0.0, %v2662
      %v2664 = vpop.f32.mrb[0].mxu0
      %2665 = vdwg.mxu0
      %v2667 = vsel %vm2424, %v2507, 0
      %v2670 = vsel %vm2516, %v1770, 0
      %2672 = vmatprep.subr.mxu0 0.0
      %2673 = vmatpush1.msra.mxu0 %v1717
      %2674 = vmatprep.subr.mxu0 0.0
      %2675 = vmatpush1.msra.mxu0 %v2670
      %2676 = vmatprep.subr.mxu0 0.0
      %2677 = vmatpush1.msra.mxu0 0.0
      %2678 = vmatprep.subr.mxu0 0.0
      %2679 = vmatpush1.msra.mxu0 0.0
      %2680 = vmatprep.subr.mxu0 0.0
      %2681 = vmatpush1.msra.mxu0 0.0
      %2682 = vmatprep.subr.mxu0 0.0
      %2683 = vmatpush1.msra.mxu0 0.0
      %2684 = vmatprep.subr.mxu0 0.0
      %2685 = vmatpush1.msra.mxu0 0.0
      %2686 = vmatprep.subr.mxu0 0.0
      %2687 = vmatpush1.msra.mxu0 0.0
      %2688 = vmatprep.subr.mxu0 0.0
      %2689 = vmatpush1.msra.mxu0 0.0
      %2690 = vmatprep.subr.mxu0 0.0
      %2691 = vmatpush1.msra.mxu0 0.0
      %2692 = vmatprep.subr.mxu0 0.0
      %2693 = vmatpush1.msra.mxu0 0.0
      %2694 = vmatprep.subr.mxu0 0.0
      %2695 = vmatpush1.msra.mxu0 0.0
      %2696 = vmatprep.subr.mxu0 0.0
      %2697 = vmatpush1.msra.mxu0 0.0
      %2698 = vmatprep.subr.mxu0 0.0
      %2699 = vmatpush1.msra.mxu0 0.0
      %2700 = vmatprep.subr.mxu0 0.0
      %2701 = vmatpush1.msra.mxu0 0.0
      %2702 = vmatprep.subr.mxu0 0.0
      %2703 = vmatpush1.msra.mxu0 0.0
      %2704 = vmatprep.subr.mxu0 0.0
      %2705 = vmatpush1.msra.mxu0 0.0
      %2706 = vmatprep.subr.mxu0 0.0
      %2707 = vmatpush1.msra.mxu0 0.0
      %2708 = vmatprep.subr.mxu0 0.0
      %2709 = vmatpush1.msra.mxu0 0.0
      %2710 = vmatprep.subr.mxu0 0.0
      %2711 = vmatpush1.msra.mxu0 0.0
      %2712 = vmatprep.subr.mxu0 0.0
      %2713 = vmatpush1.msra.mxu0 0.0
      %2714 = vmatprep.subr.mxu0 0.0
      %2715 = vmatpush1.msra.mxu0 0.0
      %2716 = vmatprep.subr.mxu0 0.0
      %2717 = vmatpush1.msra.mxu0 0.0
      %2718 = vmatprep.subr.mxu0 0.0
      %2719 = vmatpush1.msra.mxu0 0.0
      %2720 = vmatprep.subr.mxu0 0.0
      %2721 = vmatpush1.msra.mxu0 0.0
      %2722 = vmatprep.subr.mxu0 0.0
      %2723 = vmatpush1.msra.mxu0 0.0
      %2724 = vmatprep.subr.mxu0 0.0
      %2725 = vmatpush1.msra.mxu0 0.0
      %2726 = vmatprep.subr.mxu0 0.0
      %2727 = vmatpush1.msra.mxu0 0.0
      %2728 = vmatprep.subr.mxu0 0.0
      %2729 = vmatpush1.msra.mxu0 0.0
      %2730 = vmatprep.subr.mxu0 0.0
      %2731 = vmatpush1.msra.mxu0 0.0
      %2732 = vmatprep.subr.mxu0 0.0
      %2733 = vmatpush1.msra.mxu0 0.0
      %2734 = vmatprep.subr.mxu0 0.0
      %2735 = vmatpush1.msra.mxu0 0.0
      %2736 = vmatprep.mubr.f32.mxu0 0.0
      %2737 = vmatmul.mubr.f32.gmra.mrb[0].mxu0 %v2667
      %v2738 = vpop.f32.mrb[0].mxu0
      %v2739 = vadd.f32 0.0, %v2738
      %v2740 = vpop.f32.mrb[0].mxu0
      %2741 = vdwg.mxu0
      %v2743 = vsel %vm2424, %v2508, 0
      %v2746 = vsel %vm2516, %v1788, 0
      %2748 = vmatprep.subr.mxu0 0.0
      %2749 = vmatpush1.msra.mxu0 %v1718
      %2750 = vmatprep.subr.mxu0 0.0
      %2751 = vmatpush1.msra.mxu0 %v2746
      %2752 = vmatprep.subr.mxu0 0.0
      %2753 = vmatpush1.msra.mxu0 0.0
      %2754 = vmatprep.subr.mxu0 0.0
      %2755 = vmatpush1.msra.mxu0 0.0
      %2756 = vmatprep.subr.mxu0 0.0
      %2757 = vmatpush1.msra.mxu0 0.0
      %2758 = vmatprep.subr.mxu0 0.0
      %2759 = vmatpush1.msra.mxu0 0.0
      %2760 = vmatprep.subr.mxu0 0.0
      %2761 = vmatpush1.msra.mxu0 0.0
      %2762 = vmatprep.subr.mxu0 0.0
      %2763 = vmatpush1.msra.mxu0 0.0
      %2764 = vmatprep.subr.mxu0 0.0
      %2765 = vmatpush1.msra.mxu0 0.0
      %2766 = vmatprep.subr.mxu0 0.0
      %2767 = vmatpush1.msra.mxu0 0.0
      %2768 = vmatprep.subr.mxu0 0.0
      %2769 = vmatpush1.msra.mxu0 0.0
      %2770 = vmatprep.subr.mxu0 0.0
      %2771 = vmatpush1.msra.mxu0 0.0
      %2772 = vmatprep.subr.mxu0 0.0
      %2773 = vmatpush1.msra.mxu0 0.0
      %2774 = vmatprep.subr.mxu0 0.0
      %2775 = vmatpush1.msra.mxu0 0.0
      %2776 = vmatprep.subr.mxu0 0.0
      %2777 = vmatpush1.msra.mxu0 0.0
      %2778 = vmatprep.subr.mxu0 0.0
      %2779 = vmatpush1.msra.mxu0 0.0
      %2780 = vmatprep.subr.mxu0 0.0
      %2781 = vmatpush1.msra.mxu0 0.0
      %2782 = vmatprep.subr.mxu0 0.0
      %2783 = vmatpush1.msra.mxu0 0.0
      %2784 = vmatprep.subr.mxu0 0.0
      %2785 = vmatpush1.msra.mxu0 0.0
      %2786 = vmatprep.subr.mxu0 0.0
      %2787 = vmatpush1.msra.mxu0 0.0
      %2788 = vmatprep.subr.mxu0 0.0
      %2789 = vmatpush1.msra.mxu0 0.0
      %2790 = vmatprep.subr.mxu0 0.0
      %2791 = vmatpush1.msra.mxu0 0.0
      %2792 = vmatprep.subr.mxu0 0.0
      %2793 = vmatpush1.msra.mxu0 0.0
      %2794 = vmatprep.subr.mxu0 0.0
      %2795 = vmatpush1.msra.mxu0 0.0
      %2796 = vmatprep.subr.mxu0 0.0
      %2797 = vmatpush1.msra.mxu0 0.0
      %2798 = vmatprep.subr.mxu0 0.0
      %2799 = vmatpush1.msra.mxu0 0.0
      %2800 = vmatprep.subr.mxu0 0.0
      %2801 = vmatpush1.msra.mxu0 0.0
      %2802 = vmatprep.subr.mxu0 0.0
      %2803 = vmatpush1.msra.mxu0 0.0
      %2804 = vmatprep.subr.mxu0 0.0
      %2805 = vmatpush1.msra.mxu0 0.0
      %2806 = vmatprep.subr.mxu0 0.0
      %2807 = vmatpush1.msra.mxu0 0.0
      %2808 = vmatprep.subr.mxu0 0.0
      %2809 = vmatpush1.msra.mxu0 0.0
      %2810 = vmatprep.subr.mxu0 0.0
      %2811 = vmatpush1.msra.mxu0 0.0
      %2812 = vmatprep.mubr.f32.mxu0 0.0
      %2813 = vmatmul.mubr.f32.gmra.mrb[0].mxu0 %v2743
      %v2814 = vpop.f32.mrb[0].mxu0
      %v2815 = vadd.f32 0.0, %v2814
      %v2816 = vpop.f32.mrb[0].mxu0
      %2817 = vdwg.mxu0
      %v2819 = vsel %vm2424, %v2509, 0
      %v2822 = vsel %vm2516, %v1779, 0
      %2824 = vmatprep.subr.mxu0 0.0
      %2825 = vmatpush1.msra.mxu0 %v1719
      %2826 = vmatprep.subr.mxu0 0.0
      %2827 = vmatpush1.msra.mxu0 %v2822
      %2828 = vmatprep.subr.mxu0 0.0
      %2829 = vmatpush1.msra.mxu0 0.0
      %2830 = vmatprep.subr.mxu0 0.0
      %2831 = vmatpush1.msra.mxu0 0.0
      %2832 = vmatprep.subr.mxu0 0.0
      %2833 = vmatpush1.msra.mxu0 0.0
      %2834 = vmatprep.subr.mxu0 0.0
      %2835 = vmatpush1.msra.mxu0 0.0
      %2836 = vmatprep.subr.mxu0 0.0
      %2837 = vmatpush1.msra.mxu0 0.0
      %2838 = vmatprep.subr.mxu0 0.0
      %2839 = vmatpush1.msra.mxu0 0.0
      %2840 = vmatprep.subr.mxu0 0.0
      %2841 = vmatpush1.msra.mxu0 0.0
      %2842 = vmatprep.subr.mxu0 0.0
      %2843 = vmatpush1.msra.mxu0 0.0
      %2844 = vmatprep.subr.mxu0 0.0
      %2845 = vmatpush1.msra.mxu0 0.0
      %2846 = vmatprep.subr.mxu0 0.0
      %2847 = vmatpush1.msra.mxu0 0.0
      %2848 = vmatprep.subr.mxu0 0.0
      %2849 = vmatpush1.msra.mxu0 0.0
      %2850 = vmatprep.subr.mxu0 0.0
      %2851 = vmatpush1.msra.mxu0 0.0
      %2852 = vmatprep.subr.mxu0 0.0
      %2853 = vmatpush1.msra.mxu0 0.0
      %2854 = vmatprep.subr.mxu0 0.0
      %2855 = vmatpush1.msra.mxu0 0.0
      %2856 = vmatprep.subr.mxu0 0.0
      %2857 = vmatpush1.msra.mxu0 0.0
      %2858 = vmatprep.subr.mxu0 0.0
      %2859 = vmatpush1.msra.mxu0 0.0
      %2860 = vmatprep.subr.mxu0 0.0
      %2861 = vmatpush1.msra.mxu0 0.0
      %2862 = vmatprep.subr.mxu0 0.0
      %2863 = vmatpush1.msra.mxu0 0.0
      %2864 = vmatprep.subr.mxu0 0.0
      %2865 = vmatpush1.msra.mxu0 0.0
      %2866 = vmatprep.subr.mxu0 0.0
      %2867 = vmatpush1.msra.mxu0 0.0
      %2868 = vmatprep.subr.mxu0 0.0
      %2869 = vmatpush1.msra.mxu0 0.0
      %2870 = vmatprep.subr.mxu0 0.0
      %2871 = vmatpush1.msra.mxu0 0.0
      %2872 = vmatprep.subr.mxu0 0.0
      %2873 = vmatpush1.msra.mxu0 0.0
      %2874 = vmatprep.subr.mxu0 0.0
      %2875 = vmatpush1.msra.mxu0 0.0
      %2876 = vmatprep.subr.mxu0 0.0
      %2877 = vmatpush1.msra.mxu0 0.0
      %2878 = vmatprep.subr.mxu0 0.0
      %2879 = vmatpush1.msra.mxu0 0.0
      %2880 = vmatprep.subr.mxu0 0.0
      %2881 = vmatpush1.msra.mxu0 0.0
      %2882 = vmatprep.subr.mxu0 0.0
      %2883 = vmatpush1.msra.mxu0 0.0
      %2884 = vmatprep.subr.mxu0 0.0
      %2885 = vmatpush1.msra.mxu0 0.0
      %2886 = vmatprep.subr.mxu0 0.0
      %2887 = vmatpush1.msra.mxu0 0.0
      %2888 = vmatprep.mubr.f32.mxu0 0.0
      %2889 = vmatmul.mubr.f32.gmra.mrb[0].mxu0 %v2819
      %v2890 = vpop.f32.mrb[0].mxu0
      %v2891 = vadd.f32 0.0, %v2890
      %v2892 = vpop.f32.mrb[0].mxu0
      %2893 = vdwg.mxu0
      %v2895 = vsel %vm2424, %v2510, 0
      %v2898 = vsel %vm2516, %v1789, 0
      %2900 = vmatprep.subr.mxu0 0.0
      %2901 = vmatpush1.msra.mxu0 %v1720
      %2902 = vmatprep.subr.mxu0 0.0
      %2903 = vmatpush1.msra.mxu0 %v2898
      %2904 = vmatprep.subr.mxu0 0.0
      %2905 = vmatpush1.msra.mxu0 0.0
      %2906 = vmatprep.subr.mxu0 0.0
      %2907 = vmatpush1.msra.mxu0 0.0
      %2908 = vmatprep.subr.mxu0 0.0
      %2909 = vmatpush1.msra.mxu0 0.0
      %2910 = vmatprep.subr.mxu0 0.0
      %2911 = vmatpush1.msra.mxu0 0.0
      %2912 = vmatprep.subr.mxu0 0.0
      %2913 = vmatpush1.msra.mxu0 0.0
      %2914 = vmatprep.subr.mxu0 0.0
      %2915 = vmatpush1.msra.mxu0 0.0
      %2916 = vmatprep.subr.mxu0 0.0
      %2917 = vmatpush1.msra.mxu0 0.0
      %2918 = vmatprep.subr.mxu0 0.0
      %2919 = vmatpush1.msra.mxu0 0.0
      %2920 = vmatprep.subr.mxu0 0.0
      %2921 = vmatpush1.msra.mxu0 0.0
      %2922 = vmatprep.subr.mxu0 0.0
      %2923 = vmatpush1.msra.mxu0 0.0
      %2924 = vmatprep.subr.mxu0 0.0
      %2925 = vmatpush1.msra.mxu0 0.0
      %2926 = vmatprep.subr.mxu0 0.0
      %2927 = vmatpush1.msra.mxu0 0.0
      %2928 = vmatprep.subr.mxu0 0.0
      %2929 = vmatpush1.msra.mxu0 0.0
      %2930 = vmatprep.subr.mxu0 0.0
      %2931 = vmatpush1.msra.mxu0 0.0
      %2932 = vmatprep.subr.mxu0 0.0
      %2933 = vmatpush1.msra.mxu0 0.0
      %2934 = vmatprep.subr.mxu0 0.0
      %2935 = vmatpush1.msra.mxu0 0.0
      %2936 = vmatprep.subr.mxu0 0.0
      %2937 = vmatpush1.msra.mxu0 0.0
      %2938 = vmatprep.subr.mxu0 0.0
      %2939 = vmatpush1.msra.mxu0 0.0
      %2940 = vmatprep.subr.mxu0 0.0
      %2941 = vmatpush1.msra.mxu0 0.0
      %2942 = vmatprep.subr.mxu0 0.0
      %2943 = vmatpush1.msra.mxu0 0.0
      %2944 = vmatprep.subr.mxu0 0.0
      %2945 = vmatpush1.msra.mxu0 0.0
      %2946 = vmatprep.subr.mxu0 0.0
      %2947 = vmatpush1.msra.mxu0 0.0
      %2948 = vmatprep.subr.mxu0 0.0
      %2949 = vmatpush1.msra.mxu0 0.0
      %2950 = vmatprep.subr.mxu0 0.0
      %2951 = vmatpush1.msra.mxu0 0.0
      %2952 = vmatprep.subr.mxu0 0.0
      %2953 = vmatpush1.msra.mxu0 0.0
      %2954 = vmatprep.subr.mxu0 0.0
      %2955 = vmatpush1.msra.mxu0 0.0
      %2956 = vmatprep.subr.mxu0 0.0
      %2957 = vmatpush1.msra.mxu0 0.0
      %2958 = vmatprep.subr.mxu0 0.0
      %2959 = vmatpush1.msra.mxu0 0.0
      %2960 = vmatprep.subr.mxu0 0.0
      %2961 = vmatpush1.msra.mxu0 0.0
      %2962 = vmatprep.subr.mxu0 0.0
      %2963 = vmatpush1.msra.mxu0 0.0
      %2964 = vmatprep.mubr.f32.mxu0 0.0
      %2965 = vmatmul.mubr.f32.gmra.mrb[0].mxu0 %v2895
      %v2966 = vpop.f32.mrb[0].mxu0
      %v2967 = vadd.f32 0.0, %v2966
      %v2968 = vpop.f32.mrb[0].mxu0
      %2969 = vdwg.mxu0
      %v2971 = vsel %vm2424, %v2511, 0
      %v2974 = vsel %vm2516, %v1786, 0
      %2976 = vmatprep.subr.mxu0 0.0
      %2977 = vmatpush1.msra.mxu0 %v1721
      %2978 = vmatprep.subr.mxu0 0.0
      %2979 = vmatpush1.msra.mxu0 %v2974
      %2980 = vmatprep.subr.mxu0 0.0
      %2981 = vmatpush1.msra.mxu0 0.0
      %2982 = vmatprep.subr.mxu0 0.0
      %2983 = vmatpush1.msra.mxu0 0.0
      %2984 = vmatprep.subr.mxu0 0.0
      %2985 = vmatpush1.msra.mxu0 0.0
      %2986 = vmatprep.subr.mxu0 0.0
      %2987 = vmatpush1.msra.mxu0 0.0
      %2988 = vmatprep.subr.mxu0 0.0
      %2989 = vmatpush1.msra.mxu0 0.0
      %2990 = vmatprep.subr.mxu0 0.0
      %2991 = vmatpush1.msra.mxu0 0.0
      %2992 = vmatprep.subr.mxu0 0.0
      %2993 = vmatpush1.msra.mxu0 0.0
      %2994 = vmatprep.subr.mxu0 0.0
      %2995 = vmatpush1.msra.mxu0 0.0
      %2996 = vmatprep.subr.mxu0 0.0
      %2997 = vmatpush1.msra.mxu0 0.0
      %2998 = vmatprep.subr.mxu0 0.0
      %2999 = vmatpush1.msra.mxu0 0.0
      %3000 = vmatprep.subr.mxu0 0.0
      %3001 = vmatpush1.msra.mxu0 0.0
      %3002 = vmatprep.subr.mxu0 0.0
      %3003 = vmatpush1.msra.mxu0 0.0
      %3004 = vmatprep.subr.mxu0 0.0
      %3005 = vmatpush1.msra.mxu0 0.0
      %3006 = vmatprep.subr.mxu0 0.0
      %3007 = vmatpush1.msra.mxu0 0.0
      %3008 = vmatprep.subr.mxu0 0.0
      %3009 = vmatpush1.msra.mxu0 0.0
      %3010 = vmatprep.subr.mxu0 0.0
      %3011 = vmatpush1.msra.mxu0 0.0
      %3012 = vmatprep.subr.mxu0 0.0
      %3013 = vmatpush1.msra.mxu0 0.0
      %3014 = vmatprep.subr.mxu0 0.0
      %3015 = vmatpush1.msra.mxu0 0.0
      %3016 = vmatprep.subr.mxu0 0.0
      %3017 = vmatpush1.msra.mxu0 0.0
      %3018 = vmatprep.subr.mxu0 0.0
      %3019 = vmatpush1.msra.mxu0 0.0
      %3020 = vmatprep.subr.mxu0 0.0
      %3021 = vmatpush1.msra.mxu0 0.0
      %3022 = vmatprep.subr.mxu0 0.0
      %3023 = vmatpush1.msra.mxu0 0.0
      %3024 = vmatprep.subr.mxu0 0.0
      %3025 = vmatpush1.msra.mxu0 0.0
      %3026 = vmatprep.subr.mxu0 0.0
      %3027 = vmatpush1.msra.mxu0 0.0
      %3028 = vmatprep.subr.mxu0 0.0
      %3029 = vmatpush1.msra.mxu0 0.0
      %3030 = vmatprep.subr.mxu0 0.0
      %3031 = vmatpush1.msra.mxu0 0.0
      %3032 = vmatprep.subr.mxu0 0.0
      %3033 = vmatpush1.msra.mxu0 0.0
      %3034 = vmatprep.subr.mxu0 0.0
      %3035 = vmatpush1.msra.mxu0 0.0
      %3036 = vmatprep.subr.mxu0 0.0
      %3037 = vmatpush1.msra.mxu0 0.0
      %3038 = vmatprep.subr.mxu0 0.0
      %3039 = vmatpush1.msra.mxu0 0.0
      %3040 = vmatprep.mubr.f32.mxu0 0.0
      %3041 = vmatmul.mubr.f32.gmra.mrb[0].mxu0 %v2971
      %v3042 = vpop.f32.mrb[0].mxu0
      %v3043 = vadd.f32 0.0, %v3042
      %v3044 = vpop.f32.mrb[0].mxu0
      %3045 = vdwg.mxu0
      %v3047 = vsel %vm2424, %v2512, 0
      %v3050 = vsel %vm2516, %v1790, 0
      %3052 = vmatprep.subr.mxu0 0.0
      %3053 = vmatpush1.msra.mxu0 %v1722
      %3054 = vmatprep.subr.mxu0 0.0
      %3055 = vmatpush1.msra.mxu0 %v3050
      %3056 = vmatprep.subr.mxu0 0.0
      %3057 = vmatpush1.msra.mxu0 0.0
      %3058 = vmatprep.subr.mxu0 0.0
      %3059 = vmatpush1.msra.mxu0 0.0
      %3060 = vmatprep.subr.mxu0 0.0
      %3061 = vmatpush1.msra.mxu0 0.0
      %3062 = vmatprep.subr.mxu0 0.0
      %3063 = vmatpush1.msra.mxu0 0.0
      %3064 = vmatprep.subr.mxu0 0.0
      %3065 = vmatpush1.msra.mxu0 0.0
      %3066 = vmatprep.subr.mxu0 0.0
      %3067 = vmatpush1.msra.mxu0 0.0
      %3068 = vmatprep.subr.mxu0 0.0
      %3069 = vmatpush1.msra.mxu0 0.0
      %3070 = vmatprep.subr.mxu0 0.0
      %3071 = vmatpush1.msra.mxu0 0.0
      %3072 = vmatprep.subr.mxu0 0.0
      %3073 = vmatpush1.msra.mxu0 0.0
      %3074 = vmatprep.subr.mxu0 0.0
      %3075 = vmatpush1.msra.mxu0 0.0
      %3076 = vmatprep.subr.mxu0 0.0
      %3077 = vmatpush1.msra.mxu0 0.0
      %3078 = vmatprep.subr.mxu0 0.0
      %3079 = vmatpush1.msra.mxu0 0.0
      %3080 = vmatprep.subr.mxu0 0.0
      %3081 = vmatpush1.msra.mxu0 0.0
      %3082 = vmatprep.subr.mxu0 0.0
      %3083 = vmatpush1.msra.mxu0 0.0
      %3084 = vmatprep.subr.mxu0 0.0
      %3085 = vmatpush1.msra.mxu0 0.0
      %3086 = vmatprep.subr.mxu0 0.0
      %3087 = vmatpush1.msra.mxu0 0.0
      %3088 = vmatprep.subr.mxu0 0.0
      %3089 = vmatpush1.msra.mxu0 0.0
      %3090 = vmatprep.subr.mxu0 0.0
      %3091 = vmatpush1.msra.mxu0 0.0
      %3092 = vmatprep.subr.mxu0 0.0
      %3093 = vmatpush1.msra.mxu0 0.0
      %3094 = vmatprep.subr.mxu0 0.0
      %3095 = vmatpush1.msra.mxu0 0.0
      %3096 = vmatprep.subr.mxu0 0.0
      %3097 = vmatpush1.msra.mxu0 0.0
      %3098 = vmatprep.subr.mxu0 0.0
      %3099 = vmatpush1.msra.mxu0 0.0
      %3100 = vmatprep.subr.mxu0 0.0
      %3101 = vmatpush1.msra.mxu0 0.0
      %3102 = vmatprep.subr.mxu0 0.0
      %3103 = vmatpush1.msra.mxu0 0.0
      %3104 = vmatprep.subr.mxu0 0.0
      %3105 = vmatpush1.msra.mxu0 0.0
      %3106 = vmatprep.subr.mxu0 0.0
      %3107 = vmatpush1.msra.mxu0 0.0
      %3108 = vmatprep.subr.mxu0 0.0
      %3109 = vmatpush1.msra.mxu0 0.0
      %3110 = vmatprep.subr.mxu0 0.0
      %3111 = vmatpush1.msra.mxu0 0.0
      %3112 = vmatprep.subr.mxu0 0.0
      %3113 = vmatpush1.msra.mxu0 0.0
      %3114 = vmatprep.subr.mxu0 0.0
      %3115 = vmatpush1.msra.mxu0 0.0
      %3116 = vmatprep.mubr.f32.mxu0 0.0
      %3117 = vmatmul.mubr.f32.gmra.mrb[0].mxu0 %v3047
      %v3118 = vpop.f32.mrb[0].mxu0
      %v3119 = vadd.f32 0.0, %v3118
      %v3120 = vpop.f32.mrb[0].mxu0
      %3121 = vdwg.mxu0
      %v3122 = vcombine.low %v2587, %v2739
      %v3123 = vcombine.high %v2587, %v2739
      %v3125 = vunpack.c.l.s4 1983009808
      %v3126 = vunpack.c.0.s8 %v3125
      %v3127 = vlaneseq
      %v3128 = vshrl.u32 %v3127, 7
      %v3129 = vsub.s32 %v3126, %v3128
      %v3130 = vrot.slane %v3122, %v3129
      %v3132 = vunpack.c.l.s4 1983009808
      %v3133 = vunpack.c.0.s8 %v3132
      %v3134 = vlaneseq
      %v3135 = vshrl.u32 %v3134, 7
      %v3136 = vsub.s32 %v3133, %v3135
      %v3137 = vrot.slane %v3123, %v3136
      %v3138 = vcombine.low %v2663, %v2815
      %v3139 = vcombine.high %v2663, %v2815
      %v3141 = vunpack.c.l.s4 1983009808
      %v3142 = vunpack.c.0.s8 %v3141
      %v3143 = vlaneseq
      %v3144 = vshrl.u32 %v3143, 7
      %v3145 = vsub.s32 %v3142, %v3144
      %v3146 = vrot.slane %v3138, %v3145
      %v3148 = vunpack.c.l.s4 1983009808
      %v3149 = vunpack.c.0.s8 %v3148
      %v3150 = vlaneseq
      %v3151 = vshrl.u32 %v3150, 7
      %v3152 = vsub.s32 %v3149, %v3151
      %v3153 = vrot.slane %v3139, %v3152
      %v3154 = vcombine.low %v2891, %v3043
      %v3155 = vcombine.high %v2891, %v3043
      %v3157 = vunpack.c.l.s4 1983009808
      %v3158 = vunpack.c.0.s8 %v3157
      %v3159 = vlaneseq
      %v3160 = vshrl.u32 %v3159, 7
      %v3161 = vsub.s32 %v3158, %v3160
      %v3162 = vrot.slane %v3154, %v3161
      %v3164 = vunpack.c.l.s4 1983009808
      %v3165 = vunpack.c.0.s8 %v3164
      %v3166 = vlaneseq
      %v3167 = vshrl.u32 %v3166, 7
      %v3168 = vsub.s32 %v3165, %v3167
      %v3169 = vrot.slane %v3155, %v3168
      %v3170 = vcombine.low %v2967, %v3119
      %v3171 = vcombine.high %v2967, %v3119
      %v3173 = vunpack.c.l.s4 1983009808
      %v3174 = vunpack.c.0.s8 %v3173
      %v3175 = vlaneseq
      %v3176 = vshrl.u32 %v3175, 7
      %v3177 = vsub.s32 %v3174, %v3176
      %v3178 = vrot.slane %v3170, %v3177
      %v3180 = vunpack.c.l.s4 1983009808
      %v3181 = vunpack.c.0.s8 %v3180
      %v3182 = vlaneseq
      %v3183 = vshrl.u32 %v3182, 7
      %v3184 = vsub.s32 %v3181, %v3183
      %v3185 = vrot.slane %v3171, %v3184
      %v3186 = vcombine.low %v3130, %v3146
      %v3187 = vcombine.high %v3130, %v3146
      %v3189 = vunpack.c.l.s4 1934713408
      %v3190 = vunpack.c.0.s8 %v3189
      %v3191 = vlaneseq
      %v3192 = vshrl.u32 %v3191, 7
      %v3193 = vsub.s32 %v3190, %v3192
      %v3194 = vrot.slane %v3186, %v3193
      %v3196 = vunpack.c.l.s4 1934713408
      %v3197 = vunpack.c.0.s8 %v3196
      %v3198 = vlaneseq
      %v3199 = vshrl.u32 %v3198, 7
      %v3200 = vsub.s32 %v3197, %v3199
      %v3201 = vrot.slane %v3187, %v3200
      %v3202 = vcombine.low %v3137, %v3153
      %v3203 = vcombine.high %v3137, %v3153
      %v3205 = vunpack.c.l.s4 1934713408
      %v3206 = vunpack.c.0.s8 %v3205
      %v3207 = vlaneseq
      %v3208 = vshrl.u32 %v3207, 7
      %v3209 = vsub.s32 %v3206, %v3208
      %v3210 = vrot.slane %v3202, %v3209
      %v3212 = vunpack.c.l.s4 1934713408
      %v3213 = vunpack.c.0.s8 %v3212
      %v3214 = vlaneseq
      %v3215 = vshrl.u32 %v3214, 7
      %v3216 = vsub.s32 %v3213, %v3215
      %v3217 = vrot.slane %v3203, %v3216
      %v3218 = vcombine.low %v3162, %v3178
      %v3219 = vcombine.high %v3162, %v3178
      %v3221 = vunpack.c.l.s4 1934713408
      %v3222 = vunpack.c.0.s8 %v3221
      %v3223 = vlaneseq
      %v3224 = vshrl.u32 %v3223, 7
      %v3225 = vsub.s32 %v3222, %v3224
      %v3226 = vrot.slane %v3218, %v3225
      %v3228 = vunpack.c.l.s4 1934713408
      %v3229 = vunpack.c.0.s8 %v3228
      %v3230 = vlaneseq
      %v3231 = vshrl.u32 %v3230, 7
      %v3232 = vsub.s32 %v3229, %v3231
      %v3233 = vrot.slane %v3219, %v3232
      %v3234 = vcombine.low %v3169, %v3185
      %v3235 = vcombine.high %v3169, %v3185
      %v3237 = vunpack.c.l.s4 1934713408
      %v3238 = vunpack.c.0.s8 %v3237
      %v3239 = vlaneseq
      %v3240 = vshrl.u32 %v3239, 7
      %v3241 = vsub.s32 %v3238, %v3240
      %v3242 = vrot.slane %v3234, %v3241
      %v3244 = vunpack.c.l.s4 1934713408
      %v3245 = vunpack.c.0.s8 %v3244
      %v3246 = vlaneseq
      %v3247 = vshrl.u32 %v3246, 7
      %v3248 = vsub.s32 %v3245, %v3247
      %v3249 = vrot.slane %v3235, %v3248
      %v3250 = vcombine.low %v3194, %v3226
      %v3251 = vcombine.high %v3194, %v3226
      %v3252 = vcombine.low %v3201, %v3233
      %v3253 = vcombine.high %v3201, %v3233
      %v3254 = vcombine.low %v3210, %v3242
      %v3255 = vcombine.high %v3210, %v3242
      %v3256 = vcombine.low %v3217, %v3249
      %v3257 = vcombine.high %v3217, %v3249
      %v3258 = vcombine.low %v3250, %v3252
      %v3259 = vcombine.high %v3250, %v3252
      %v3261 = vunpack.c.l.s4 1983009808
      %v3262 = vunpack.c.0.s8 %v3261
      %v3263 = vlaneseq
      %v3264 = vshrl.u32 %v3263, 7
      %v3265 = vsub.s32 %v3262, %v3264
      %v3266 = vrot.slane %v3258, %v3265
      %v3268 = vunpack.c.l.s4 1983009808
      %v3269 = vunpack.c.0.s8 %v3268
      %v3270 = vlaneseq
      %v3271 = vshrl.u32 %v3270, 7
      %v3272 = vsub.s32 %v3269, %v3271
      %v3273 = vrot.slane %v3259, %v3272
      %v3274 = vcombine.low %v3251, %v3253
      %v3275 = vcombine.high %v3251, %v3253
      %v3277 = vunpack.c.l.s4 1983009808
      %v3278 = vunpack.c.0.s8 %v3277
      %v3279 = vlaneseq
      %v3280 = vshrl.u32 %v3279, 7
      %v3281 = vsub.s32 %v3278, %v3280
      %v3282 = vrot.slane %v3274, %v3281
      %v3284 = vunpack.c.l.s4 1983009808
      %v3285 = vunpack.c.0.s8 %v3284
      %v3286 = vlaneseq
      %v3287 = vshrl.u32 %v3286, 7
      %v3288 = vsub.s32 %v3285, %v3287
      %v3289 = vrot.slane %v3275, %v3288
      %v3290 = vcombine.low %v3254, %v3256
      %v3291 = vcombine.high %v3254, %v3256
      %v3293 = vunpack.c.l.s4 1983009808
      %v3294 = vunpack.c.0.s8 %v3293
      %v3295 = vlaneseq
      %v3296 = vshrl.u32 %v3295, 7
      %v3297 = vsub.s32 %v3294, %v3296
      %v3298 = vrot.slane %v3290, %v3297
      %v3300 = vunpack.c.l.s4 1983009808
      %v3301 = vunpack.c.0.s8 %v3300
      %v3302 = vlaneseq
      %v3303 = vshrl.u32 %v3302, 7
      %v3304 = vsub.s32 %v3301, %v3303
      %v3305 = vrot.slane %v3291, %v3304
      %v3306 = vcombine.low %v3255, %v3257
      %v3307 = vcombine.high %v3255, %v3257
      %v3309 = vunpack.c.l.s4 1983009808
      %v3310 = vunpack.c.0.s8 %v3309
      %v3311 = vlaneseq
      %v3312 = vshrl.u32 %v3311, 7
      %v3313 = vsub.s32 %v3310, %v3312
      %v3314 = vrot.slane %v3306, %v3313
      %v3316 = vunpack.c.l.s4 1983009808
      %v3317 = vunpack.c.0.s8 %v3316
      %v3318 = vlaneseq
      %v3319 = vshrl.u32 %v3318, 7
      %v3320 = vsub.s32 %v3317, %v3319
      %v3321 = vrot.slane %v3307, %v3320
      %v3322 = vcombine.low %v3266, %v3282
      %v3323 = vcombine.high %v3266, %v3282
      %v3325 = vunpack.c.l.s4 1934713408
      %v3326 = vunpack.c.0.s8 %v3325
      %v3327 = vlaneseq
      %v3328 = vshrl.u32 %v3327, 7
      %v3329 = vsub.s32 %v3326, %v3328
      %v3330 = vrot.slane %v3322, %v3329
      %v3332 = vunpack.c.l.s4 1934713408
      %v3333 = vunpack.c.0.s8 %v3332
      %v3334 = vlaneseq
      %v3335 = vshrl.u32 %v3334, 7
      %v3336 = vsub.s32 %v3333, %v3335
      %v3337 = vrot.slane %v3323, %v3336
      %v3338 = vcombine.low %v3273, %v3289
      %v3339 = vcombine.high %v3273, %v3289
      %v3341 = vunpack.c.l.s4 1934713408
      %v3342 = vunpack.c.0.s8 %v3341
      %v3343 = vlaneseq
      %v3344 = vshrl.u32 %v3343, 7
      %v3345 = vsub.s32 %v3342, %v3344
      %v3346 = vrot.slane %v3338, %v3345
      %v3348 = vunpack.c.l.s4 1934713408
      %v3349 = vunpack.c.0.s8 %v3348
      %v3350 = vlaneseq
      %v3351 = vshrl.u32 %v3350, 7
      %v3352 = vsub.s32 %v3349, %v3351
      %v3353 = vrot.slane %v3339, %v3352
      %v3354 = vcombine.low %v3298, %v3314
      %v3355 = vcombine.high %v3298, %v3314
      %v3357 = vunpack.c.l.s4 1934713408
      %v3358 = vunpack.c.0.s8 %v3357
      %v3359 = vlaneseq
      %v3360 = vshrl.u32 %v3359, 7
      %v3361 = vsub.s32 %v3358, %v3360
      %v3362 = vrot.slane %v3354, %v3361
      %v3364 = vunpack.c.l.s4 1934713408
      %v3365 = vunpack.c.0.s8 %v3364
      %v3366 = vlaneseq
      %v3367 = vshrl.u32 %v3366, 7
      %v3368 = vsub.s32 %v3365, %v3367
      %v3369 = vrot.slane %v3355, %v3368
      %v3370 = vcombine.low %v3305, %v3321
      %v3371 = vcombine.high %v3305, %v3321
      %v3373 = vunpack.c.l.s4 1934713408
      %v3374 = vunpack.c.0.s8 %v3373
      %v3375 = vlaneseq
      %v3376 = vshrl.u32 %v3375, 7
      %v3377 = vsub.s32 %v3374, %v3376
      %v3378 = vrot.slane %v3370, %v3377
      %v3380 = vunpack.c.l.s4 1934713408
      %v3381 = vunpack.c.0.s8 %v3380
      %v3382 = vlaneseq
      %v3383 = vshrl.u32 %v3382, 7
      %v3384 = vsub.s32 %v3381, %v3383
      %v3385 = vrot.slane %v3371, %v3384
      %v3386 = vcombine.low %v3330, %v3362
      %v3387 = vcombine.high %v3330, %v3362
      %v3388 = vcombine.low %v3337, %v3369
      %v3389 = vcombine.high %v3337, %v3369
      %v3390 = vcombine.low %v3346, %v3378
      %v3391 = vcombine.high %v3346, %v3378
      %v3392 = vcombine.low %v3353, %v3385
      %v3393 = vcombine.high %v3353, %v3385
      %3395 = vrot.lane.b32.xlu0 %v3387, 8
      %v3396 = vpop.permute.xlu0 %3395
      %3399 = vrot.lane.b32.xlu0 %v3388, 16
      %v3400 = vpop.permute.xlu0 %3399
      %3403 = vrot.lane.b32.xlu0 %v3389, 24
      %v3404 = vpop.permute.xlu0 %3403
      %3407 = vrot.lane.b32.xlu0 %v3390, 32
      %v3408 = vpop.permute.xlu0 %3407
      %3411 = vrot.lane.b32.xlu0 %v3391, 40
      %v3412 = vpop.permute.xlu0 %3411
      %3415 = vrot.lane.b32.xlu0 %v3392, 48
      %v3416 = vpop.permute.xlu0 %3415
      %3419 = vrot.lane.b32.xlu0 %v3393, 56
      %v3420 = vpop.permute.xlu0 %3419
      %v3422 = vsel %vm1791, %v3386, %v3396
      %vm3423 = vcmask 130048
      %v3424 = vsel %vm3423, %v3422, %v3400
      %vm3425 = vcmask 195584
      %v3426 = vsel %vm3425, %v3424, %v3404
      %vm3427 = vcmask 261120
      %v3428 = vsel %vm3427, %v3426, %v3408
      %vm3429 = vcmask 326656
      %v3430 = vsel %vm3429, %v3428, %v3412
      %vm3431 = vcmask 392192
      %v3432 = vsel %vm3431, %v3430, %v3416
      %vm3433 = vcmask 457728
      %v3434 = vsel %vm3433, %v3432, %v3420
      %v3435 = vld [vmem:[%s6] sm:$0xff]
      %v3436 = vld [vmem:[%s6 + $0x8] sm:$0xff]
      %v3437 = vld [vmem:[%s6 + $0x10] sm:$0xff]
      %v3438 = vld [vmem:[%s6 + $0x18] sm:$0xff]
      %v3439 = vld [vmem:[%s6 + $0x20] sm:$0xff]
      %v3440 = vld [vmem:[%s6 + $0x28] sm:$0xff]
      %v3441 = vld [vmem:[%s6 + $0x30] sm:$0xff]
      %v3442 = vld [vmem:[%s6 + $0x38] sm:$0xff]
      %v3443 = vld [vmem:[%s7] sm:$0x1]
      %v3445 = vlaneseq
      %v3446 = vshrl.u32 %v3445, 7
      %v3447 = vsub.s32 0, %v3446
      %v3448 = vrot.slane %v3443, %v3447
      %v3451 = vsel %vm339, %v3434, 0
      %v3454 = vsel %vm339, %v3435, 0
      %v3457 = vsel %vm339, %v3436, 0
      %v3460 = vsel %vm339, %v3437, 0
      %v3463 = vsel %vm339, %v3438, 0
      %v3466 = vsel %vm339, %v3439, 0
      %v3469 = vsel %vm339, %v3440, 0
      %v3472 = vsel %vm339, %v3441, 0
      %v3475 = vsel %vm339, %v3442, 0
      %3477 = vmatprep.subr.mxu0 0.0
      %3478 = vmatpush1.xpose.msra.mxu0 %v3454
      %3479 = vmatprep.subr.mxu0 0.0
      %3480 = vmatpush1.xpose.msra.mxu0 %v3457
      %3481 = vmatprep.subr.mxu0 0.0
      %3482 = vmatpush1.xpose.msra.mxu0 %v3460
      %3483 = vmatprep.subr.mxu0 0.0
      %3484 = vmatpush1.xpose.msra.mxu0 %v3463
      %3485 = vmatprep.subr.mxu0 0.0
      %3486 = vmatpush1.xpose.msra.mxu0 %v3466
      %3487 = vmatprep.subr.mxu0 0.0
      %3488 = vmatpush1.xpose.msra.mxu0 %v3469
      %3489 = vmatprep.subr.mxu0 0.0
      %3490 = vmatpush1.xpose.msra.mxu0 %v3472
      %3491 = vmatprep.subr.mxu0 0.0
      %3492 = vmatpush1.xpose.msra.mxu0 %v3475
      %3493 = vmatprep.subr.mxu0 0.0
      %3494 = vmatpush1.xpose.msra.mxu0 0.0
      %3495 = vmatprep.subr.mxu0 0.0
      %3496 = vmatpush1.xpose.msra.mxu0 0.0
      %3497 = vmatprep.subr.mxu0 0.0
      %3498 = vmatpush1.xpose.msra.mxu0 0.0
      %3499 = vmatprep.subr.mxu0 0.0
      %3500 = vmatpush1.xpose.msra.mxu0 0.0
      %3501 = vmatprep.subr.mxu0 0.0
      %3502 = vmatpush1.xpose.msra.mxu0 0.0
      %3503 = vmatprep.subr.mxu0 0.0
      %3504 = vmatpush1.xpose.msra.mxu0 0.0
      %3505 = vmatprep.subr.mxu0 0.0
      %3506 = vmatpush1.xpose.msra.mxu0 0.0
      %3507 = vmatprep.subr.mxu0 0.0
      %3508 = vmatpush1.xpose.msra.mxu0 0.0
      %3509 = vmatprep.subr.mxu0 0.0
      %3510 = vmatpush1.xpose.msra.mxu0 0.0
      %3511 = vmatprep.subr.mxu0 0.0
      %3512 = vmatpush1.xpose.msra.mxu0 0.0
      %3513 = vmatprep.subr.mxu0 0.0
      %3514 = vmatpush1.xpose.msra.mxu0 0.0
      %3515 = vmatprep.subr.mxu0 0.0
      %3516 = vmatpush1.xpose.msra.mxu0 0.0
      %3517 = vmatprep.subr.mxu0 0.0
      %3518 = vmatpush1.xpose.msra.mxu0 0.0
      %3519 = vmatprep.subr.mxu0 0.0
      %3520 = vmatpush1.xpose.msra.mxu0 0.0
      %3521 = vmatprep.subr.mxu0 0.0
      %3522 = vmatpush1.xpose.msra.mxu0 0.0
      %3523 = vmatprep.subr.mxu0 0.0
      %3524 = vmatpush1.xpose.msra.mxu0 0.0
      %3525 = vmatprep.subr.mxu0 0.0
      %3526 = vmatpush1.xpose.msra.mxu0 0.0
      %3527 = vmatprep.subr.mxu0 0.0
      %3528 = vmatpush1.xpose.msra.mxu0 0.0
      %3529 = vmatprep.subr.mxu0 0.0
      %3530 = vmatpush1.xpose.msra.mxu0 0.0
      %3531 = vmatprep.subr.mxu0 0.0
      %3532 = vmatpush1.xpose.msra.mxu0 0.0
      %3533 = vmatprep.subr.mxu0 0.0
      %3534 = vmatpush1.xpose.msra.mxu0 0.0
      %3535 = vmatprep.subr.mxu0 0.0
      %3536 = vmatpush1.xpose.msra.mxu0 0.0
      %3537 = vmatprep.subr.mxu0 0.0
      %3538 = vmatpush1.xpose.msra.mxu0 0.0
      %3539 = vmatprep.subr.mxu0 0.0
      %3540 = vmatpush1.xpose.msra.mxu0 0.0
      %3541 = vmatprep.mubr.f32.mxu0 0.0
      %3542 = vmatmul.mubr.f32.gmra.mrb[0].mxu0 %v3451
      %v3543 = vpop.f32.mrb[0].mxu0
      %v3544 = vadd.f32 %v3448, %v3543
      %v3545 = vpop.f32.mrb[0].mxu0
      %3546 = vdwg.mxu0
      %3547 = vst.msk [vmem:[%s320] sm:$0xff] %vm339, %v3544
      %p3548 = scmp.lt.s32.totalorder %s19, 1
      %s3549 = scalar_select %p3548, %s19, 1
      %s3550 = smul.addr %s3549, 8
      %s3551 = scalar_lea.vmem %s8, %s3550
      // Predicated region
      $region53: #{pallas_multihead_cross_attention.1} parent=51 // pred_check
        %p3552 = pneg %p215
      $region54: #{pallas_multihead_cross_attention.1} parent=51 // pred_check_branch
        %3554 = sbr.rel (%p3552) target = $region56
      $region55: #{pallas_multihead_cross_attention.1} parent=51 // pred_region
        _
      $region56: #{pallas_multihead_cross_attention.1} parent=51 // pred_fallthru
        _
    $region52: #{pallas_multihead_cross_attention.1} parent=5 // pred_fallthru
      _
    %p3555 = scmp.le.s32.totalorder 2, %s14
    // Predicated region
    $region57: #{pallas_multihead_cross_attention.1} parent=5 // pred_check
      %p3556 = pneg %p3555
    $region58: #{pallas_multihead_cross_attention.1} parent=5 // pred_check_branch
      %3558 = sbr.rel (%p3556) target = $region60
    $region59: #{pallas_multihead_cross_attention.1} parent=5 // pred_region
      %s3559 = ssub.s32 %s14, 2
      // Predicated region
      $region61: #{pallas_multihead_cross_attention.1} parent=59 // pred_check
        %p3560 = pneg %p221
      $region62: #{pallas_multihead_cross_attention.1} parent=59 // pred_check_branch
        %3562 = sbr.rel (%p3560) target = $region64
      $region63: #{pallas_multihead_cross_attention.1} parent=59 // pred_region
        %p3563 = scmp.lt.s32.totalorder %s20, 1
        %s3564 = scalar_select %p3563, %s20, 1
        %s3565 = smul.addr %s3564, 8
        %s3566 = scalar_lea.vmem %s8, %s3565
      $region64: #{pallas_multihead_cross_attention.1} parent=59 // pred_fallthru
        _
    $region60: #{pallas_multihead_cross_attention.1} parent=5 // pred_fallthru
      _
  $region6: #{pallas_multihead_cross_attention.1} parent=0 // loop_footer
    %s18 = sadd.s32 1, %s14
  $region7: #{pallas_multihead_cross_attention.1} parent=0 // loop_footer_branch
    %13 = sbr.rel target = $region3
  $region8: #{pallas_multihead_cross_attention.1} parent=0 // loop_exit
    _

</llo_original>
